<compile_context>
chip_gen: v7x
topology: tpu7x:2x2x1
jax: 0.10.0
libtpu: 0.0.40
codegen_flags: <defaults>
</compile_context>

<pallas_src>
import functools

import jax
import jax.numpy as jnp
from jax.experimental import pallas as pl
from jax.experimental.pallas import tpu as pltpu


_VMEM = pl.BlockSpec(memory_space=pltpu.MemorySpace.VMEM)
_SUBLANE = 8      # batch padded to a sublane multiple
_LANE = 128       # predictor output padded to a lane multiple


def _round_up(x, m):
    return ((x + m - 1) // m) * m


# --------------------------------------------------------------------------
# Fused Pallas kernel: all GRU directions/domains + masked predictor epilogue
# --------------------------------------------------------------------------
def fused_rnn_kernel(x_ref, wi_f_ref, wi_b_ref, bx_f_ref, bx_b_ref,
                     wh_f_ref, wh_b_ref, bhn_f_ref, bhn_b_ref,
                     mask_ref, wp_f_ref, wp_b_ref, bp_ref,
                     o_ref, xp_f_ref, xp_b_ref,
                     *, seq_len, batch_pad, nd_hidden):
    """Fused bidirectional multi-GRU + masked linear predictor.

    x_ref    : (S*Bp, E)      time-major, batch-padded, flattened inputs
    wi_*_ref : (E, 3*NdH)     stacked input weights, gate-major [r|z|n]
    bx_*_ref : (1, 3*NdH)     folded biases [bi_r+bh_r | bi_z+bh_z | bi_n]
    wh_*_ref : (NdH, 3*NdH)   block-diagonal stacked hidden weights
    bhn_*    : (1, NdH)       bh_n (must stay inside r*(h@Wh_n + bh_n))
    mask_ref : (Bp, NdH)      per-GRU domain mask (1 for the general GRU)
    wp_*_ref : (NdH, Lp)      predictor rows permuted to the stacked h layout
    bp_ref   : (1, Lp)        predictor bias, label dim padded to 128 lanes
    o_ref    : (Bp, Lp)       padded predictor output
    xp_*_ref : (S*Bp, 3*NdH)  VMEM scratch holding the hoisted input projection
    """
    S, Bp, NdH = seq_len, batch_pad, nd_hidden

    x = x_ref[...]                                           # (S*Bp, E)
    # Hoisted input projection: one lane-dense matmul per direction group for
    # ALL timesteps, GRUs and gates; biases folded in, so the recurrence loop
    # contains no per-step broadcasts.
    xp_f_ref[...] = (jnp.dot(x, wi_f_ref[...], preferred_element_type=jnp.float32)
                     + bx_f_ref[...])
    xp_b_ref[...] = (jnp.dot(x, wi_b_ref[...], preferred_element_type=jnp.float32)
                     + bx_b_ref[...])

    wh_f = wh_f_ref[...]
    wh_b = wh_b_ref[...]
    bhn_f = jnp.broadcast_to(bhn_f_ref[...], (Bp, NdH))      # hoisted broadcasts
    bhn_b = jnp.broadcast_to(bhn_b_ref[...], (Bp, NdH))

    h_f = jnp.zeros((Bp, NdH), jnp.float32)
    h_b = jnp.zeros((Bp, NdH), jnp.float32)

    def gru_cell(gx, gh, bhn, h):
        # gate-major layout: [r | z | n], each block NdH lanes wide.
        rz = jax.nn.sigmoid(gx[:, :2 * NdH] + gh[:, :2 * NdH])
        r = rz[:, :NdH]
        z = rz[:, NdH:]
        n = jnp.tanh(gx[:, 2 * NdH:] + r * (gh[:, 2 * NdH:] + bhn))
        return (1.0 - z) * n + z * h

    # Fully unrolled recurrence (S is small); only h @ Wh is serial, and it is
    # a single stacked matmul per direction group per step.
    # TODO(synk): for long sequences switch to lax.fori_loop(..., unroll=k) and
    #             stream x / xp in timestep chunks (emit_pipeline) for v7x VMEM.
    for t in range(S):
        gx_f = xp_f_ref[pl.ds(t * Bp, Bp), :]
        gx_b = xp_b_ref[pl.ds((S - 1 - t) * Bp, Bp), :]      # reverse dir in-kernel
        gh_f = jnp.dot(h_f, wh_f, preferred_element_type=jnp.float32)
        gh_b = jnp.dot(h_b, wh_b, preferred_element_type=jnp.float32)
        h_f = gru_cell(gx_f, gh_f, bhn_f, h_f)
        h_b = gru_cell(gx_b, gh_b, bhn_b, h_b)

    # Fused masked-linear predictor epilogue (lane-dense padded output store).
    m = mask_ref[...]
    o_ref[...] = (jnp.dot(h_f * m, wp_f_ref[...], preferred_element_type=jnp.float32)
                  + jnp.dot(h_b * m, wp_b_ref[...], preferred_element_type=jnp.float32)
                  + bp_ref[...])


# --------------------------------------------------------------------------
# Wrapper around pallas_call
# --------------------------------------------------------------------------
def fused_rnn_forward(fused, doc_embs, domain_mask):
    """doc_embs: (B, S, E) f32;  domain_mask: (B, Nd*H) f32  ->  (B, Lp)."""
    B, S, E = doc_embs.shape
    NdH = fused['wh_f'].shape[0]
    G = 3 * NdH
    Lp = fused['wp_f'].shape[1]
    Bp = _round_up(max(B, 1), _SUBLANE)

    x = jnp.transpose(doc_embs, (1, 0, 2))                   # (S, B, E), done once
    x = jnp.pad(x, ((0, 0), (0, Bp - B), (0, 0)))            # pad batch to sublanes
    x2d = x.reshape(S * Bp, E)
    mask = jnp.pad(domain_mask, ((0, Bp - B), (0, 0)))       # (Bp, NdH)

    kern = functools.partial(fused_rnn_kernel, seq_len=S, batch_pad=Bp,
                             nd_hidden=NdH)
    out = pl.pallas_call(
        kern,
        out_shape=jax.ShapeDtypeStruct((Bp, Lp), jnp.float32),
        in_specs=[_VMEM] * 13,
        out_specs=_VMEM,
        scratch_shapes=[pltpu.VMEM((S * Bp, G), jnp.float32),
                        pltpu.VMEM((S * Bp, G), jnp.float32)],
    )(x2d,
      fused['wi_f'], fused['wi_b'], fused['bx_f'], fused['bx_b'],
      fused['wh_f'], fused['wh_b'], fused['bhn_f'], fused['bhn_b'],
      mask, fused['wp_f'], fused['wp_b'], fused['bp'])
    return out[:B]


# --------------------------------------------------------------------------
# Parameter construction (deterministic, PyTorch-like uniform init)
# --------------------------------------------------------------------------
def make_gru_dir_params(key, emb_dim, hidden):
    k1, k2, k3, k4 = jax.random.split(key, 4)
    bound = 1.0 / jnp.sqrt(hidden)
    wi = jax.random.uniform(k1, (3, emb_dim, hidden), jnp.float32, -bound, bound)
    wh = jax.random.uniform(k2, (3, hidden, hidden), jnp.float32, -bound, bound)
    bi = jax.random.uniform(k3, (3, 1, hidden), jnp.float32, -bound, bound)
    bh = jax.random.uniform(k4, (3, 1, hidden), jnp.float32, -bound, bound)
    return (wi, wh, bi, bh)


def pack_fused_params(params):
    """Pack per-GRU params into the fused kernel layout (trace-time, weights only)."""
    domains = params['domains']
    grus = [params['gru_general']] + [params['gru_domain'][d] for d in domains]
    Nd = len(grus)
    H = grus[0]['fwd'][1].shape[-1]
    NdH = Nd * H

    def pack_dir(key):
        wi_l = [g[key][0] for g in grus]      # (3, E, H)
        wh_l = [g[key][1] for g in grus]      # (3, H, H)
        bi_l = [g[key][2] for g in grus]      # (3, 1, H)
        bh_l = [g[key][3] for g in grus]      # (3, 1, H)
        # (E, 3*NdH), gate-major / GRU-minor
        wi = jnp.concatenate(
            [jnp.concatenate([wi_l[k][g] for k in range(Nd)], axis=1)
             for g in range(3)], axis=1)
        # block-diagonal stacked hidden weights (NdH, 3*NdH)
        wh = jnp.zeros((NdH, 3 * NdH), jnp.float32)
        for g in range(3):
            for k in range(Nd):
                wh = wh.at[k * H:(k + 1) * H,
                           g * NdH + k * H: g * NdH + (k + 1) * H].set(wh_l[k][g])
        # folded biases: [bi_r+bh_r | bi_z+bh_z | bi_n]
        blocks = []
        for g in range(3):
            if g < 2:
                blocks.append(jnp.concatenate(
                    [bi_l[k][g] + bh_l[k][g] for k in range(Nd)], axis=1))
            else:
                blocks.append(jnp.concatenate(
                    [bi_l[k][2] for k in range(Nd)], axis=1))
        bx = jnp.concatenate(blocks, axis=1)                          # (1, 3*NdH)
        bhn = jnp.concatenate([bh_l[k][2] for k in range(Nd)], axis=1)  # (1, NdH)
        return wi, wh, bx, bhn

    wi_f, wh_f, bx_f, bhn_f = pack_dir('fwd')
    wi_b, wh_b, bx_b, bhn_b = pack_dir('bwd')

    # Predictor: permute rows of w_pred to the stacked [fwd|bwd] hidden layout
    # and pad the label dim to a full 128-lane tile (lane-dense output store).
    w_pred, b_pred = params['w_pred'], params['b_pred']
    L = w_pred.shape[1]
    Lp = _round_up(L, _LANE)
    wp_f = jnp.concatenate([w_pred[k * 2 * H: k * 2 * H + H] for k in range(Nd)], axis=0)
    wp_b = jnp.concatenate([w_pred[k * 2 * H + H: (k + 1) * 2 * H] for k in range(Nd)], axis=0)
    wp_f = jnp.pad(wp_f, ((0, 0), (0, Lp - L)))
    wp_b = jnp.pad(wp_b, ((0, 0), (0, Lp - L)))
    bp = jnp.pad(b_pred, ((0, 0), (0, Lp - L)))

    return dict(wi_f=wi_f, wi_b=wi_b, bx_f=bx_f, bx_b=bx_b,
                wh_f=wh_f, wh_b=wh_b, bhn_f=bhn_f, bhn_b=bhn_b,
                wp_f=wp_f, wp_b=wp_b, bp=bp, hidden=H, nd=Nd)


def make_params(key, *, max_feature, emb_dim, hidden, domains, num_label):
    keys = jax.random.split(key, 4 + 2 * len(domains))
    emb = jax.random.uniform(keys[0], (max_feature, emb_dim), jnp.float32, -0.5, 0.5)
    gru_general = {
        'fwd': make_gru_dir_params(keys[1], emb_dim, hidden),
        'bwd': make_gru_dir_params(keys[2], emb_dim, hidden),
    }
    gru_domain = {}
    for i, d in enumerate(domains):
        gru_domain[d] = {
            'fwd': make_gru_dir_params(keys[3 + 2 * i], emb_dim, hidden),
            'bwd': make_gru_dir_params(keys[4 + 2 * i], emb_dim, hidden),
        }
    feat_dim = emb_dim * (1 + len(domains))
    kb = 1.0 / jnp.sqrt(feat_dim)
    w_pred = jax.random.uniform(keys[-1], (feat_dim, num_label), jnp.float32, -kb, kb)
    b_pred = jax.random.uniform(jax.random.fold_in(keys[-1], 7),
                                (1, num_label), jnp.float32, -kb, kb)
    params = dict(emb=emb, gru_general=gru_general, gru_domain=gru_domain,
                  w_pred=w_pred, b_pred=b_pred, domains=tuple(domains))
    params['fused'] = pack_fused_params(params)
    return params


# --------------------------------------------------------------------------
# RegularRNN forward (train mode)
# --------------------------------------------------------------------------
def regular_rnn_forward(params, input_docs, input_domains):
    doc_embs = params['emb'][input_docs]          # (B, S, E) embedding lookup (glue)
    fused = params['fused']
    H = fused['hidden']
    B = doc_embs.shape[0]

    # Per-GRU mask over the stacked hidden layout: general GRU -> 1, domain GRUs
    # -> (input_domain == d). Same mask applies to fwd and bwd halves.
    m_blocks = [jnp.ones((B,), jnp.float32)]
    for d in params['domains']:
        m_blocks.append((input_domains == d).astype(jnp.float32))
    domain_mask = jnp.concatenate(
        [jnp.broadcast_to(m[:, None], (B, H)) for m in m_blocks], axis=1)

    out = fused_rnn_forward(fused, doc_embs, domain_mask)
    num_label = params['w_pred'].shape[1]
    return out[:, :num_label]
    # TODO(synk): eval-mode branch (zero-padding + lambda scaling) not implemented;
    #             only the `mode == 'train'` path is reproduced.


# --------------------------------------------------------------------------
# Pure-JAX reference (for correctness check of the fused packing/kernel)
# --------------------------------------------------------------------------
def _gru_ref(x_bse, wi, wh, bi, bh, reverse):
    x = x_bse[:, ::-1, :] if reverse else x_bse
    B, S, _ = x.shape
    H = wh.shape[-1]
    h = jnp.zeros((B, H), jnp.float32)
    for t in range(S):
        xt = x[:, t, :]
        r = jax.nn.sigmoid(xt @ wi[0] + bi[0] + h @ wh[0] + bh[0])
        z = jax.nn.sigmoid(xt @ wi[1] + bi[1] + h @ wh[1] + bh[1])
        n = jnp.tanh(xt @ wi[2] + bi[2] + r * (h @ wh[2] + bh[2]))
        h = (1.0 - z) * n + z * h
    return h


def _forward_ref(params, input_docs, input_domains):
    doc_embs = params['emb'][input_docs]

    def bi(gp):
        return jnp.concatenate([_gru_ref(doc_embs, *gp['fwd'], False),
                                _gru_ref(doc_embs, *gp['bwd'], True)], axis=-1)

    doc_general = bi(params['gru_general'])
    for d in params['domains']:
        h_d = bi(params['gru_domain'][d])
        dmask = (input_domains == d).astype(jnp.float32)[:, None]
        doc_general = jnp.concatenate([doc_general, h_d * dmask], axis=-1)
    return doc_general @ params['w_pred'] + params['b_pred']


# --------------------------------------------------------------------------
if __name__ == "__main__":
    # Small shapes consistent with the module's forward.
    B, S = 2, 8
    MAX_FEATURE, EMB_DIM = 50, 32
    BIDIRECTIONAL = True
    HIDDEN = EMB_DIM // 2 if BIDIRECTIONAL else EMB_DIM
    DOMAINS = (0, 1)
    NUM_LABEL = 3

    key = jax.random.PRNGKey(0)
    k_params, k_docs, k_dom = jax.random.split(key, 3)

    params = make_params(k_params, max_feature=MAX_FEATURE, emb_dim=EMB_DIM,
                         hidden=HIDDEN, domains=DOMAINS, num_label=NUM_LABEL)

    input_docs = jax.random.randint(k_docs, (B, S), 0, MAX_FEATURE, dtype=jnp.int32)
    input_domains = jnp.array([0, 1], dtype=jnp.int32)

    out = regular_rnn_forward(params, input_docs, input_domains)
    out = jax.block_until_ready(out)

    ref = _forward_ref(params, input_docs, input_domains)
    assert out.shape == (B, NUM_LABEL)
    assert jnp.allclose(out, ref, rtol=1e-4, atol=1e-4), (out, ref)

    print("KERNEL_OK")
</pallas_src>

<mosaic_0001>
module attributes {stable_mosaic.version = 11 : i64} {
  func.func @fused_rnn_kernel(%arg0: memref<64x32xf32, #tpu.memory_space<vmem>>, %arg1: memref<32x144xf32, #tpu.memory_space<vmem>>, %arg2: memref<32x144xf32, #tpu.memory_space<vmem>>, %arg3: memref<1x144xf32, #tpu.memory_space<vmem>>, %arg4: memref<1x144xf32, #tpu.memory_space<vmem>>, %arg5: memref<48x144xf32, #tpu.memory_space<vmem>>, %arg6: memref<48x144xf32, #tpu.memory_space<vmem>>, %arg7: memref<1x48xf32, #tpu.memory_space<vmem>>, %arg8: memref<1x48xf32, #tpu.memory_space<vmem>>, %arg9: memref<8x48xf32, #tpu.memory_space<vmem>>, %arg10: memref<48x128xf32, #tpu.memory_space<vmem>>, %arg11: memref<48x128xf32, #tpu.memory_space<vmem>>, %arg12: memref<1x128xf32, #tpu.memory_space<vmem>>, %arg13: memref<8x128xf32, #tpu.memory_space<vmem>>, %arg14: memref<64x144xf32, #tpu.memory_space<vmem>>, %arg15: memref<64x144xf32, #tpu.memory_space<vmem>>) attributes {dimension_semantics = [], scalar_prefetch = 0 : i64, scratch_operands = 2 : i64, tpu.core_type = #tpu.core_type<tc>} {
    %c0 = arith.constant 0 : index
    %c0_0 = arith.constant 0 : index
    %0 = vector.load %arg0[%c0, %c0_0] : memref<64x32xf32, #tpu.memory_space<vmem>>, vector<64x32xf32>
    %c0_1 = arith.constant 0 : index
    %c0_2 = arith.constant 0 : index
    %1 = vector.load %arg1[%c0_1, %c0_2] : memref<32x144xf32, #tpu.memory_space<vmem>>, vector<32x144xf32>
    %cst = arith.constant dense<0.000000e+00> : vector<64x144xf32>
    %2 = tpu.matmul %0, %1, %cst {dimension_numbers = #tpu.dot_dimension_numbers<[1], [0], [0], [1], [0, 0, 1, 1], [], []>} : vector<64x32xf32>, vector<32x144xf32>, vector<64x144xf32> -> vector<64x144xf32>
    %c0_3 = arith.constant 0 : index
    %c0_4 = arith.constant 0 : index
    %3 = vector.load %arg3[%c0_3, %c0_4] : memref<1x144xf32, #tpu.memory_space<vmem>>, vector<1x144xf32>
    %4 = vector.broadcast %3 : vector<1x144xf32> to vector<64x144xf32>
    %5 = arith.addf %2, %4 : vector<64x144xf32>
    %c0_5 = arith.constant 0 : index
    %c0_6 = arith.constant 0 : index
    %6 = vector.load %arg14[%c0_5, %c0_6] : memref<64x144xf32, #tpu.memory_space<vmem>>, vector<64x144xf32>
    tpu.vector_store %arg14[%c0_5, %c0_6], %5 {strides = array<i32>} : memref<64x144xf32, #tpu.memory_space<vmem>>, vector<64x144xf32>,
    %c0_7 = arith.constant 0 : index
    %c0_8 = arith.constant 0 : index
    %7 = vector.load %arg2[%c0_7, %c0_8] : memref<32x144xf32, #tpu.memory_space<vmem>>, vector<32x144xf32>
    %cst_9 = arith.constant dense<0.000000e+00> : vector<64x144xf32>
    %8 = tpu.matmul %0, %7, %cst_9 {dimension_numbers = #tpu.dot_dimension_numbers<[1], [0], [0], [1], [0, 0, 1, 1], [], []>} : vector<64x32xf32>, vector<32x144xf32>, vector<64x144xf32> -> vector<64x144xf32>
    %c0_10 = arith.constant 0 : index
    %c0_11 = arith.constant 0 : index
    %9 = vector.load %arg4[%c0_10, %c0_11] : memref<1x144xf32, #tpu.memory_space<vmem>>, vector<1x144xf32>
    %10 = vector.broadcast %9 : vector<1x144xf32> to vector<64x144xf32>
    %11 = arith.addf %8, %10 : vector<64x144xf32>
    %c0_12 = arith.constant 0 : index
    %c0_13 = arith.constant 0 : index
    %12 = vector.load %arg15[%c0_12, %c0_13] : memref<64x144xf32, #tpu.memory_space<vmem>>, vector<64x144xf32>
    tpu.vector_store %arg15[%c0_12, %c0_13], %11 {strides = array<i32>} : memref<64x144xf32, #tpu.memory_space<vmem>>, vector<64x144xf32>,
    %c0_14 = arith.constant 0 : index
    %c0_15 = arith.constant 0 : index
    %13 = vector.load %arg5[%c0_14, %c0_15] : memref<48x144xf32, #tpu.memory_space<vmem>>, vector<48x144xf32>
    %c0_16 = arith.constant 0 : index
    %c0_17 = arith.constant 0 : index
    %14 = vector.load %arg6[%c0_16, %c0_17] : memref<48x144xf32, #tpu.memory_space<vmem>>, vector<48x144xf32>
    %c0_18 = arith.constant 0 : index
    %c0_19 = arith.constant 0 : index
    %15 = vector.load %arg7[%c0_18, %c0_19] : memref<1x48xf32, #tpu.memory_space<vmem>>, vector<1x48xf32>
    %16 = vector.shape_cast %15 : vector<1x48xf32> to vector<1x48xf32>
    %17 = vector.broadcast %16 : vector<1x48xf32> to vector<8x48xf32>
    %c0_20 = arith.constant 0 : index
    %c0_21 = arith.constant 0 : index
    %18 = vector.load %arg8[%c0_20, %c0_21] : memref<1x48xf32, #tpu.memory_space<vmem>>, vector<1x48xf32>
    %19 = vector.shape_cast %18 : vector<1x48xf32> to vector<1x48xf32>
    %20 = vector.broadcast %19 : vector<1x48xf32> to vector<8x48xf32>
    %cst_22 = arith.constant 0.000000e+00 : f32
    %21 = vector.broadcast %cst_22 : f32 to vector<8x48xf32>
    %cst_23 = arith.constant 0.000000e+00 : f32
    %22 = vector.broadcast %cst_23 : f32 to vector<8x48xf32>
    %c0_24 = arith.constant 0 : index
    %c0_25 = arith.constant 0 : index
    %23 = vector.load %arg14[%c0_24, %c0_25] : memref<64x144xf32, #tpu.memory_space<vmem>>, vector<8x144xf32>
    %c56 = arith.constant 56 : index
    %c0_26 = arith.constant 0 : index
    %24 = vector.load %arg15[%c56, %c0_26] : memref<64x144xf32, #tpu.memory_space<vmem>>, vector<8x144xf32>
    %cst_27 = arith.constant dense<0.000000e+00> : vector<8x144xf32>
    %25 = tpu.matmul %21, %13, %cst_27 {dimension_numbers = #tpu.dot_dimension_numbers<[1], [0], [0], [1], [0, 0, 1, 1], [], []>} : vector<8x48xf32>, vector<48x144xf32>, vector<8x144xf32> -> vector<8x144xf32>
    %cst_28 = arith.constant dense<0.000000e+00> : vector<8x144xf32>
    %26 = tpu.matmul %22, %14, %cst_28 {dimension_numbers = #tpu.dot_dimension_numbers<[1], [0], [0], [1], [0, 0, 1, 1], [], []>} : vector<8x48xf32>, vector<48x144xf32>, vector<8x144xf32> -> vector<8x144xf32>
    %27 = vector.extract_strided_slice %23 {offsets = [0, 0], sizes = [8, 96], strides = [1, 1]} : vector<8x144xf32> to vector<8x96xf32>
    %28 = vector.extract_strided_slice %25 {offsets = [0, 0], sizes = [8, 96], strides = [1, 1]} : vector<8x144xf32> to vector<8x96xf32>
    %29 = arith.addf %27, %28 : vector<8x96xf32>
    %30 = arith.negf %29 : vector<8x96xf32>
    %31 = math.exp %30 : vector<8x96xf32>
    %cst_29 = arith.constant 1.000000e+00 : f32
    %32 = vector.broadcast %cst_29 : f32 to vector<8x96xf32>
    %33 = arith.addf %32, %31 : vector<8x96xf32>
    %34 = arith.divf %32, %33 : vector<8x96xf32>
    %35 = vector.extract_strided_slice %34 {offsets = [0, 0], sizes = [8, 48], strides = [1, 1]} : vector<8x96xf32> to vector<8x48xf32>
    %36 = vector.extract_strided_slice %34 {offsets = [0, 48], sizes = [8, 48], strides = [1, 1]} : vector<8x96xf32> to vector<8x48xf32>
    %37 = vector.extract_strided_slice %23 {offsets = [0, 96], sizes = [8, 48], strides = [1, 1]} : vector<8x144xf32> to vector<8x48xf32>
    %38 = vector.extract_strided_slice %25 {offsets = [0, 96], sizes = [8, 48], strides = [1, 1]} : vector<8x144xf32> to vector<8x48xf32>
    %39 = arith.addf %38, %17 : vector<8x48xf32>
    %40 = arith.mulf %35, %39 : vector<8x48xf32>
    %41 = arith.addf %37, %40 : vector<8x48xf32>
    %42 = math.tanh %41 : vector<8x48xf32>
    %cst_30 = arith.constant 1.000000e+00 : f32
    %43 = vector.broadcast %cst_30 : f32 to vector<8x48xf32>
    %44 = arith.subf %43, %36 : vector<8x48xf32>
    %45 = arith.mulf %44, %42 : vector<8x48xf32>
    %46 = arith.mulf %36, %21 : vector<8x48xf32>
    %47 = arith.addf %45, %46 : vector<8x48xf32>
    %48 = vector.extract_strided_slice %24 {offsets = [0, 0], sizes = [8, 96], strides = [1, 1]} : vector<8x144xf32> to vector<8x96xf32>
    %49 = vector.extract_strided_slice %26 {offsets = [0, 0], sizes = [8, 96], strides = [1, 1]} : vector<8x144xf32> to vector<8x96xf32>
    %50 = arith.addf %48, %49 : vector<8x96xf32>
    %51 = arith.negf %50 : vector<8x96xf32>
    %52 = math.exp %51 : vector<8x96xf32>
    %cst_31 = arith.constant 1.000000e+00 : f32
    %53 = vector.broadcast %cst_31 : f32 to vector<8x96xf32>
    %54 = arith.addf %53, %52 : vector<8x96xf32>
    %55 = arith.divf %53, %54 : vector<8x96xf32>
    %56 = vector.extract_strided_slice %55 {offsets = [0, 0], sizes = [8, 48], strides = [1, 1]} : vector<8x96xf32> to vector<8x48xf32>
    %57 = vector.extract_strided_slice %55 {offsets = [0, 48], sizes = [8, 48], strides = [1, 1]} : vector<8x96xf32> to vector<8x48xf32>
    %58 = vector.extract_strided_slice %24 {offsets = [0, 96], sizes = [8, 48], strides = [1, 1]} : vector<8x144xf32> to vector<8x48xf32>
    %59 = vector.extract_strided_slice %26 {offsets = [0, 96], sizes = [8, 48], strides = [1, 1]} : vector<8x144xf32> to vector<8x48xf32>
    %60 = arith.addf %59, %20 : vector<8x48xf32>
    %61 = arith.mulf %56, %60 : vector<8x48xf32>
    %62 = arith.addf %58, %61 : vector<8x48xf32>
    %63 = math.tanh %62 : vector<8x48xf32>
    %cst_32 = arith.constant 1.000000e+00 : f32
    %64 = vector.broadcast %cst_32 : f32 to vector<8x48xf32>
    %65 = arith.subf %64, %57 : vector<8x48xf32>
    %66 = arith.mulf %65, %63 : vector<8x48xf32>
    %67 = arith.mulf %57, %22 : vector<8x48xf32>
    %68 = arith.addf %66, %67 : vector<8x48xf32>
    %c8 = arith.constant 8 : index
    %c0_33 = arith.constant 0 : index
    %69 = vector.load %arg14[%c8, %c0_33] : memref<64x144xf32, #tpu.memory_space<vmem>>, vector<8x144xf32>
    %c48 = arith.constant 48 : index
    %c0_34 = arith.constant 0 : index
    %70 = vector.load %arg15[%c48, %c0_34] : memref<64x144xf32, #tpu.memory_space<vmem>>, vector<8x144xf32>
    %cst_35 = arith.constant dense<0.000000e+00> : vector<8x144xf32>
    %71 = tpu.matmul %47, %13, %cst_35 {dimension_numbers = #tpu.dot_dimension_numbers<[1], [0], [0], [1], [0, 0, 1, 1], [], []>} : vector<8x48xf32>, vector<48x144xf32>, vector<8x144xf32> -> vector<8x144xf32>
    %cst_36 = arith.constant dense<0.000000e+00> : vector<8x144xf32>
    %72 = tpu.matmul %68, %14, %cst_36 {dimension_numbers = #tpu.dot_dimension_numbers<[1], [0], [0], [1], [0, 0, 1, 1], [], []>} : vector<8x48xf32>, vector<48x144xf32>, vector<8x144xf32> -> vector<8x144xf32>
    %73 = vector.extract_strided_slice %69 {offsets = [0, 0], sizes = [8, 96], strides = [1, 1]} : vector<8x144xf32> to vector<8x96xf32>
    %74 = vector.extract_strided_slice %71 {offsets = [0, 0], sizes = [8, 96], strides = [1, 1]} : vector<8x144xf32> to vector<8x96xf32>
    %75 = arith.addf %73, %74 : vector<8x96xf32>
    %76 = arith.negf %75 : vector<8x96xf32>
    %77 = math.exp %76 : vector<8x96xf32>
    %cst_37 = arith.constant 1.000000e+00 : f32
    %78 = vector.broadcast %cst_37 : f32 to vector<8x96xf32>
    %79 = arith.addf %78, %77 : vector<8x96xf32>
    %80 = arith.divf %78, %79 : vector<8x96xf32>
    %81 = vector.extract_strided_slice %80 {offsets = [0, 0], sizes = [8, 48], strides = [1, 1]} : vector<8x96xf32> to vector<8x48xf32>
    %82 = vector.extract_strided_slice %80 {offsets = [0, 48], sizes = [8, 48], strides = [1, 1]} : vector<8x96xf32> to vector<8x48xf32>
    %83 = vector.extract_strided_slice %69 {offsets = [0, 96], sizes = [8, 48], strides = [1, 1]} : vector<8x144xf32> to vector<8x48xf32>
    %84 = vector.extract_strided_slice %71 {offsets = [0, 96], sizes = [8, 48], strides = [1, 1]} : vector<8x144xf32> to vector<8x48xf32>
    %85 = arith.addf %84, %17 : vector<8x48xf32>
    %86 = arith.mulf %81, %85 : vector<8x48xf32>
    %87 = arith.addf %83, %86 : vector<8x48xf32>
    %88 = math.tanh %87 : vector<8x48xf32>
    %cst_38 = arith.constant 1.000000e+00 : f32
    %89 = vector.broadcast %cst_38 : f32 to vector<8x48xf32>
    %90 = arith.subf %89, %82 : vector<8x48xf32>
    %91 = arith.mulf %90, %88 : vector<8x48xf32>
    %92 = arith.mulf %82, %47 : vector<8x48xf32>
    %93 = arith.addf %91, %92 : vector<8x48xf32>
    %94 = vector.extract_strided_slice %70 {offsets = [0, 0], sizes = [8, 96], strides = [1, 1]} : vector<8x144xf32> to vector<8x96xf32>
    %95 = vector.extract_strided_slice %72 {offsets = [0, 0], sizes = [8, 96], strides = [1, 1]} : vector<8x144xf32> to vector<8x96xf32>
    %96 = arith.addf %94, %95 : vector<8x96xf32>
    %97 = arith.negf %96 : vector<8x96xf32>
    %98 = math.exp %97 : vector<8x96xf32>
    %cst_39 = arith.constant 1.000000e+00 : f32
    %99 = vector.broadcast %cst_39 : f32 to vector<8x96xf32>
    %100 = arith.addf %99, %98 : vector<8x96xf32>
    %101 = arith.divf %99, %100 : vector<8x96xf32>
    %102 = vector.extract_strided_slice %101 {offsets = [0, 0], sizes = [8, 48], strides = [1, 1]} : vector<8x96xf32> to vector<8x48xf32>
    %103 = vector.extract_strided_slice %101 {offsets = [0, 48], sizes = [8, 48], strides = [1, 1]} : vector<8x96xf32> to vector<8x48xf32>
    %104 = vector.extract_strided_slice %70 {offsets = [0, 96], sizes = [8, 48], strides = [1, 1]} : vector<8x144xf32> to vector<8x48xf32>
    %105 = vector.extract_strided_slice %72 {offsets = [0, 96], sizes = [8, 48], strides = [1, 1]} : vector<8x144xf32> to vector<8x48xf32>
    %106 = arith.addf %105, %20 : vector<8x48xf32>
    %107 = arith.mulf %102, %106 : vector<8x48xf32>
    %108 = arith.addf %104, %107 : vector<8x48xf32>
    %109 = math.tanh %108 : vector<8x48xf32>
    %cst_40 = arith.constant 1.000000e+00 : f32
    %110 = vector.broadcast %cst_40 : f32 to vector<8x48xf32>
    %111 = arith.subf %110, %103 : vector<8x48xf32>
    %112 = arith.mulf %111, %109 : vector<8x48xf32>
    %113 = arith.mulf %103, %68 : vector<8x48xf32>
    %114 = arith.addf %112, %113 : vector<8x48xf32>
    %c16 = arith.constant 16 : index
    %c0_41 = arith.constant 0 : index
    %115 = vector.load %arg14[%c16, %c0_41] : memref<64x144xf32, #tpu.memory_space<vmem>>, vector<8x144xf32>
    %c40 = arith.constant 40 : index
    %c0_42 = arith.constant 0 : index
    %116 = vector.load %arg15[%c40, %c0_42] : memref<64x144xf32, #tpu.memory_space<vmem>>, vector<8x144xf32>
    %cst_43 = arith.constant dense<0.000000e+00> : vector<8x144xf32>
    %117 = tpu.matmul %93, %13, %cst_43 {dimension_numbers = #tpu.dot_dimension_numbers<[1], [0], [0], [1], [0, 0, 1, 1], [], []>} : vector<8x48xf32>, vector<48x144xf32>, vector<8x144xf32> -> vector<8x144xf32>
    %cst_44 = arith.constant dense<0.000000e+00> : vector<8x144xf32>
    %118 = tpu.matmul %114, %14, %cst_44 {dimension_numbers = #tpu.dot_dimension_numbers<[1], [0], [0], [1], [0, 0, 1, 1], [], []>} : vector<8x48xf32>, vector<48x144xf32>, vector<8x144xf32> -> vector<8x144xf32>
    %119 = vector.extract_strided_slice %115 {offsets = [0, 0], sizes = [8, 96], strides = [1, 1]} : vector<8x144xf32> to vector<8x96xf32>
    %120 = vector.extract_strided_slice %117 {offsets = [0, 0], sizes = [8, 96], strides = [1, 1]} : vector<8x144xf32> to vector<8x96xf32>
    %121 = arith.addf %119, %120 : vector<8x96xf32>
    %122 = arith.negf %121 : vector<8x96xf32>
    %123 = math.exp %122 : vector<8x96xf32>
    %cst_45 = arith.constant 1.000000e+00 : f32
    %124 = vector.broadcast %cst_45 : f32 to vector<8x96xf32>
    %125 = arith.addf %124, %123 : vector<8x96xf32>
    %126 = arith.divf %124, %125 : vector<8x96xf32>
    %127 = vector.extract_strided_slice %126 {offsets = [0, 0], sizes = [8, 48], strides = [1, 1]} : vector<8x96xf32> to vector<8x48xf32>
    %128 = vector.extract_strided_slice %126 {offsets = [0, 48], sizes = [8, 48], strides = [1, 1]} : vector<8x96xf32> to vector<8x48xf32>
    %129 = vector.extract_strided_slice %115 {offsets = [0, 96], sizes = [8, 48], strides = [1, 1]} : vector<8x144xf32> to vector<8x48xf32>
    %130 = vector.extract_strided_slice %117 {offsets = [0, 96], sizes = [8, 48], strides = [1, 1]} : vector<8x144xf32> to vector<8x48xf32>
    %131 = arith.addf %130, %17 : vector<8x48xf32>
    %132 = arith.mulf %127, %131 : vector<8x48xf32>
    %133 = arith.addf %129, %132 : vector<8x48xf32>
    %134 = math.tanh %133 : vector<8x48xf32>
    %cst_46 = arith.constant 1.000000e+00 : f32
    %135 = vector.broadcast %cst_46 : f32 to vector<8x48xf32>
    %136 = arith.subf %135, %128 : vector<8x48xf32>
    %137 = arith.mulf %136, %134 : vector<8x48xf32>
    %138 = arith.mulf %128, %93 : vector<8x48xf32>
    %139 = arith.addf %137, %138 : vector<8x48xf32>
    %140 = vector.extract_strided_slice %116 {offsets = [0, 0], sizes = [8, 96], strides = [1, 1]} : vector<8x144xf32> to vector<8x96xf32>
    %141 = vector.extract_strided_slice %118 {offsets = [0, 0], sizes = [8, 96], strides = [1, 1]} : vector<8x144xf32> to vector<8x96xf32>
    %142 = arith.addf %140, %141 : vector<8x96xf32>
    %143 = arith.negf %142 : vector<8x96xf32>
    %144 = math.exp %143 : vector<8x96xf32>
    %cst_47 = arith.constant 1.000000e+00 : f32
    %145 = vector.broadcast %cst_47 : f32 to vector<8x96xf32>
    %146 = arith.addf %145, %144 : vector<8x96xf32>
    %147 = arith.divf %145, %146 : vector<8x96xf32>
    %148 = vector.extract_strided_slice %147 {offsets = [0, 0], sizes = [8, 48], strides = [1, 1]} : vector<8x96xf32> to vector<8x48xf32>
    %149 = vector.extract_strided_slice %147 {offsets = [0, 48], sizes = [8, 48], strides = [1, 1]} : vector<8x96xf32> to vector<8x48xf32>
    %150 = vector.extract_strided_slice %116 {offsets = [0, 96], sizes = [8, 48], strides = [1, 1]} : vector<8x144xf32> to vector<8x48xf32>
    %151 = vector.extract_strided_slice %118 {offsets = [0, 96], sizes = [8, 48], strides = [1, 1]} : vector<8x144xf32> to vector<8x48xf32>
    %152 = arith.addf %151, %20 : vector<8x48xf32>
    %153 = arith.mulf %148, %152 : vector<8x48xf32>
    %154 = arith.addf %150, %153 : vector<8x48xf32>
    %155 = math.tanh %154 : vector<8x48xf32>
    %cst_48 = arith.constant 1.000000e+00 : f32
    %156 = vector.broadcast %cst_48 : f32 to vector<8x48xf32>
    %157 = arith.subf %156, %149 : vector<8x48xf32>
    %158 = arith.mulf %157, %155 : vector<8x48xf32>
    %159 = arith.mulf %149, %114 : vector<8x48xf32>
    %160 = arith.addf %158, %159 : vector<8x48xf32>
    %c24 = arith.constant 24 : index
    %c0_49 = arith.constant 0 : index
    %161 = vector.load %arg14[%c24, %c0_49] : memref<64x144xf32, #tpu.memory_space<vmem>>, vector<8x144xf32>
    %c32 = arith.constant 32 : index
    %c0_50 = arith.constant 0 : index
    %162 = vector.load %arg15[%c32, %c0_50] : memref<64x144xf32, #tpu.memory_space<vmem>>, vector<8x144xf32>
    %cst_51 = arith.constant dense<0.000000e+00> : vector<8x144xf32>
    %163 = tpu.matmul %139, %13, %cst_51 {dimension_numbers = #tpu.dot_dimension_numbers<[1], [0], [0], [1], [0, 0, 1, 1], [], []>} : vector<8x48xf32>, vector<48x144xf32>, vector<8x144xf32> -> vector<8x144xf32>
    %cst_52 = arith.constant dense<0.000000e+00> : vector<8x144xf32>
    %164 = tpu.matmul %160, %14, %cst_52 {dimension_numbers = #tpu.dot_dimension_numbers<[1], [0], [0], [1], [0, 0, 1, 1], [], []>} : vector<8x48xf32>, vector<48x144xf32>, vector<8x144xf32> -> vector<8x144xf32>
    %165 = vector.extract_strided_slice %161 {offsets = [0, 0], sizes = [8, 96], strides = [1, 1]} : vector<8x144xf32> to vector<8x96xf32>
    %166 = vector.extract_strided_slice %163 {offsets = [0, 0], sizes = [8, 96], strides = [1, 1]} : vector<8x144xf32> to vector<8x96xf32>
    %167 = arith.addf %165, %166 : vector<8x96xf32>
    %168 = arith.negf %167 : vector<8x96xf32>
    %169 = math.exp %168 : vector<8x96xf32>
    %cst_53 = arith.constant 1.000000e+00 : f32
    %170 = vector.broadcast %cst_53 : f32 to vector<8x96xf32>
    %171 = arith.addf %170, %169 : vector<8x96xf32>
    %172 = arith.divf %170, %171 : vector<8x96xf32>
    %173 = vector.extract_strided_slice %172 {offsets = [0, 0], sizes = [8, 48], strides = [1, 1]} : vector<8x96xf32> to vector<8x48xf32>
    %174 = vector.extract_strided_slice %172 {offsets = [0, 48], sizes = [8, 48], strides = [1, 1]} : vector<8x96xf32> to vector<8x48xf32>
    %175 = vector.extract_strided_slice %161 {offsets = [0, 96], sizes = [8, 48], strides = [1, 1]} : vector<8x144xf32> to vector<8x48xf32>
    %176 = vector.extract_strided_slice %163 {offsets = [0, 96], sizes = [8, 48], strides = [1, 1]} : vector<8x144xf32> to vector<8x48xf32>
    %177 = arith.addf %176, %17 : vector<8x48xf32>
    %178 = arith.mulf %173, %177 : vector<8x48xf32>
    %179 = arith.addf %175, %178 : vector<8x48xf32>
    %180 = math.tanh %179 : vector<8x48xf32>
    %cst_54 = arith.constant 1.000000e+00 : f32
    %181 = vector.broadcast %cst_54 : f32 to vector<8x48xf32>
    %182 = arith.subf %181, %174 : vector<8x48xf32>
    %183 = arith.mulf %182, %180 : vector<8x48xf32>
    %184 = arith.mulf %174, %139 : vector<8x48xf32>
    %185 = arith.addf %183, %184 : vector<8x48xf32>
    %186 = vector.extract_strided_slice %162 {offsets = [0, 0], sizes = [8, 96], strides = [1, 1]} : vector<8x144xf32> to vector<8x96xf32>
    %187 = vector.extract_strided_slice %164 {offsets = [0, 0], sizes = [8, 96], strides = [1, 1]} : vector<8x144xf32> to vector<8x96xf32>
    %188 = arith.addf %186, %187 : vector<8x96xf32>
    %189 = arith.negf %188 : vector<8x96xf32>
    %190 = math.exp %189 : vector<8x96xf32>
    %cst_55 = arith.constant 1.000000e+00 : f32
    %191 = vector.broadcast %cst_55 : f32 to vector<8x96xf32>
    %192 = arith.addf %191, %190 : vector<8x96xf32>
    %193 = arith.divf %191, %192 : vector<8x96xf32>
    %194 = vector.extract_strided_slice %193 {offsets = [0, 0], sizes = [8, 48], strides = [1, 1]} : vector<8x96xf32> to vector<8x48xf32>
    %195 = vector.extract_strided_slice %193 {offsets = [0, 48], sizes = [8, 48], strides = [1, 1]} : vector<8x96xf32> to vector<8x48xf32>
    %196 = vector.extract_strided_slice %162 {offsets = [0, 96], sizes = [8, 48], strides = [1, 1]} : vector<8x144xf32> to vector<8x48xf32>
    %197 = vector.extract_strided_slice %164 {offsets = [0, 96], sizes = [8, 48], strides = [1, 1]} : vector<8x144xf32> to vector<8x48xf32>
    %198 = arith.addf %197, %20 : vector<8x48xf32>
    %199 = arith.mulf %194, %198 : vector<8x48xf32>
    %200 = arith.addf %196, %199 : vector<8x48xf32>
    %201 = math.tanh %200 : vector<8x48xf32>
    %cst_56 = arith.constant 1.000000e+00 : f32
    %202 = vector.broadcast %cst_56 : f32 to vector<8x48xf32>
    %203 = arith.subf %202, %195 : vector<8x48xf32>
    %204 = arith.mulf %203, %201 : vector<8x48xf32>
    %205 = arith.mulf %195, %160 : vector<8x48xf32>
    %206 = arith.addf %204, %205 : vector<8x48xf32>
    %c32_57 = arith.constant 32 : index
    %c0_58 = arith.constant 0 : index
    %207 = vector.load %arg14[%c32_57, %c0_58] : memref<64x144xf32, #tpu.memory_space<vmem>>, vector<8x144xf32>
    %c24_59 = arith.constant 24 : index
    %c0_60 = arith.constant 0 : index
    %208 = vector.load %arg15[%c24_59, %c0_60] : memref<64x144xf32, #tpu.memory_space<vmem>>, vector<8x144xf32>
    %cst_61 = arith.constant dense<0.000000e+00> : vector<8x144xf32>
    %209 = tpu.matmul %185, %13, %cst_61 {dimension_numbers = #tpu.dot_dimension_numbers<[1], [0], [0], [1], [0, 0, 1, 1], [], []>} : vector<8x48xf32>, vector<48x144xf32>, vector<8x144xf32> -> vector<8x144xf32>
    %cst_62 = arith.constant dense<0.000000e+00> : vector<8x144xf32>
    %210 = tpu.matmul %206, %14, %cst_62 {dimension_numbers = #tpu.dot_dimension_numbers<[1], [0], [0], [1], [0, 0, 1, 1], [], []>} : vector<8x48xf32>, vector<48x144xf32>, vector<8x144xf32> -> vector<8x144xf32>
    %211 = vector.extract_strided_slice %207 {offsets = [0, 0], sizes = [8, 96], strides = [1, 1]} : vector<8x144xf32> to vector<8x96xf32>
    %212 = vector.extract_strided_slice %209 {offsets = [0, 0], sizes = [8, 96], strides = [1, 1]} : vector<8x144xf32> to vector<8x96xf32>
    %213 = arith.addf %211, %212 : vector<8x96xf32>
    %214 = arith.negf %213 : vector<8x96xf32>
    %215 = math.exp %214 : vector<8x96xf32>
    %cst_63 = arith.constant 1.000000e+00 : f32
    %216 = vector.broadcast %cst_63 : f32 to vector<8x96xf32>
    %217 = arith.addf %216, %215 : vector<8x96xf32>
    %218 = arith.divf %216, %217 : vector<8x96xf32>
    %219 = vector.extract_strided_slice %218 {offsets = [0, 0], sizes = [8, 48], strides = [1, 1]} : vector<8x96xf32> to vector<8x48xf32>
    %220 = vector.extract_strided_slice %218 {offsets = [0, 48], sizes = [8, 48], strides = [1, 1]} : vector<8x96xf32> to vector<8x48xf32>
    %221 = vector.extract_strided_slice %207 {offsets = [0, 96], sizes = [8, 48], strides = [1, 1]} : vector<8x144xf32> to vector<8x48xf32>
    %222 = vector.extract_strided_slice %209 {offsets = [0, 96], sizes = [8, 48], strides = [1, 1]} : vector<8x144xf32> to vector<8x48xf32>
    %223 = arith.addf %222, %17 : vector<8x48xf32>
    %224 = arith.mulf %219, %223 : vector<8x48xf32>
    %225 = arith.addf %221, %224 : vector<8x48xf32>
    %226 = math.tanh %225 : vector<8x48xf32>
    %cst_64 = arith.constant 1.000000e+00 : f32
    %227 = vector.broadcast %cst_64 : f32 to vector<8x48xf32>
    %228 = arith.subf %227, %220 : vector<8x48xf32>
    %229 = arith.mulf %228, %226 : vector<8x48xf32>
    %230 = arith.mulf %220, %185 : vector<8x48xf32>
    %231 = arith.addf %229, %230 : vector<8x48xf32>
    %232 = vector.extract_strided_slice %208 {offsets = [0, 0], sizes = [8, 96], strides = [1, 1]} : vector<8x144xf32> to vector<8x96xf32>
    %233 = vector.extract_strided_slice %210 {offsets = [0, 0], sizes = [8, 96], strides = [1, 1]} : vector<8x144xf32> to vector<8x96xf32>
    %234 = arith.addf %232, %233 : vector<8x96xf32>
    %235 = arith.negf %234 : vector<8x96xf32>
    %236 = math.exp %235 : vector<8x96xf32>
    %cst_65 = arith.constant 1.000000e+00 : f32
    %237 = vector.broadcast %cst_65 : f32 to vector<8x96xf32>
    %238 = arith.addf %237, %236 : vector<8x96xf32>
    %239 = arith.divf %237, %238 : vector<8x96xf32>
    %240 = vector.extract_strided_slice %239 {offsets = [0, 0], sizes = [8, 48], strides = [1, 1]} : vector<8x96xf32> to vector<8x48xf32>
    %241 = vector.extract_strided_slice %239 {offsets = [0, 48], sizes = [8, 48], strides = [1, 1]} : vector<8x96xf32> to vector<8x48xf32>
    %242 = vector.extract_strided_slice %208 {offsets = [0, 96], sizes = [8, 48], strides = [1, 1]} : vector<8x144xf32> to vector<8x48xf32>
    %243 = vector.extract_strided_slice %210 {offsets = [0, 96], sizes = [8, 48], strides = [1, 1]} : vector<8x144xf32> to vector<8x48xf32>
    %244 = arith.addf %243, %20 : vector<8x48xf32>
    %245 = arith.mulf %240, %244 : vector<8x48xf32>
    %246 = arith.addf %242, %245 : vector<8x48xf32>
    %247 = math.tanh %246 : vector<8x48xf32>
    %cst_66 = arith.constant 1.000000e+00 : f32
    %248 = vector.broadcast %cst_66 : f32 to vector<8x48xf32>
    %249 = arith.subf %248, %241 : vector<8x48xf32>
    %250 = arith.mulf %249, %247 : vector<8x48xf32>
    %251 = arith.mulf %241, %206 : vector<8x48xf32>
    %252 = arith.addf %250, %251 : vector<8x48xf32>
    %c40_67 = arith.constant 40 : index
    %c0_68 = arith.constant 0 : index
    %253 = vector.load %arg14[%c40_67, %c0_68] : memref<64x144xf32, #tpu.memory_space<vmem>>, vector<8x144xf32>
    %c16_69 = arith.constant 16 : index
    %c0_70 = arith.constant 0 : index
    %254 = vector.load %arg15[%c16_69, %c0_70] : memref<64x144xf32, #tpu.memory_space<vmem>>, vector<8x144xf32>
    %cst_71 = arith.constant dense<0.000000e+00> : vector<8x144xf32>
    %255 = tpu.matmul %231, %13, %cst_71 {dimension_numbers = #tpu.dot_dimension_numbers<[1], [0], [0], [1], [0, 0, 1, 1], [], []>} : vector<8x48xf32>, vector<48x144xf32>, vector<8x144xf32> -> vector<8x144xf32>
    %cst_72 = arith.constant dense<0.000000e+00> : vector<8x144xf32>
    %256 = tpu.matmul %252, %14, %cst_72 {dimension_numbers = #tpu.dot_dimension_numbers<[1], [0], [0], [1], [0, 0, 1, 1], [], []>} : vector<8x48xf32>, vector<48x144xf32>, vector<8x144xf32> -> vector<8x144xf32>
    %257 = vector.extract_strided_slice %253 {offsets = [0, 0], sizes = [8, 96], strides = [1, 1]} : vector<8x144xf32> to vector<8x96xf32>
    %258 = vector.extract_strided_slice %255 {offsets = [0, 0], sizes = [8, 96], strides = [1, 1]} : vector<8x144xf32> to vector<8x96xf32>
    %259 = arith.addf %257, %258 : vector<8x96xf32>
    %260 = arith.negf %259 : vector<8x96xf32>
    %261 = math.exp %260 : vector<8x96xf32>
    %cst_73 = arith.constant 1.000000e+00 : f32
    %262 = vector.broadcast %cst_73 : f32 to vector<8x96xf32>
    %263 = arith.addf %262, %261 : vector<8x96xf32>
    %264 = arith.divf %262, %263 : vector<8x96xf32>
    %265 = vector.extract_strided_slice %264 {offsets = [0, 0], sizes = [8, 48], strides = [1, 1]} : vector<8x96xf32> to vector<8x48xf32>
    %266 = vector.extract_strided_slice %264 {offsets = [0, 48], sizes = [8, 48], strides = [1, 1]} : vector<8x96xf32> to vector<8x48xf32>
    %267 = vector.extract_strided_slice %253 {offsets = [0, 96], sizes = [8, 48], strides = [1, 1]} : vector<8x144xf32> to vector<8x48xf32>
    %268 = vector.extract_strided_slice %255 {offsets = [0, 96], sizes = [8, 48], strides = [1, 1]} : vector<8x144xf32> to vector<8x48xf32>
    %269 = arith.addf %268, %17 : vector<8x48xf32>
    %270 = arith.mulf %265, %269 : vector<8x48xf32>
    %271 = arith.addf %267, %270 : vector<8x48xf32>
    %272 = math.tanh %271 : vector<8x48xf32>
    %cst_74 = arith.constant 1.000000e+00 : f32
    %273 = vector.broadcast %cst_74 : f32 to vector<8x48xf32>
    %274 = arith.subf %273, %266 : vector<8x48xf32>
    %275 = arith.mulf %274, %272 : vector<8x48xf32>
    %276 = arith.mulf %266, %231 : vector<8x48xf32>
    %277 = arith.addf %275, %276 : vector<8x48xf32>
    %278 = vector.extract_strided_slice %254 {offsets = [0, 0], sizes = [8, 96], strides = [1, 1]} : vector<8x144xf32> to vector<8x96xf32>
    %279 = vector.extract_strided_slice %256 {offsets = [0, 0], sizes = [8, 96], strides = [1, 1]} : vector<8x144xf32> to vector<8x96xf32>
    %280 = arith.addf %278, %279 : vector<8x96xf32>
    %281 = arith.negf %280 : vector<8x96xf32>
    %282 = math.exp %281 : vector<8x96xf32>
    %cst_75 = arith.constant 1.000000e+00 : f32
    %283 = vector.broadcast %cst_75 : f32 to vector<8x96xf32>
    %284 = arith.addf %283, %282 : vector<8x96xf32>
    %285 = arith.divf %283, %284 : vector<8x96xf32>
    %286 = vector.extract_strided_slice %285 {offsets = [0, 0], sizes = [8, 48], strides = [1, 1]} : vector<8x96xf32> to vector<8x48xf32>
    %287 = vector.extract_strided_slice %285 {offsets = [0, 48], sizes = [8, 48], strides = [1, 1]} : vector<8x96xf32> to vector<8x48xf32>
    %288 = vector.extract_strided_slice %254 {offsets = [0, 96], sizes = [8, 48], strides = [1, 1]} : vector<8x144xf32> to vector<8x48xf32>
    %289 = vector.extract_strided_slice %256 {offsets = [0, 96], sizes = [8, 48], strides = [1, 1]} : vector<8x144xf32> to vector<8x48xf32>
    %290 = arith.addf %289, %20 : vector<8x48xf32>
    %291 = arith.mulf %286, %290 : vector<8x48xf32>
    %292 = arith.addf %288, %291 : vector<8x48xf32>
    %293 = math.tanh %292 : vector<8x48xf32>
    %cst_76 = arith.constant 1.000000e+00 : f32
    %294 = vector.broadcast %cst_76 : f32 to vector<8x48xf32>
    %295 = arith.subf %294, %287 : vector<8x48xf32>
    %296 = arith.mulf %295, %293 : vector<8x48xf32>
    %297 = arith.mulf %287, %252 : vector<8x48xf32>
    %298 = arith.addf %296, %297 : vector<8x48xf32>
    %c48_77 = arith.constant 48 : index
    %c0_78 = arith.constant 0 : index
    %299 = vector.load %arg14[%c48_77, %c0_78] : memref<64x144xf32, #tpu.memory_space<vmem>>, vector<8x144xf32>
    %c8_79 = arith.constant 8 : index
    %c0_80 = arith.constant 0 : index
    %300 = vector.load %arg15[%c8_79, %c0_80] : memref<64x144xf32, #tpu.memory_space<vmem>>, vector<8x144xf32>
    %cst_81 = arith.constant dense<0.000000e+00> : vector<8x144xf32>
    %301 = tpu.matmul %277, %13, %cst_81 {dimension_numbers = #tpu.dot_dimension_numbers<[1], [0], [0], [1], [0, 0, 1, 1], [], []>} : vector<8x48xf32>, vector<48x144xf32>, vector<8x144xf32> -> vector<8x144xf32>
    %cst_82 = arith.constant dense<0.000000e+00> : vector<8x144xf32>
    %302 = tpu.matmul %298, %14, %cst_82 {dimension_numbers = #tpu.dot_dimension_numbers<[1], [0], [0], [1], [0, 0, 1, 1], [], []>} : vector<8x48xf32>, vector<48x144xf32>, vector<8x144xf32> -> vector<8x144xf32>
    %303 = vector.extract_strided_slice %299 {offsets = [0, 0], sizes = [8, 96], strides = [1, 1]} : vector<8x144xf32> to vector<8x96xf32>
    %304 = vector.extract_strided_slice %301 {offsets = [0, 0], sizes = [8, 96], strides = [1, 1]} : vector<8x144xf32> to vector<8x96xf32>
    %305 = arith.addf %303, %304 : vector<8x96xf32>
    %306 = arith.negf %305 : vector<8x96xf32>
    %307 = math.exp %306 : vector<8x96xf32>
    %cst_83 = arith.constant 1.000000e+00 : f32
    %308 = vector.broadcast %cst_83 : f32 to vector<8x96xf32>
    %309 = arith.addf %308, %307 : vector<8x96xf32>
    %310 = arith.divf %308, %309 : vector<8x96xf32>
    %311 = vector.extract_strided_slice %310 {offsets = [0, 0], sizes = [8, 48], strides = [1, 1]} : vector<8x96xf32> to vector<8x48xf32>
    %312 = vector.extract_strided_slice %310 {offsets = [0, 48], sizes = [8, 48], strides = [1, 1]} : vector<8x96xf32> to vector<8x48xf32>
    %313 = vector.extract_strided_slice %299 {offsets = [0, 96], sizes = [8, 48], strides = [1, 1]} : vector<8x144xf32> to vector<8x48xf32>
    %314 = vector.extract_strided_slice %301 {offsets = [0, 96], sizes = [8, 48], strides = [1, 1]} : vector<8x144xf32> to vector<8x48xf32>
    %315 = arith.addf %314, %17 : vector<8x48xf32>
    %316 = arith.mulf %311, %315 : vector<8x48xf32>
    %317 = arith.addf %313, %316 : vector<8x48xf32>
    %318 = math.tanh %317 : vector<8x48xf32>
    %cst_84 = arith.constant 1.000000e+00 : f32
    %319 = vector.broadcast %cst_84 : f32 to vector<8x48xf32>
    %320 = arith.subf %319, %312 : vector<8x48xf32>
    %321 = arith.mulf %320, %318 : vector<8x48xf32>
    %322 = arith.mulf %312, %277 : vector<8x48xf32>
    %323 = arith.addf %321, %322 : vector<8x48xf32>
    %324 = vector.extract_strided_slice %300 {offsets = [0, 0], sizes = [8, 96], strides = [1, 1]} : vector<8x144xf32> to vector<8x96xf32>
    %325 = vector.extract_strided_slice %302 {offsets = [0, 0], sizes = [8, 96], strides = [1, 1]} : vector<8x144xf32> to vector<8x96xf32>
    %326 = arith.addf %324, %325 : vector<8x96xf32>
    %327 = arith.negf %326 : vector<8x96xf32>
    %328 = math.exp %327 : vector<8x96xf32>
    %cst_85 = arith.constant 1.000000e+00 : f32
    %329 = vector.broadcast %cst_85 : f32 to vector<8x96xf32>
    %330 = arith.addf %329, %328 : vector<8x96xf32>
    %331 = arith.divf %329, %330 : vector<8x96xf32>
    %332 = vector.extract_strided_slice %331 {offsets = [0, 0], sizes = [8, 48], strides = [1, 1]} : vector<8x96xf32> to vector<8x48xf32>
    %333 = vector.extract_strided_slice %331 {offsets = [0, 48], sizes = [8, 48], strides = [1, 1]} : vector<8x96xf32> to vector<8x48xf32>
    %334 = vector.extract_strided_slice %300 {offsets = [0, 96], sizes = [8, 48], strides = [1, 1]} : vector<8x144xf32> to vector<8x48xf32>
    %335 = vector.extract_strided_slice %302 {offsets = [0, 96], sizes = [8, 48], strides = [1, 1]} : vector<8x144xf32> to vector<8x48xf32>
    %336 = arith.addf %335, %20 : vector<8x48xf32>
    %337 = arith.mulf %332, %336 : vector<8x48xf32>
    %338 = arith.addf %334, %337 : vector<8x48xf32>
    %339 = math.tanh %338 : vector<8x48xf32>
    %cst_86 = arith.constant 1.000000e+00 : f32
    %340 = vector.broadcast %cst_86 : f32 to vector<8x48xf32>
    %341 = arith.subf %340, %333 : vector<8x48xf32>
    %342 = arith.mulf %341, %339 : vector<8x48xf32>
    %343 = arith.mulf %333, %298 : vector<8x48xf32>
    %344 = arith.addf %342, %343 : vector<8x48xf32>
    %c56_87 = arith.constant 56 : index
    %c0_88 = arith.constant 0 : index
    %345 = vector.load %arg14[%c56_87, %c0_88] : memref<64x144xf32, #tpu.memory_space<vmem>>, vector<8x144xf32>
    %c0_89 = arith.constant 0 : index
    %c0_90 = arith.constant 0 : index
    %346 = vector.load %arg15[%c0_89, %c0_90] : memref<64x144xf32, #tpu.memory_space<vmem>>, vector<8x144xf32>
    %cst_91 = arith.constant dense<0.000000e+00> : vector<8x144xf32>
    %347 = tpu.matmul %323, %13, %cst_91 {dimension_numbers = #tpu.dot_dimension_numbers<[1], [0], [0], [1], [0, 0, 1, 1], [], []>} : vector<8x48xf32>, vector<48x144xf32>, vector<8x144xf32> -> vector<8x144xf32>
    %cst_92 = arith.constant dense<0.000000e+00> : vector<8x144xf32>
    %348 = tpu.matmul %344, %14, %cst_92 {dimension_numbers = #tpu.dot_dimension_numbers<[1], [0], [0], [1], [0, 0, 1, 1], [], []>} : vector<8x48xf32>, vector<48x144xf32>, vector<8x144xf32> -> vector<8x144xf32>
    %349 = vector.extract_strided_slice %345 {offsets = [0, 0], sizes = [8, 96], strides = [1, 1]} : vector<8x144xf32> to vector<8x96xf32>
    %350 = vector.extract_strided_slice %347 {offsets = [0, 0], sizes = [8, 96], strides = [1, 1]} : vector<8x144xf32> to vector<8x96xf32>
    %351 = arith.addf %349, %350 : vector<8x96xf32>
    %352 = arith.negf %351 : vector<8x96xf32>
    %353 = math.exp %352 : vector<8x96xf32>
    %cst_93 = arith.constant 1.000000e+00 : f32
    %354 = vector.broadcast %cst_93 : f32 to vector<8x96xf32>
    %355 = arith.addf %354, %353 : vector<8x96xf32>
    %356 = arith.divf %354, %355 : vector<8x96xf32>
    %357 = vector.extract_strided_slice %356 {offsets = [0, 0], sizes = [8, 48], strides = [1, 1]} : vector<8x96xf32> to vector<8x48xf32>
    %358 = vector.extract_strided_slice %356 {offsets = [0, 48], sizes = [8, 48], strides = [1, 1]} : vector<8x96xf32> to vector<8x48xf32>
    %359 = vector.extract_strided_slice %345 {offsets = [0, 96], sizes = [8, 48], strides = [1, 1]} : vector<8x144xf32> to vector<8x48xf32>
    %360 = vector.extract_strided_slice %347 {offsets = [0, 96], sizes = [8, 48], strides = [1, 1]} : vector<8x144xf32> to vector<8x48xf32>
    %361 = arith.addf %360, %17 : vector<8x48xf32>
    %362 = arith.mulf %357, %361 : vector<8x48xf32>
    %363 = arith.addf %359, %362 : vector<8x48xf32>
    %364 = math.tanh %363 : vector<8x48xf32>
    %cst_94 = arith.constant 1.000000e+00 : f32
    %365 = vector.broadcast %cst_94 : f32 to vector<8x48xf32>
    %366 = arith.subf %365, %358 : vector<8x48xf32>
    %367 = arith.mulf %366, %364 : vector<8x48xf32>
    %368 = arith.mulf %358, %323 : vector<8x48xf32>
    %369 = arith.addf %367, %368 : vector<8x48xf32>
    %370 = vector.extract_strided_slice %346 {offsets = [0, 0], sizes = [8, 96], strides = [1, 1]} : vector<8x144xf32> to vector<8x96xf32>
    %371 = vector.extract_strided_slice %348 {offsets = [0, 0], sizes = [8, 96], strides = [1, 1]} : vector<8x144xf32> to vector<8x96xf32>
    %372 = arith.addf %370, %371 : vector<8x96xf32>
    %373 = arith.negf %372 : vector<8x96xf32>
    %374 = math.exp %373 : vector<8x96xf32>
    %cst_95 = arith.constant 1.000000e+00 : f32
    %375 = vector.broadcast %cst_95 : f32 to vector<8x96xf32>
    %376 = arith.addf %375, %374 : vector<8x96xf32>
    %377 = arith.divf %375, %376 : vector<8x96xf32>
    %378 = vector.extract_strided_slice %377 {offsets = [0, 0], sizes = [8, 48], strides = [1, 1]} : vector<8x96xf32> to vector<8x48xf32>
    %379 = vector.extract_strided_slice %377 {offsets = [0, 48], sizes = [8, 48], strides = [1, 1]} : vector<8x96xf32> to vector<8x48xf32>
    %380 = vector.extract_strided_slice %346 {offsets = [0, 96], sizes = [8, 48], strides = [1, 1]} : vector<8x144xf32> to vector<8x48xf32>
    %381 = vector.extract_strided_slice %348 {offsets = [0, 96], sizes = [8, 48], strides = [1, 1]} : vector<8x144xf32> to vector<8x48xf32>
    %382 = arith.addf %381, %20 : vector<8x48xf32>
    %383 = arith.mulf %378, %382 : vector<8x48xf32>
    %384 = arith.addf %380, %383 : vector<8x48xf32>
    %385 = math.tanh %384 : vector<8x48xf32>
    %cst_96 = arith.constant 1.000000e+00 : f32
    %386 = vector.broadcast %cst_96 : f32 to vector<8x48xf32>
    %387 = arith.subf %386, %379 : vector<8x48xf32>
    %388 = arith.mulf %387, %385 : vector<8x48xf32>
    %389 = arith.mulf %379, %344 : vector<8x48xf32>
    %390 = arith.addf %388, %389 : vector<8x48xf32>
    %c0_97 = arith.constant 0 : index
    %c0_98 = arith.constant 0 : index
    %391 = vector.load %arg9[%c0_97, %c0_98] : memref<8x48xf32, #tpu.memory_space<vmem>>, vector<8x48xf32>
    %392 = arith.mulf %369, %391 : vector<8x48xf32>
    %c0_99 = arith.constant 0 : index
    %c0_100 = arith.constant 0 : index
    %393 = vector.load %arg10[%c0_99, %c0_100] : memref<48x128xf32, #tpu.memory_space<vmem>>, vector<48x128xf32>
    %cst_101 = arith.constant dense<0.000000e+00> : vector<8x128xf32>
    %394 = tpu.matmul %392, %393, %cst_101 {dimension_numbers = #tpu.dot_dimension_numbers<[1], [0], [0], [1], [0, 0, 1, 1], [], []>} : vector<8x48xf32>, vector<48x128xf32>, vector<8x128xf32> -> vector<8x128xf32>
    %395 = arith.mulf %390, %391 : vector<8x48xf32>
    %c0_102 = arith.constant 0 : index
    %c0_103 = arith.constant 0 : index
    %396 = vector.load %arg11[%c0_102, %c0_103] : memref<48x128xf32, #tpu.memory_space<vmem>>, vector<48x128xf32>
    %cst_104 = arith.constant dense<0.000000e+00> : vector<8x128xf32>
    %397 = tpu.matmul %395, %396, %cst_104 {dimension_numbers = #tpu.dot_dimension_numbers<[1], [0], [0], [1], [0, 0, 1, 1], [], []>} : vector<8x48xf32>, vector<48x128xf32>, vector<8x128xf32> -> vector<8x128xf32>
    %398 = arith.addf %394, %397 : vector<8x128xf32>
    %c0_105 = arith.constant 0 : index
    %c0_106 = arith.constant 0 : index
    %399 = vector.load %arg12[%c0_105, %c0_106] : memref<1x128xf32, #tpu.memory_space<vmem>>, vector<1x128xf32>
    %400 = vector.broadcast %399 : vector<1x128xf32> to vector<8x128xf32>
    %401 = arith.addf %398, %400 : vector<8x128xf32>
    %c0_107 = arith.constant 0 : index
    %c0_108 = arith.constant 0 : index
    %402 = vector.load %arg13[%c0_107, %c0_108] : memref<8x128xf32, #tpu.memory_space<vmem>>, vector<8x128xf32>
    tpu.vector_store %arg13[%c0_107, %c0_108], %401 {strides = array<i32>} : memref<8x128xf32, #tpu.memory_space<vmem>>, vector<8x128xf32>,
    return
  }
}

</mosaic_0001>

<llo_original>
// kernel: tpu_custom_call.1
$region0: #{tpu_custom_call.1}
  #allocation0 [shape = 'u32[]', space=smem, size = 0x4, offset = 0x4, fixed_abs, tag = 'smem constant byte address 0x4 - core index']
  #allocation1 [shape = 'u32[144,128]{1,0:T(1,128)}', space=vmem, size = 0x12000, scoped, tag = 'internal scratch']
  #allocation2 [shape = 'f32[64,144]{1,0:T(8,128)}', space=vmem, size = 0x10000, scoped, tag = 'scratch operand']
  #allocation3 [shape = 'f32[64,144]{1,0:T(8,128)}', space=vmem, size = 0x10000, scoped, tag = 'scratch operand']
  %s0 = inlined_call_operand.vmem [shape: f32[64,32], index: 0, kind: input, shape index: {}]
  %s1 = inlined_call_operand.hbm [shape: f32[32,144], index: 1, kind: input, shape index: {}]
  %s2 = inlined_call_operand.hbm [shape: f32[32,144], index: 2, kind: input, shape index: {}]
  %s3 = inlined_call_operand.vmem [shape: f32[1,144], index: 3, kind: input, shape index: {}]
  %s4 = inlined_call_operand.vmem [shape: f32[1,144], index: 4, kind: input, shape index: {}]
  %s5 = inlined_call_operand.vmem [shape: f32[48,144], index: 5, kind: input, shape index: {}]
  %s6 = inlined_call_operand.hbm [shape: f32[48,144], index: 6, kind: input, shape index: {}]
  %s7 = inlined_call_operand.vmem [shape: f32[1,48], index: 7, kind: input, shape index: {}]
  %s8 = inlined_call_operand.vmem [shape: f32[1,48], index: 8, kind: input, shape index: {}]
  %s9 = inlined_call_operand.vmem [shape: f32[8,48], index: 9, kind: input, shape index: {}]
  %s10 = inlined_call_operand.hbm [shape: f32[48,128], index: 10, kind: input, shape index: {}]
  %s11 = inlined_call_operand.hbm [shape: f32[48,128], index: 11, kind: input, shape index: {}]
  %s12 = inlined_call_operand.vmem [shape: f32[1,128], index: 12, kind: input, shape index: {}]
  %s13 = inlined_call_operand.hbm [shape: f32[8,128], index: 13, kind: output, shape index: {}]
  %s14 = sld [smem:[#allocation0]]
  $region82: #{tpu_custom_call.1} parent=0
    _
  %s16 = ssub.s32 1, %s14
  %s17 = scalar_select 0, %s16, %s14
  $region1: #{tpu_custom_call.1} parent=0
    #allocation4 [shape = 'u8[32768]{0}', space=vmem, size = 0x8000, scoped, tag = 'input window, operand 1, single buffered']
    #allocation5 [shape = 's32[1]{0}', space=sflag, size = 0x4, scoped, tag = 'scoped memory for tpu_custom_call.1']
    #allocation6 [shape = 's32[1]{0}', space=sflag, size = 0x4, scoped, tag = 'scoped memory for tpu_custom_call.1']
    #allocation7 [shape = 'u8[32768]{0}', space=vmem, size = 0x8000, scoped, tag = 'input window, operand 2, single buffered']
    #allocation8 [shape = 's32[1]{0}', space=sflag, size = 0x4, scoped, tag = 'scoped memory for tpu_custom_call.1']
    #allocation9 [shape = 'u8[49152]{0}', space=vmem, size = 0xc000, scoped, tag = 'input window, operand 6, single buffered']
    #allocation10 [shape = 'u8[24576]{0}', space=vmem, size = 0x6000, scoped, tag = 'input window, operand 10, single buffered']
    #allocation11 [shape = 's32[1]{0}', space=sflag, size = 0x4, scoped, tag = 'scoped memory for tpu_custom_call.1']
    #allocation12 [shape = 'u8[24576]{0}', space=vmem, size = 0x6000, scoped, tag = 'input window, operand 11, single buffered']
    #allocation13 [shape = 'u8[4096]{0}', space=vmem, size = 0x1000, scoped, tag = 'output window, operand 0, single buffered']
    %18 = vsyncpa [#allocation5], 0
    %19 = vsyncpa [#allocation8], 0
    %20 = vsyncpa [#allocation11], 0
    %21 = vsyncpa [#allocation6], 0
    // Predicated region
    $region2: #{tpu_custom_call.1} parent=1 // pred_check
      _
    $region3: #{tpu_custom_call.1} parent=1 // pred_check_branch
      %23 = sbr.rel (0) target = $region5
    $region4: #{tpu_custom_call.1} parent=1 // pred_region
      _
    $region5: #{tpu_custom_call.1} parent=1 // pred_fallthru
      _
    // Predicated region
    $region6: #{tpu_custom_call.1} parent=1 // pred_check
      _
    $region7: #{tpu_custom_call.1} parent=1 // pred_check_branch
      %25 = sbr.rel (0) target = $region9
    $region8: #{tpu_custom_call.1} parent=1 // pred_region
      %s27 = ssub.s32 1024, 1024
      %28 = vsyncadd [#allocation5], %s27
      %s29 = sshll.u32 [#allocation4], 4
      %s30 = int_to_ptr.vmem [resolvable:$true] %s29
      %35 = dma.hbm_to_vmem [thread:$0]  %s1, 1024, %s30, [#allocation5], 256, 256, 16
    $region9: #{tpu_custom_call.1} parent=1 // pred_fallthru
      _
    // Predicated region
    $region10: #{tpu_custom_call.1} parent=1 // pred_check
      _
    $region11: #{tpu_custom_call.1} parent=1 // pred_check_branch
      %37 = sbr.rel (0) target = $region13
    $region12: #{tpu_custom_call.1} parent=1 // pred_region
      %s39 = ssub.s32 1024, 1024
      %40 = vsyncadd [#allocation8], %s39
      %s41 = sshll.u32 [#allocation7], 4
      %s42 = int_to_ptr.vmem [resolvable:$true] %s41
      %47 = dma.hbm_to_vmem [thread:$0]  %s2, 1024, %s42, [#allocation8], 256, 256, 16
    $region13: #{tpu_custom_call.1} parent=1 // pred_fallthru
      _
    // Predicated region
    $region14: #{tpu_custom_call.1} parent=1 // pred_check
      _
    $region15: #{tpu_custom_call.1} parent=1 // pred_check_branch
      %49 = sbr.rel (0) target = $region17
    $region16: #{tpu_custom_call.1} parent=1 // pred_region
      _
    $region17: #{tpu_custom_call.1} parent=1 // pred_fallthru
      _
    // Predicated region
    $region18: #{tpu_custom_call.1} parent=1 // pred_check
      _
    $region19: #{tpu_custom_call.1} parent=1 // pred_check_branch
      %51 = sbr.rel (0) target = $region21
    $region20: #{tpu_custom_call.1} parent=1 // pred_region
      _
    $region21: #{tpu_custom_call.1} parent=1 // pred_fallthru
      _
    // Predicated region
    $region22: #{tpu_custom_call.1} parent=1 // pred_check
      _
    $region23: #{tpu_custom_call.1} parent=1 // pred_check_branch
      %53 = sbr.rel (0) target = $region25
    $region24: #{tpu_custom_call.1} parent=1 // pred_region
      _
    $region25: #{tpu_custom_call.1} parent=1 // pred_fallthru
      _
    // Predicated region
    $region26: #{tpu_custom_call.1} parent=1 // pred_check
      _
    $region27: #{tpu_custom_call.1} parent=1 // pred_check_branch
      %55 = sbr.rel (0) target = $region29
    $region28: #{tpu_custom_call.1} parent=1 // pred_region
      %s57 = ssub.s32 1536, 1536
      %58 = vsyncadd [#allocation8], %s57
      %s59 = sshll.u32 [#allocation9], 4
      %s60 = int_to_ptr.vmem [resolvable:$true] %s59
      %65 = dma.hbm_to_vmem [thread:$0]  %s6, 1536, %s60, [#allocation8], 256, 256, 16
    $region29: #{tpu_custom_call.1} parent=1 // pred_fallthru
      _
    // Predicated region
    $region30: #{tpu_custom_call.1} parent=1 // pred_check
      _
    $region31: #{tpu_custom_call.1} parent=1 // pred_check_branch
      %67 = sbr.rel (0) target = $region33
    $region32: #{tpu_custom_call.1} parent=1 // pred_region
      _
    $region33: #{tpu_custom_call.1} parent=1 // pred_fallthru
      _
    // Predicated region
    $region34: #{tpu_custom_call.1} parent=1 // pred_check
      _
    $region35: #{tpu_custom_call.1} parent=1 // pred_check_branch
      %69 = sbr.rel (0) target = $region37
    $region36: #{tpu_custom_call.1} parent=1 // pred_region
      _
    $region37: #{tpu_custom_call.1} parent=1 // pred_fallthru
      _
    // Predicated region
    $region38: #{tpu_custom_call.1} parent=1 // pred_check
      _
    $region39: #{tpu_custom_call.1} parent=1 // pred_check_branch
      %71 = sbr.rel (0) target = $region41
    $region40: #{tpu_custom_call.1} parent=1 // pred_region
      _
    $region41: #{tpu_custom_call.1} parent=1 // pred_fallthru
      _
    // Predicated region
    $region42: #{tpu_custom_call.1} parent=1 // pred_check
      _
    $region43: #{tpu_custom_call.1} parent=1 // pred_check_branch
      %73 = sbr.rel (0) target = $region45
    $region44: #{tpu_custom_call.1} parent=1 // pred_region
      %s75 = ssub.s32 768, 768
      %76 = vsyncadd [#allocation11], %s75
      %s77 = sshll.u32 [#allocation10], 4
      %s78 = int_to_ptr.vmem [resolvable:$true] %s77
      %83 = dma.hbm_to_vmem [thread:$0]  %s10, 768, %s78, [#allocation11], 128, 128, 8
    $region45: #{tpu_custom_call.1} parent=1 // pred_fallthru
      _
    // Predicated region
    $region46: #{tpu_custom_call.1} parent=1 // pred_check
      _
    $region47: #{tpu_custom_call.1} parent=1 // pred_check_branch
      %85 = sbr.rel (0) target = $region49
    $region48: #{tpu_custom_call.1} parent=1 // pred_region
      %s87 = ssub.s32 768, 768
      %88 = vsyncadd [#allocation11], %s87
      %s89 = sshll.u32 [#allocation12], 4
      %s90 = int_to_ptr.vmem [resolvable:$true] %s89
      %95 = dma.hbm_to_vmem [thread:$0]  %s11, 768, %s90, [#allocation11], 128, 128, 8
    $region49: #{tpu_custom_call.1} parent=1 // pred_fallthru
      _
    // Predicated region
    $region50: #{tpu_custom_call.1} parent=1 // pred_check
      _
    $region51: #{tpu_custom_call.1} parent=1 // pred_check_branch
      %97 = sbr.rel (0) target = $region53
    $region52: #{tpu_custom_call.1} parent=1 // pred_region
      _
    $region53: #{tpu_custom_call.1} parent=1 // pred_fallthru
      _
    // Predicated region
    $region54: #{tpu_custom_call.1} parent=1 // pred_check
      _
    $region55: #{tpu_custom_call.1} parent=1 // pred_check_branch
      %99 = sbr.rel (0) target = $region57
    $region56: #{tpu_custom_call.1} parent=1 // pred_region
      %100 = dma.done [#allocation5], 1024
    $region57: #{tpu_custom_call.1} parent=1 // pred_fallthru
      _
    // Predicated region
    $region58: #{tpu_custom_call.1} parent=1 // pred_check
      _
    $region59: #{tpu_custom_call.1} parent=1 // pred_check_branch
      %102 = sbr.rel (0) target = $region61
    $region60: #{tpu_custom_call.1} parent=1 // pred_region
      %103 = dma.done [#allocation8], 1024
    $region61: #{tpu_custom_call.1} parent=1 // pred_fallthru
      _
    // Predicated region
    $region62: #{tpu_custom_call.1} parent=1 // pred_check
      _
    $region63: #{tpu_custom_call.1} parent=1 // pred_check_branch
      %105 = sbr.rel (0) target = $region65
    $region64: #{tpu_custom_call.1} parent=1 // pred_region
      %106 = dma.done [#allocation8], 1536
    $region65: #{tpu_custom_call.1} parent=1 // pred_fallthru
      _
    // Predicated region
    $region66: #{tpu_custom_call.1} parent=1 // pred_check
      _
    $region67: #{tpu_custom_call.1} parent=1 // pred_check_branch
      %108 = sbr.rel (0) target = $region69
    $region68: #{tpu_custom_call.1} parent=1 // pred_region
      %109 = dma.done [#allocation11], 768
    $region69: #{tpu_custom_call.1} parent=1 // pred_fallthru
      _
    // Predicated region
    $region70: #{tpu_custom_call.1} parent=1 // pred_check
      _
    $region71: #{tpu_custom_call.1} parent=1 // pred_check_branch
      %111 = sbr.rel (0) target = $region73
    $region72: #{tpu_custom_call.1} parent=1 // pred_region
      %112 = dma.done [#allocation11], 768
    $region73: #{tpu_custom_call.1} parent=1 // pred_fallthru
      _
    %v113 = vld [vmem:[%s0] sm:$0xff]
    %v114 = vld [vmem:[%s0 + $0x8] sm:$0xff]
    %v115 = vld [vmem:[%s0 + $0x10] sm:$0xff]
    %v116 = vld [vmem:[%s0 + $0x18] sm:$0xff]
    %v117 = vld [vmem:[%s0 + $0x20] sm:$0xff]
    %v118 = vld [vmem:[%s0 + $0x28] sm:$0xff]
    %v119 = vld [vmem:[%s0 + $0x30] sm:$0xff]
    %v120 = vld [vmem:[%s0 + $0x38] sm:$0xff]
    %v121 = vld [vmem:[#allocation4] sm:$0xff]
    %v122 = vld [vmem:[#allocation4 + $0x8] sm:$0xff]
    %v123 = vld [vmem:[#allocation4 + $0x10] sm:$0xff]
    %v124 = vld [vmem:[#allocation4 + $0x18] sm:$0xff]
    %v125 = vld [vmem:[#allocation4 + $0x20] sm:$0xff]
    %v126 = vld [vmem:[#allocation4 + $0x28] sm:$0xff]
    %v127 = vld [vmem:[#allocation4 + $0x30] sm:$0xff]
    %v128 = vld [vmem:[#allocation4 + $0x38] sm:$0xff]
    %v129 = vld [vmem:[%s3] sm:$0x3]
    %v131 = vlaneseq
    %v132 = vshrl.u32 %v131, 7
    %v133 = vsub.s32 0, %v132
    %v134 = vrot.slane %v129, %v133
    %v135 = vlaneseq
    %v136 = vshrl.u32 %v135, 7
    %v137 = vsub.s32 1, %v136
    %v138 = vrot.slane %v129, %v137
    %vm141 = vcmask 261120
    %v143 = vsel %vm141, %v113, 0
    %v146 = vsel %vm141, %v114, 0
    %v149 = vsel %vm141, %v115, 0
    %v152 = vsel %vm141, %v116, 0
    %v155 = vsel %vm141, %v117, 0
    %v158 = vsel %vm141, %v118, 0
    %v161 = vsel %vm141, %v119, 0
    %v164 = vsel %vm141, %v120, 0
    %166 = vmatprep.subr.mxu0 %v122
    %167 = vmatpush1.msra.mxu0 %v121
    %168 = vmatprep.subr.mxu0 %v124
    %169 = vmatpush1.msra.mxu0 %v123
    %170 = vmatprep.subr.mxu0 %v126
    %171 = vmatpush1.msra.mxu0 %v125
    %172 = vmatprep.subr.mxu0 %v128
    %173 = vmatpush1.msra.mxu0 %v127
    %174 = vmatprep.subr.mxu0 0.0
    %175 = vmatpush1.msra.mxu0 0.0
    %176 = vmatprep.subr.mxu0 0.0
    %177 = vmatpush1.msra.mxu0 0.0
    %178 = vmatprep.subr.mxu0 0.0
    %179 = vmatpush1.msra.mxu0 0.0
    %180 = vmatprep.subr.mxu0 0.0
    %181 = vmatpush1.msra.mxu0 0.0
    %182 = vmatprep.subr.mxu0 0.0
    %183 = vmatpush1.msra.mxu0 0.0
    %184 = vmatprep.subr.mxu0 0.0
    %185 = vmatpush1.msra.mxu0 0.0
    %186 = vmatprep.subr.mxu0 0.0
    %187 = vmatpush1.msra.mxu0 0.0
    %188 = vmatprep.subr.mxu0 0.0
    %189 = vmatpush1.msra.mxu0 0.0
    %190 = vmatprep.subr.mxu0 0.0
    %191 = vmatpush1.msra.mxu0 0.0
    %192 = vmatprep.subr.mxu0 0.0
    %193 = vmatpush1.msra.mxu0 0.0
    %194 = vmatprep.subr.mxu0 0.0
    %195 = vmatpush1.msra.mxu0 0.0
    %196 = vmatprep.subr.mxu0 0.0
    %197 = vmatpush1.msra.mxu0 0.0
    %198 = vmatprep.subr.mxu0 0.0
    %199 = vmatpush1.msra.mxu0 0.0
    %200 = vmatprep.subr.mxu0 0.0
    %201 = vmatpush1.msra.mxu0 0.0
    %202 = vmatprep.subr.mxu0 0.0
    %203 = vmatpush1.msra.mxu0 0.0
    %204 = vmatprep.subr.mxu0 0.0
    %205 = vmatpush1.msra.mxu0 0.0
    %206 = vmatprep.subr.mxu0 0.0
    %207 = vmatpush1.msra.mxu0 0.0
    %208 = vmatprep.subr.mxu0 0.0
    %209 = vmatpush1.msra.mxu0 0.0
    %210 = vmatprep.subr.mxu0 0.0
    %211 = vmatpush1.msra.mxu0 0.0
    %212 = vmatprep.subr.mxu0 0.0
    %213 = vmatpush1.msra.mxu0 0.0
    %214 = vmatprep.subr.mxu0 0.0
    %215 = vmatpush1.msra.mxu0 0.0
    %216 = vmatprep.subr.mxu0 0.0
    %217 = vmatpush1.msra.mxu0 0.0
    %218 = vmatprep.subr.mxu0 0.0
    %219 = vmatpush1.msra.mxu0 0.0
    %220 = vmatprep.subr.mxu0 0.0
    %221 = vmatpush1.msra.mxu0 0.0
    %222 = vmatprep.subr.mxu0 0.0
    %223 = vmatpush1.msra.mxu0 0.0
    %224 = vmatprep.subr.mxu0 0.0
    %225 = vmatpush1.msra.mxu0 0.0
    %226 = vmatprep.subr.mxu0 0.0
    %227 = vmatpush1.msra.mxu0 0.0
    %228 = vmatprep.subr.mxu0 0.0
    %229 = vmatpush1.msra.mxu0 0.0
    %230 = vmatprep.mubr.f32.mxu0 0.0
    %231 = vmatmul.mubr.f32.gmra.mrb[0].mxu0 %v143
    %v232 = vpop.f32.mrb[0].mxu0
    %v233 = vadd.f32 %v134, %v232
    %v234 = vpop.f32.mrb[0].mxu0
    %v235 = vadd.f32 %v138, %v234
    %236 = vmatprep.mubr.f32.mxu0 0.0
    %237 = vmatmul.mubr.f32.gmra.mrb[0].mxu0 %v146
    %v238 = vpop.f32.mrb[0].mxu0
    %v239 = vadd.f32 %v134, %v238
    %v240 = vpop.f32.mrb[0].mxu0
    %v241 = vadd.f32 %v138, %v240
    %242 = vmatprep.mubr.f32.mxu0 0.0
    %243 = vmatmul.mubr.f32.gmra.mrb[0].mxu0 %v149
    %v244 = vpop.f32.mrb[0].mxu0
    %v245 = vadd.f32 %v134, %v244
    %v246 = vpop.f32.mrb[0].mxu0
    %v247 = vadd.f32 %v138, %v246
    %248 = vmatprep.mubr.f32.mxu0 0.0
    %249 = vmatmul.mubr.f32.gmra.mrb[0].mxu0 %v152
    %v250 = vpop.f32.mrb[0].mxu0
    %v251 = vadd.f32 %v134, %v250
    %v252 = vpop.f32.mrb[0].mxu0
    %v253 = vadd.f32 %v138, %v252
    %254 = vmatprep.mubr.f32.mxu0 0.0
    %255 = vmatmul.mubr.f32.gmra.mrb[0].mxu0 %v155
    %v256 = vpop.f32.mrb[0].mxu0
    %v257 = vadd.f32 %v134, %v256
    %v258 = vpop.f32.mrb[0].mxu0
    %v259 = vadd.f32 %v138, %v258
    %260 = vmatprep.mubr.f32.mxu0 0.0
    %261 = vmatmul.mubr.f32.gmra.mrb[0].mxu0 %v158
    %v262 = vpop.f32.mrb[0].mxu0
    %v263 = vadd.f32 %v134, %v262
    %v264 = vpop.f32.mrb[0].mxu0
    %v265 = vadd.f32 %v138, %v264
    %266 = vmatprep.mubr.f32.mxu0 0.0
    %267 = vmatmul.mubr.f32.gmra.mrb[0].mxu0 %v161
    %v268 = vpop.f32.mrb[0].mxu0
    %v269 = vadd.f32 %v134, %v268
    %v270 = vpop.f32.mrb[0].mxu0
    %v271 = vadd.f32 %v138, %v270
    %272 = vmatprep.mubr.f32.mxu0 0.0
    %273 = vmatmul.mubr.f32.gmra.mrb[0].mxu0 %v164
    %v274 = vpop.f32.mrb[0].mxu0
    %v275 = vadd.f32 %v134, %v274
    %v276 = vpop.f32.mrb[0].mxu0
    %v277 = vadd.f32 %v138, %v276
    %278 = vdwg.mxu0
    %279 = vst [vmem:[#allocation2] sm:$0xff] %v233
    %vm280 = vcmask 130048
    %281 = vst.msk [vmem:[#allocation2 + $0x8] sm:$0xff] %vm280, %v235
    %282 = vst [vmem:[#allocation2 + $0x10] sm:$0xff] %v239
    %283 = vst.msk [vmem:[#allocation2 + $0x18] sm:$0xff] %vm280, %v241
    %284 = vst [vmem:[#allocation2 + $0x20] sm:$0xff] %v245
    %285 = vst.msk [vmem:[#allocation2 + $0x28] sm:$0xff] %vm280, %v247
    %286 = vst [vmem:[#allocation2 + $0x30] sm:$0xff] %v251
    %287 = vst.msk [vmem:[#allocation2 + $0x38] sm:$0xff] %vm280, %v253
    %288 = vst [vmem:[#allocation2 + $0x40] sm:$0xff] %v257
    %289 = vst.msk [vmem:[#allocation2 + $0x48] sm:$0xff] %vm280, %v259
    %290 = vst [vmem:[#allocation2 + $0x50] sm:$0xff] %v263
    %291 = vst.msk [vmem:[#allocation2 + $0x58] sm:$0xff] %vm280, %v265
    %292 = vst [vmem:[#allocation2 + $0x60] sm:$0xff] %v269
    %293 = vst.msk [vmem:[#allocation2 + $0x68] sm:$0xff] %vm280, %v271
    %294 = vst [vmem:[#allocation2 + $0x70] sm:$0xff] %v275
    %295 = vst.msk [vmem:[#allocation2 + $0x78] sm:$0xff] %vm280, %v277
    %v296 = vld [vmem:[#allocation7] sm:$0xff]
    %v297 = vld [vmem:[#allocation7 + $0x8] sm:$0xff]
    %v298 = vld [vmem:[#allocation7 + $0x10] sm:$0xff]
    %v299 = vld [vmem:[#allocation7 + $0x18] sm:$0xff]
    %v300 = vld [vmem:[#allocation7 + $0x20] sm:$0xff]
    %v301 = vld [vmem:[#allocation7 + $0x28] sm:$0xff]
    %v302 = vld [vmem:[#allocation7 + $0x30] sm:$0xff]
    %v303 = vld [vmem:[#allocation7 + $0x38] sm:$0xff]
    %v304 = vld [vmem:[%s4] sm:$0x3]
    %v306 = vlaneseq
    %v307 = vshrl.u32 %v306, 7
    %v308 = vsub.s32 0, %v307
    %v309 = vrot.slane %v304, %v308
    %v310 = vlaneseq
    %v311 = vshrl.u32 %v310, 7
    %v312 = vsub.s32 1, %v311
    %v313 = vrot.slane %v304, %v312
    %316 = vmatprep.subr.mxu0 %v297
    %317 = vmatpush1.msra.mxu0 %v296
    %318 = vmatprep.subr.mxu0 %v299
    %319 = vmatpush1.msra.mxu0 %v298
    %320 = vmatprep.subr.mxu0 %v301
    %321 = vmatpush1.msra.mxu0 %v300
    %322 = vmatprep.subr.mxu0 %v303
    %323 = vmatpush1.msra.mxu0 %v302
    %324 = vmatprep.subr.mxu0 0.0
    %325 = vmatpush1.msra.mxu0 0.0
    %326 = vmatprep.subr.mxu0 0.0
    %327 = vmatpush1.msra.mxu0 0.0
    %328 = vmatprep.subr.mxu0 0.0
    %329 = vmatpush1.msra.mxu0 0.0
    %330 = vmatprep.subr.mxu0 0.0
    %331 = vmatpush1.msra.mxu0 0.0
    %332 = vmatprep.subr.mxu0 0.0
    %333 = vmatpush1.msra.mxu0 0.0
    %334 = vmatprep.subr.mxu0 0.0
    %335 = vmatpush1.msra.mxu0 0.0
    %336 = vmatprep.subr.mxu0 0.0
    %337 = vmatpush1.msra.mxu0 0.0
    %338 = vmatprep.subr.mxu0 0.0
    %339 = vmatpush1.msra.mxu0 0.0
    %340 = vmatprep.subr.mxu0 0.0
    %341 = vmatpush1.msra.mxu0 0.0
    %342 = vmatprep.subr.mxu0 0.0
    %343 = vmatpush1.msra.mxu0 0.0
    %344 = vmatprep.subr.mxu0 0.0
    %345 = vmatpush1.msra.mxu0 0.0
    %346 = vmatprep.subr.mxu0 0.0
    %347 = vmatpush1.msra.mxu0 0.0
    %348 = vmatprep.subr.mxu0 0.0
    %349 = vmatpush1.msra.mxu0 0.0
    %350 = vmatprep.subr.mxu0 0.0
    %351 = vmatpush1.msra.mxu0 0.0
    %352 = vmatprep.subr.mxu0 0.0
    %353 = vmatpush1.msra.mxu0 0.0
    %354 = vmatprep.subr.mxu0 0.0
    %355 = vmatpush1.msra.mxu0 0.0
    %356 = vmatprep.subr.mxu0 0.0
    %357 = vmatpush1.msra.mxu0 0.0
    %358 = vmatprep.subr.mxu0 0.0
    %359 = vmatpush1.msra.mxu0 0.0
    %360 = vmatprep.subr.mxu0 0.0
    %361 = vmatpush1.msra.mxu0 0.0
    %362 = vmatprep.subr.mxu0 0.0
    %363 = vmatpush1.msra.mxu0 0.0
    %364 = vmatprep.subr.mxu0 0.0
    %365 = vmatpush1.msra.mxu0 0.0
    %366 = vmatprep.subr.mxu0 0.0
    %367 = vmatpush1.msra.mxu0 0.0
    %368 = vmatprep.subr.mxu0 0.0
    %369 = vmatpush1.msra.mxu0 0.0
    %370 = vmatprep.subr.mxu0 0.0
    %371 = vmatpush1.msra.mxu0 0.0
    %372 = vmatprep.subr.mxu0 0.0
    %373 = vmatpush1.msra.mxu0 0.0
    %374 = vmatprep.subr.mxu0 0.0
    %375 = vmatpush1.msra.mxu0 0.0
    %376 = vmatprep.subr.mxu0 0.0
    %377 = vmatpush1.msra.mxu0 0.0
    %378 = vmatprep.subr.mxu0 0.0
    %379 = vmatpush1.msra.mxu0 0.0
    %380 = vmatprep.mubr.f32.mxu0 0.0
    %381 = vmatmul.mubr.f32.gmra.mrb[0].mxu0 %v143
    %v382 = vpop.f32.mrb[0].mxu0
    %v383 = vadd.f32 %v309, %v382
    %v384 = vpop.f32.mrb[0].mxu0
    %v385 = vadd.f32 %v313, %v384
    %386 = vmatprep.mubr.f32.mxu0 0.0
    %387 = vmatmul.mubr.f32.gmra.mrb[0].mxu0 %v146
    %v388 = vpop.f32.mrb[0].mxu0
    %v389 = vadd.f32 %v309, %v388
    %v390 = vpop.f32.mrb[0].mxu0
    %v391 = vadd.f32 %v313, %v390
    %392 = vmatprep.mubr.f32.mxu0 0.0
    %393 = vmatmul.mubr.f32.gmra.mrb[0].mxu0 %v149
    %v394 = vpop.f32.mrb[0].mxu0
    %v395 = vadd.f32 %v309, %v394
    %v396 = vpop.f32.mrb[0].mxu0
    %v397 = vadd.f32 %v313, %v396
    %398 = vmatprep.mubr.f32.mxu0 0.0
    %399 = vmatmul.mubr.f32.gmra.mrb[0].mxu0 %v152
    %v400 = vpop.f32.mrb[0].mxu0
    %v401 = vadd.f32 %v309, %v400
    %v402 = vpop.f32.mrb[0].mxu0
    %v403 = vadd.f32 %v313, %v402
    %404 = vmatprep.mubr.f32.mxu0 0.0
    %405 = vmatmul.mubr.f32.gmra.mrb[0].mxu0 %v155
    %v406 = vpop.f32.mrb[0].mxu0
    %v407 = vadd.f32 %v309, %v406
    %v408 = vpop.f32.mrb[0].mxu0
    %v409 = vadd.f32 %v313, %v408
    %410 = vmatprep.mubr.f32.mxu0 0.0
    %411 = vmatmul.mubr.f32.gmra.mrb[0].mxu0 %v158
    %v412 = vpop.f32.mrb[0].mxu0
    %v413 = vadd.f32 %v309, %v412
    %v414 = vpop.f32.mrb[0].mxu0
    %v415 = vadd.f32 %v313, %v414
    %416 = vmatprep.mubr.f32.mxu0 0.0
    %417 = vmatmul.mubr.f32.gmra.mrb[0].mxu0 %v161
    %v418 = vpop.f32.mrb[0].mxu0
    %v419 = vadd.f32 %v309, %v418
    %v420 = vpop.f32.mrb[0].mxu0
    %v421 = vadd.f32 %v313, %v420
    %422 = vmatprep.mubr.f32.mxu0 0.0
    %423 = vmatmul.mubr.f32.gmra.mrb[0].mxu0 %v164
    %v424 = vpop.f32.mrb[0].mxu0
    %v425 = vadd.f32 %v309, %v424
    %v426 = vpop.f32.mrb[0].mxu0
    %v427 = vadd.f32 %v313, %v426
    %428 = vdwg.mxu0
    %429 = vst [vmem:[#allocation3] sm:$0xff] %v383
    %430 = vst.msk [vmem:[#allocation3 + $0x8] sm:$0xff] %vm280, %v385
    %431 = vst [vmem:[#allocation3 + $0x10] sm:$0xff] %v389
    %432 = vst.msk [vmem:[#allocation3 + $0x18] sm:$0xff] %vm280, %v391
    %433 = vst [vmem:[#allocation3 + $0x20] sm:$0xff] %v395
    %434 = vst.msk [vmem:[#allocation3 + $0x28] sm:$0xff] %vm280, %v397
    %435 = vst [vmem:[#allocation3 + $0x30] sm:$0xff] %v401
    %436 = vst.msk [vmem:[#allocation3 + $0x38] sm:$0xff] %vm280, %v403
    %437 = vst [vmem:[#allocation3 + $0x40] sm:$0xff] %v407
    %438 = vst.msk [vmem:[#allocation3 + $0x48] sm:$0xff] %vm280, %v409
    %439 = vst [vmem:[#allocation3 + $0x50] sm:$0xff] %v413
    %440 = vst.msk [vmem:[#allocation3 + $0x58] sm:$0xff] %vm280, %v415
    %441 = vst [vmem:[#allocation3 + $0x60] sm:$0xff] %v419
    %442 = vst.msk [vmem:[#allocation3 + $0x68] sm:$0xff] %vm280, %v421
    %443 = vst [vmem:[#allocation3 + $0x70] sm:$0xff] %v425
    %444 = vst.msk [vmem:[#allocation3 + $0x78] sm:$0xff] %vm280, %v427
    %v445 = vld [vmem:[%s5] sm:$0xff]
    %v446 = vld [vmem:[%s5 + $0x8] sm:$0xff]
    %v447 = vld [vmem:[%s5 + $0x10] sm:$0xff]
    %v448 = vld [vmem:[%s5 + $0x18] sm:$0xff]
    %v449 = vld [vmem:[%s5 + $0x20] sm:$0xff]
    %v450 = vld [vmem:[%s5 + $0x28] sm:$0xff]
    %v451 = vld [vmem:[%s5 + $0x30] sm:$0xff]
    %v452 = vld [vmem:[%s5 + $0x38] sm:$0xff]
    %v453 = vld [vmem:[%s5 + $0x40] sm:$0xff]
    %v454 = vld [vmem:[%s5 + $0x48] sm:$0xff]
    %v455 = vld [vmem:[%s5 + $0x50] sm:$0xff]
    %v456 = vld [vmem:[%s5 + $0x58] sm:$0xff]
    %v457 = vld [vmem:[#allocation9] sm:$0xff]
    %v458 = vld [vmem:[#allocation9 + $0x8] sm:$0xff]
    %v459 = vld [vmem:[#allocation9 + $0x10] sm:$0xff]
    %v460 = vld [vmem:[#allocation9 + $0x18] sm:$0xff]
    %v461 = vld [vmem:[#allocation9 + $0x20] sm:$0xff]
    %v462 = vld [vmem:[#allocation9 + $0x28] sm:$0xff]
    %v463 = vld [vmem:[#allocation9 + $0x30] sm:$0xff]
    %v464 = vld [vmem:[#allocation9 + $0x38] sm:$0xff]
    %v465 = vld [vmem:[#allocation9 + $0x40] sm:$0xff]
    %v466 = vld [vmem:[#allocation9 + $0x48] sm:$0xff]
    %v467 = vld [vmem:[#allocation9 + $0x50] sm:$0xff]
    %v468 = vld [vmem:[#allocation9 + $0x58] sm:$0xff]
    %v469 = vld [vmem:[%s7] sm:$0x1]
    %v471 = vlaneseq
    %v472 = vshrl.u32 %v471, 7
    %v473 = vsub.s32 0, %v472
    %v474 = vrot.slane %v469, %v473
    %v475 = vld [vmem:[%s8] sm:$0x1]
    %v477 = vlaneseq
    %v478 = vshrl.u32 %v477, 7
    %v479 = vsub.s32 0, %v478
    %v480 = vrot.slane %v475, %v479
    %v481 = vld [vmem:[#allocation2] sm:$0xff]
    %v482 = vld [vmem:[#allocation2 + $0x8] sm:$0xff]
    %v483 = vld [vmem:[#allocation3 + $0x70] sm:$0xff]
    %v484 = vld [vmem:[#allocation3 + $0x78] sm:$0xff]
    %vm485 = vcmask 392192
    %v487 = vsel %vm485, 0.0, 0
    %489 = vmatprep.subr.mxu0 %v446
    %490 = vmatpush1.msra.mxu0 %v445
    %491 = vmatprep.subr.mxu0 %v448
    %492 = vmatpush1.msra.mxu0 %v447
    %493 = vmatprep.subr.mxu0 %v450
    %494 = vmatpush1.msra.mxu0 %v449
    %495 = vmatprep.subr.mxu0 %v452
    %496 = vmatpush1.msra.mxu0 %v451
    %497 = vmatprep.subr.mxu0 %v454
    %498 = vmatpush1.msra.mxu0 %v453
    %499 = vmatprep.subr.mxu0 %v456
    %500 = vmatpush1.msra.mxu0 %v455
    %501 = vmatprep.subr.mxu0 0.0
    %502 = vmatpush1.msra.mxu0 0.0
    %503 = vmatprep.subr.mxu0 0.0
    %504 = vmatpush1.msra.mxu0 0.0
    %505 = vmatprep.subr.mxu0 0.0
    %506 = vmatpush1.msra.mxu0 0.0
    %507 = vmatprep.subr.mxu0 0.0
    %508 = vmatpush1.msra.mxu0 0.0
    %509 = vmatprep.subr.mxu0 0.0
    %510 = vmatpush1.msra.mxu0 0.0
    %511 = vmatprep.subr.mxu0 0.0
    %512 = vmatpush1.msra.mxu0 0.0
    %513 = vmatprep.subr.mxu0 0.0
    %514 = vmatpush1.msra.mxu0 0.0
    %515 = vmatprep.subr.mxu0 0.0
    %516 = vmatpush1.msra.mxu0 0.0
    %517 = vmatprep.subr.mxu0 0.0
    %518 = vmatpush1.msra.mxu0 0.0
    %519 = vmatprep.subr.mxu0 0.0
    %520 = vmatpush1.msra.mxu0 0.0
    %521 = vmatprep.subr.mxu0 0.0
    %522 = vmatpush1.msra.mxu0 0.0
    %523 = vmatprep.subr.mxu0 0.0
    %524 = vmatpush1.msra.mxu0 0.0
    %525 = vmatprep.subr.mxu0 0.0
    %526 = vmatpush1.msra.mxu0 0.0
    %527 = vmatprep.subr.mxu0 0.0
    %528 = vmatpush1.msra.mxu0 0.0
    %529 = vmatprep.subr.mxu0 0.0
    %530 = vmatpush1.msra.mxu0 0.0
    %531 = vmatprep.subr.mxu0 0.0
    %532 = vmatpush1.msra.mxu0 0.0
    %533 = vmatprep.subr.mxu0 0.0
    %534 = vmatpush1.msra.mxu0 0.0
    %535 = vmatprep.subr.mxu0 0.0
    %536 = vmatpush1.msra.mxu0 0.0
    %537 = vmatprep.subr.mxu0 0.0
    %538 = vmatpush1.msra.mxu0 0.0
    %539 = vmatprep.subr.mxu0 0.0
    %540 = vmatpush1.msra.mxu0 0.0
    %541 = vmatprep.subr.mxu0 0.0
    %542 = vmatpush1.msra.mxu0 0.0
    %543 = vmatprep.subr.mxu0 0.0
    %544 = vmatpush1.msra.mxu0 0.0
    %545 = vmatprep.subr.mxu0 0.0
    %546 = vmatpush1.msra.mxu0 0.0
    %547 = vmatprep.subr.mxu0 0.0
    %548 = vmatpush1.msra.mxu0 0.0
    %549 = vmatprep.subr.mxu0 0.0
    %550 = vmatpush1.msra.mxu0 0.0
    %551 = vmatprep.subr.mxu0 0.0
    %552 = vmatpush1.msra.mxu0 0.0
    %553 = vmatprep.mubr.f32.mxu0 0.0
    %554 = vmatmul.mubr.f32.gmra.mrb[0].mxu0 %v487
    %v555 = vpop.f32.mrb[0].mxu0
    %v556 = vadd.f32 0.0, %v555
    %v557 = vpop.f32.mrb[0].mxu0
    %v558 = vadd.f32 0.0, %v557
    %559 = vdwg.mxu0
    %560 = vmatprep.subr.mxu0 %v458
    %561 = vmatpush1.msra.mxu0 %v457
    %562 = vmatprep.subr.mxu0 %v460
    %563 = vmatpush1.msra.mxu0 %v459
    %564 = vmatprep.subr.mxu0 %v462
    %565 = vmatpush1.msra.mxu0 %v461
    %566 = vmatprep.subr.mxu0 %v464
    %567 = vmatpush1.msra.mxu0 %v463
    %568 = vmatprep.subr.mxu0 %v466
    %569 = vmatpush1.msra.mxu0 %v465
    %570 = vmatprep.subr.mxu0 %v468
    %571 = vmatpush1.msra.mxu0 %v467
    %572 = vmatprep.subr.mxu0 0.0
    %573 = vmatpush1.msra.mxu0 0.0
    %574 = vmatprep.subr.mxu0 0.0
    %575 = vmatpush1.msra.mxu0 0.0
    %576 = vmatprep.subr.mxu0 0.0
    %577 = vmatpush1.msra.mxu0 0.0
    %578 = vmatprep.subr.mxu0 0.0
    %579 = vmatpush1.msra.mxu0 0.0
    %580 = vmatprep.subr.mxu0 0.0
    %581 = vmatpush1.msra.mxu0 0.0
    %582 = vmatprep.subr.mxu0 0.0
    %583 = vmatpush1.msra.mxu0 0.0
    %584 = vmatprep.subr.mxu0 0.0
    %585 = vmatpush1.msra.mxu0 0.0
    %586 = vmatprep.subr.mxu0 0.0
    %587 = vmatpush1.msra.mxu0 0.0
    %588 = vmatprep.subr.mxu0 0.0
    %589 = vmatpush1.msra.mxu0 0.0
    %590 = vmatprep.subr.mxu0 0.0
    %591 = vmatpush1.msra.mxu0 0.0
    %592 = vmatprep.subr.mxu0 0.0
    %593 = vmatpush1.msra.mxu0 0.0
    %594 = vmatprep.subr.mxu0 0.0
    %595 = vmatpush1.msra.mxu0 0.0
    %596 = vmatprep.subr.mxu0 0.0
    %597 = vmatpush1.msra.mxu0 0.0
    %598 = vmatprep.subr.mxu0 0.0
    %599 = vmatpush1.msra.mxu0 0.0
    %600 = vmatprep.subr.mxu0 0.0
    %601 = vmatpush1.msra.mxu0 0.0
    %602 = vmatprep.subr.mxu0 0.0
    %603 = vmatpush1.msra.mxu0 0.0
    %604 = vmatprep.subr.mxu0 0.0
    %605 = vmatpush1.msra.mxu0 0.0
    %606 = vmatprep.subr.mxu0 0.0
    %607 = vmatpush1.msra.mxu0 0.0
    %608 = vmatprep.subr.mxu0 0.0
    %609 = vmatpush1.msra.mxu0 0.0
    %610 = vmatprep.subr.mxu0 0.0
    %611 = vmatpush1.msra.mxu0 0.0
    %612 = vmatprep.subr.mxu0 0.0
    %613 = vmatpush1.msra.mxu0 0.0
    %614 = vmatprep.subr.mxu0 0.0
    %615 = vmatpush1.msra.mxu0 0.0
    %616 = vmatprep.subr.mxu0 0.0
    %617 = vmatpush1.msra.mxu0 0.0
    %618 = vmatprep.subr.mxu0 0.0
    %619 = vmatpush1.msra.mxu0 0.0
    %620 = vmatprep.subr.mxu0 0.0
    %621 = vmatpush1.msra.mxu0 0.0
    %622 = vmatprep.subr.mxu0 0.0
    %623 = vmatpush1.msra.mxu0 0.0
    %624 = vmatprep.mubr.f32.mxu0 0.0
    %625 = vmatmul.mubr.f32.gmra.mrb[0].mxu0 %v487
    %v626 = vpop.f32.mrb[0].mxu0
    %v627 = vadd.f32 0.0, %v626
    %v628 = vpop.f32.mrb[0].mxu0
    %v629 = vadd.f32 0.0, %v628
    %630 = vdwg.mxu0
    %v631 = vadd.f32 %v481, %v556
    %v632 = vxor.u32 %v631, 2147483648
    %v633 = vmul.f32 %v632, 1.442695
    %v634 = vpow.pop %v633
    %v635 = vadd.f32 %v634, 1.0
    %v636 = vrcp.pop %v635
    %v637 = vmul.f32 1.0, %v636
    %638 = vrot.lane.b32.xlu0 %v474, 96
    %v639 = vpop.permute.xlu0 %638
    %v641 = vadd.f32 %v556, %v639
    %v642 = vadd.f32 %v558, %v639
    %645 = vrot.lane.b32.xlu0 %v641, 32
    %v646 = vpop.permute.xlu0 %645
    %647 = vrot.lane.b32.xlu0 %v642, 32
    %v648 = vpop.permute.xlu0 %647
    %v649 = vsel %vm141, %v646, %v648
    %v651 = vmul.f32 %v637, %v649
    %653 = vrot.lane.b32.xlu0 %v651, 96
    %v654 = vpop.permute.xlu0 %653
    %v656 = vadd.f32 %v481, %v654
    %v657 = vadd.f32 %v482, %v654
    %v658 = vtanh.pop %v656
    %v659 = vtanh.pop %v657
    %v660 = vsub.f32 1.0, %v637
    %663 = vrot.lane.b32.xlu0 %v658, 80
    %v664 = vpop.permute.xlu0 %663
    %665 = vrot.lane.b32.xlu0 %v659, 80
    %v666 = vpop.permute.xlu0 %665
    %vm667 = vcmask 654336
    %v668 = vsel %vm667, %v664, %v666
    %v670 = vmul.f32 %v660, %v668
    %v671 = vmul.f32 %v637, 0.0
    %v672 = vadd.f32 %v670, %v671
    %v673 = vadd.f32 %v483, %v627
    %v674 = vxor.u32 %v673, 2147483648
    %v675 = vmul.f32 %v674, 1.442695
    %v676 = vpow.pop %v675
    %v677 = vadd.f32 %v676, 1.0
    %v678 = vrcp.pop %v677
    %v679 = vmul.f32 1.0, %v678
    %680 = vrot.lane.b32.xlu0 %v480, 96
    %v681 = vpop.permute.xlu0 %680
    %v683 = vadd.f32 %v627, %v681
    %v684 = vadd.f32 %v629, %v681
    %687 = vrot.lane.b32.xlu0 %v683, 32
    %v688 = vpop.permute.xlu0 %687
    %689 = vrot.lane.b32.xlu0 %v684, 32
    %v690 = vpop.permute.xlu0 %689
    %v691 = vsel %vm141, %v688, %v690
    %v693 = vmul.f32 %v679, %v691
    %695 = vrot.lane.b32.xlu0 %v693, 96
    %v696 = vpop.permute.xlu0 %695
    %v698 = vadd.f32 %v483, %v696
    %v699 = vadd.f32 %v484, %v696
    %v700 = vtanh.pop %v698
    %v701 = vtanh.pop %v699
    %v702 = vsub.f32 1.0, %v679
    %705 = vrot.lane.b32.xlu0 %v700, 80
    %v706 = vpop.permute.xlu0 %705
    %707 = vrot.lane.b32.xlu0 %v701, 80
    %v708 = vpop.permute.xlu0 %707
    %v709 = vsel %vm667, %v706, %v708
    %v711 = vmul.f32 %v702, %v709
    %v712 = vmul.f32 %v679, 0.0
    %v713 = vadd.f32 %v711, %v712
    %v714 = vld [vmem:[#allocation2 + $0x10] sm:$0xff]
    %v715 = vld [vmem:[#allocation2 + $0x18] sm:$0xff]
    %v716 = vld [vmem:[#allocation3 + $0x60] sm:$0xff]
    %v717 = vld [vmem:[#allocation3 + $0x68] sm:$0xff]
    %719 = vrot.lane.b32.xlu0 %v672, 80
    %v720 = vpop.permute.xlu0 %719
    %v721 = vsel %vm485, %v720, 0
    %723 = vmatprep.subr.mxu0 %v446
    %724 = vmatpush1.msra.mxu0 %v445
    %725 = vmatprep.subr.mxu0 %v448
    %726 = vmatpush1.msra.mxu0 %v447
    %727 = vmatprep.subr.mxu0 %v450
    %728 = vmatpush1.msra.mxu0 %v449
    %729 = vmatprep.subr.mxu0 %v452
    %730 = vmatpush1.msra.mxu0 %v451
    %731 = vmatprep.subr.mxu0 %v454
    %732 = vmatpush1.msra.mxu0 %v453
    %733 = vmatprep.subr.mxu0 %v456
    %734 = vmatpush1.msra.mxu0 %v455
    %735 = vmatprep.subr.mxu0 0.0
    %736 = vmatpush1.msra.mxu0 0.0
    %737 = vmatprep.subr.mxu0 0.0
    %738 = vmatpush1.msra.mxu0 0.0
    %739 = vmatprep.subr.mxu0 0.0
    %740 = vmatpush1.msra.mxu0 0.0
    %741 = vmatprep.subr.mxu0 0.0
    %742 = vmatpush1.msra.mxu0 0.0
    %743 = vmatprep.subr.mxu0 0.0
    %744 = vmatpush1.msra.mxu0 0.0
    %745 = vmatprep.subr.mxu0 0.0
    %746 = vmatpush1.msra.mxu0 0.0
    %747 = vmatprep.subr.mxu0 0.0
    %748 = vmatpush1.msra.mxu0 0.0
    %749 = vmatprep.subr.mxu0 0.0
    %750 = vmatpush1.msra.mxu0 0.0
    %751 = vmatprep.subr.mxu0 0.0
    %752 = vmatpush1.msra.mxu0 0.0
    %753 = vmatprep.subr.mxu0 0.0
    %754 = vmatpush1.msra.mxu0 0.0
    %755 = vmatprep.subr.mxu0 0.0
    %756 = vmatpush1.msra.mxu0 0.0
    %757 = vmatprep.subr.mxu0 0.0
    %758 = vmatpush1.msra.mxu0 0.0
    %759 = vmatprep.subr.mxu0 0.0
    %760 = vmatpush1.msra.mxu0 0.0
    %761 = vmatprep.subr.mxu0 0.0
    %762 = vmatpush1.msra.mxu0 0.0
    %763 = vmatprep.subr.mxu0 0.0
    %764 = vmatpush1.msra.mxu0 0.0
    %765 = vmatprep.subr.mxu0 0.0
    %766 = vmatpush1.msra.mxu0 0.0
    %767 = vmatprep.subr.mxu0 0.0
    %768 = vmatpush1.msra.mxu0 0.0
    %769 = vmatprep.subr.mxu0 0.0
    %770 = vmatpush1.msra.mxu0 0.0
    %771 = vmatprep.subr.mxu0 0.0
    %772 = vmatpush1.msra.mxu0 0.0
    %773 = vmatprep.subr.mxu0 0.0
    %774 = vmatpush1.msra.mxu0 0.0
    %775 = vmatprep.subr.mxu0 0.0
    %776 = vmatpush1.msra.mxu0 0.0
    %777 = vmatprep.subr.mxu0 0.0
    %778 = vmatpush1.msra.mxu0 0.0
    %779 = vmatprep.subr.mxu0 0.0
    %780 = vmatpush1.msra.mxu0 0.0
    %781 = vmatprep.subr.mxu0 0.0
    %782 = vmatpush1.msra.mxu0 0.0
    %783 = vmatprep.subr.mxu0 0.0
    %784 = vmatpush1.msra.mxu0 0.0
    %785 = vmatprep.subr.mxu0 0.0
    %786 = vmatpush1.msra.mxu0 0.0
    %787 = vmatprep.mubr.f32.mxu0 0.0
    %788 = vmatmul.mubr.f32.gmra.mrb[0].mxu0 %v721
    %v789 = vpop.f32.mrb[0].mxu0
    %v790 = vadd.f32 0.0, %v789
    %v791 = vpop.f32.mrb[0].mxu0
    %v792 = vadd.f32 0.0, %v791
    %793 = vdwg.mxu0
    %795 = vrot.lane.b32.xlu0 %v713, 80
    %v796 = vpop.permute.xlu0 %795
    %v797 = vsel %vm485, %v796, 0
    %799 = vmatprep.subr.mxu0 %v458
    %800 = vmatpush1.msra.mxu0 %v457
    %801 = vmatprep.subr.mxu0 %v460
    %802 = vmatpush1.msra.mxu0 %v459
    %803 = vmatprep.subr.mxu0 %v462
    %804 = vmatpush1.msra.mxu0 %v461
    %805 = vmatprep.subr.mxu0 %v464
    %806 = vmatpush1.msra.mxu0 %v463
    %807 = vmatprep.subr.mxu0 %v466
    %808 = vmatpush1.msra.mxu0 %v465
    %809 = vmatprep.subr.mxu0 %v468
    %810 = vmatpush1.msra.mxu0 %v467
    %811 = vmatprep.subr.mxu0 0.0
    %812 = vmatpush1.msra.mxu0 0.0
    %813 = vmatprep.subr.mxu0 0.0
    %814 = vmatpush1.msra.mxu0 0.0
    %815 = vmatprep.subr.mxu0 0.0
    %816 = vmatpush1.msra.mxu0 0.0
    %817 = vmatprep.subr.mxu0 0.0
    %818 = vmatpush1.msra.mxu0 0.0
    %819 = vmatprep.subr.mxu0 0.0
    %820 = vmatpush1.msra.mxu0 0.0
    %821 = vmatprep.subr.mxu0 0.0
    %822 = vmatpush1.msra.mxu0 0.0
    %823 = vmatprep.subr.mxu0 0.0
    %824 = vmatpush1.msra.mxu0 0.0
    %825 = vmatprep.subr.mxu0 0.0
    %826 = vmatpush1.msra.mxu0 0.0
    %827 = vmatprep.subr.mxu0 0.0
    %828 = vmatpush1.msra.mxu0 0.0
    %829 = vmatprep.subr.mxu0 0.0
    %830 = vmatpush1.msra.mxu0 0.0
    %831 = vmatprep.subr.mxu0 0.0
    %832 = vmatpush1.msra.mxu0 0.0
    %833 = vmatprep.subr.mxu0 0.0
    %834 = vmatpush1.msra.mxu0 0.0
    %835 = vmatprep.subr.mxu0 0.0
    %836 = vmatpush1.msra.mxu0 0.0
    %837 = vmatprep.subr.mxu0 0.0
    %838 = vmatpush1.msra.mxu0 0.0
    %839 = vmatprep.subr.mxu0 0.0
    %840 = vmatpush1.msra.mxu0 0.0
    %841 = vmatprep.subr.mxu0 0.0
    %842 = vmatpush1.msra.mxu0 0.0
    %843 = vmatprep.subr.mxu0 0.0
    %844 = vmatpush1.msra.mxu0 0.0
    %845 = vmatprep.subr.mxu0 0.0
    %846 = vmatpush1.msra.mxu0 0.0
    %847 = vmatprep.subr.mxu0 0.0
    %848 = vmatpush1.msra.mxu0 0.0
    %849 = vmatprep.subr.mxu0 0.0
    %850 = vmatpush1.msra.mxu0 0.0
    %851 = vmatprep.subr.mxu0 0.0
    %852 = vmatpush1.msra.mxu0 0.0
    %853 = vmatprep.subr.mxu0 0.0
    %854 = vmatpush1.msra.mxu0 0.0
    %855 = vmatprep.subr.mxu0 0.0
    %856 = vmatpush1.msra.mxu0 0.0
    %857 = vmatprep.subr.mxu0 0.0
    %858 = vmatpush1.msra.mxu0 0.0
    %859 = vmatprep.subr.mxu0 0.0
    %860 = vmatpush1.msra.mxu0 0.0
    %861 = vmatprep.subr.mxu0 0.0
    %862 = vmatpush1.msra.mxu0 0.0
    %863 = vmatprep.mubr.f32.mxu0 0.0
    %864 = vmatmul.mubr.f32.gmra.mrb[0].mxu0 %v797
    %v865 = vpop.f32.mrb[0].mxu0
    %v866 = vadd.f32 0.0, %v865
    %v867 = vpop.f32.mrb[0].mxu0
    %v868 = vadd.f32 0.0, %v867
    %869 = vdwg.mxu0
    %v870 = vadd.f32 %v714, %v790
    %v871 = vxor.u32 %v870, 2147483648
    %v872 = vmul.f32 %v871, 1.442695
    %v873 = vpow.pop %v872
    %v874 = vadd.f32 %v873, 1.0
    %v875 = vrcp.pop %v874
    %v876 = vmul.f32 1.0, %v875
    %v877 = vadd.f32 %v790, %v639
    %v878 = vadd.f32 %v792, %v639
    %881 = vrot.lane.b32.xlu0 %v877, 32
    %v882 = vpop.permute.xlu0 %881
    %883 = vrot.lane.b32.xlu0 %v878, 32
    %v884 = vpop.permute.xlu0 %883
    %v885 = vsel %vm141, %v882, %v884
    %v887 = vmul.f32 %v876, %v885
    %889 = vrot.lane.b32.xlu0 %v887, 96
    %v890 = vpop.permute.xlu0 %889
    %v892 = vadd.f32 %v714, %v890
    %v893 = vadd.f32 %v715, %v890
    %v894 = vtanh.pop %v892
    %v895 = vtanh.pop %v893
    %v896 = vsub.f32 1.0, %v876
    %899 = vrot.lane.b32.xlu0 %v894, 80
    %v900 = vpop.permute.xlu0 %899
    %901 = vrot.lane.b32.xlu0 %v895, 80
    %v902 = vpop.permute.xlu0 %901
    %v903 = vsel %vm667, %v900, %v902
    %v905 = vmul.f32 %v896, %v903
    %v906 = vmul.f32 %v876, %v672
    %v907 = vadd.f32 %v905, %v906
    %v908 = vadd.f32 %v716, %v866
    %v909 = vxor.u32 %v908, 2147483648
    %v910 = vmul.f32 %v909, 1.442695
    %v911 = vpow.pop %v910
    %v912 = vadd.f32 %v911, 1.0
    %v913 = vrcp.pop %v912
    %v914 = vmul.f32 1.0, %v913
    %v915 = vadd.f32 %v866, %v681
    %v916 = vadd.f32 %v868, %v681
    %919 = vrot.lane.b32.xlu0 %v915, 32
    %v920 = vpop.permute.xlu0 %919
    %921 = vrot.lane.b32.xlu0 %v916, 32
    %v922 = vpop.permute.xlu0 %921
    %v923 = vsel %vm141, %v920, %v922
    %v925 = vmul.f32 %v914, %v923
    %927 = vrot.lane.b32.xlu0 %v925, 96
    %v928 = vpop.permute.xlu0 %927
    %v930 = vadd.f32 %v716, %v928
    %v931 = vadd.f32 %v717, %v928
    %v932 = vtanh.pop %v930
    %v933 = vtanh.pop %v931
    %v934 = vsub.f32 1.0, %v914
    %937 = vrot.lane.b32.xlu0 %v932, 80
    %v938 = vpop.permute.xlu0 %937
    %939 = vrot.lane.b32.xlu0 %v933, 80
    %v940 = vpop.permute.xlu0 %939
    %v941 = vsel %vm667, %v938, %v940
    %v943 = vmul.f32 %v934, %v941
    %v944 = vmul.f32 %v914, %v713
    %v945 = vadd.f32 %v943, %v944
    %v946 = vld [vmem:[#allocation2 + $0x20] sm:$0xff]
    %v947 = vld [vmem:[#allocation2 + $0x28] sm:$0xff]
    %v948 = vld [vmem:[#allocation3 + $0x50] sm:$0xff]
    %v949 = vld [vmem:[#allocation3 + $0x58] sm:$0xff]
    %951 = vrot.lane.b32.xlu0 %v907, 80
    %v952 = vpop.permute.xlu0 %951
    %v953 = vsel %vm485, %v952, 0
    %955 = vmatprep.subr.mxu0 %v446
    %956 = vmatpush1.msra.mxu0 %v445
    %957 = vmatprep.subr.mxu0 %v448
    %958 = vmatpush1.msra.mxu0 %v447
    %959 = vmatprep.subr.mxu0 %v450
    %960 = vmatpush1.msra.mxu0 %v449
    %961 = vmatprep.subr.mxu0 %v452
    %962 = vmatpush1.msra.mxu0 %v451
    %963 = vmatprep.subr.mxu0 %v454
    %964 = vmatpush1.msra.mxu0 %v453
    %965 = vmatprep.subr.mxu0 %v456
    %966 = vmatpush1.msra.mxu0 %v455
    %967 = vmatprep.subr.mxu0 0.0
    %968 = vmatpush1.msra.mxu0 0.0
    %969 = vmatprep.subr.mxu0 0.0
    %970 = vmatpush1.msra.mxu0 0.0
    %971 = vmatprep.subr.mxu0 0.0
    %972 = vmatpush1.msra.mxu0 0.0
    %973 = vmatprep.subr.mxu0 0.0
    %974 = vmatpush1.msra.mxu0 0.0
    %975 = vmatprep.subr.mxu0 0.0
    %976 = vmatpush1.msra.mxu0 0.0
    %977 = vmatprep.subr.mxu0 0.0
    %978 = vmatpush1.msra.mxu0 0.0
    %979 = vmatprep.subr.mxu0 0.0
    %980 = vmatpush1.msra.mxu0 0.0
    %981 = vmatprep.subr.mxu0 0.0
    %982 = vmatpush1.msra.mxu0 0.0
    %983 = vmatprep.subr.mxu0 0.0
    %984 = vmatpush1.msra.mxu0 0.0
    %985 = vmatprep.subr.mxu0 0.0
    %986 = vmatpush1.msra.mxu0 0.0
    %987 = vmatprep.subr.mxu0 0.0
    %988 = vmatpush1.msra.mxu0 0.0
    %989 = vmatprep.subr.mxu0 0.0
    %990 = vmatpush1.msra.mxu0 0.0
    %991 = vmatprep.subr.mxu0 0.0
    %992 = vmatpush1.msra.mxu0 0.0
    %993 = vmatprep.subr.mxu0 0.0
    %994 = vmatpush1.msra.mxu0 0.0
    %995 = vmatprep.subr.mxu0 0.0
    %996 = vmatpush1.msra.mxu0 0.0
    %997 = vmatprep.subr.mxu0 0.0
    %998 = vmatpush1.msra.mxu0 0.0
    %999 = vmatprep.subr.mxu0 0.0
    %1000 = vmatpush1.msra.mxu0 0.0
    %1001 = vmatprep.subr.mxu0 0.0
    %1002 = vmatpush1.msra.mxu0 0.0
    %1003 = vmatprep.subr.mxu0 0.0
    %1004 = vmatpush1.msra.mxu0 0.0
    %1005 = vmatprep.subr.mxu0 0.0
    %1006 = vmatpush1.msra.mxu0 0.0
    %1007 = vmatprep.subr.mxu0 0.0
    %1008 = vmatpush1.msra.mxu0 0.0
    %1009 = vmatprep.subr.mxu0 0.0
    %1010 = vmatpush1.msra.mxu0 0.0
    %1011 = vmatprep.subr.mxu0 0.0
    %1012 = vmatpush1.msra.mxu0 0.0
    %1013 = vmatprep.subr.mxu0 0.0
    %1014 = vmatpush1.msra.mxu0 0.0
    %1015 = vmatprep.subr.mxu0 0.0
    %1016 = vmatpush1.msra.mxu0 0.0
    %1017 = vmatprep.subr.mxu0 0.0
    %1018 = vmatpush1.msra.mxu0 0.0
    %1019 = vmatprep.mubr.f32.mxu0 0.0
    %1020 = vmatmul.mubr.f32.gmra.mrb[0].mxu0 %v953
    %v1021 = vpop.f32.mrb[0].mxu0
    %v1022 = vadd.f32 0.0, %v1021
    %v1023 = vpop.f32.mrb[0].mxu0
    %v1024 = vadd.f32 0.0, %v1023
    %1025 = vdwg.mxu0
    %1027 = vrot.lane.b32.xlu0 %v945, 80
    %v1028 = vpop.permute.xlu0 %1027
    %v1029 = vsel %vm485, %v1028, 0
    %1031 = vmatprep.subr.mxu0 %v458
    %1032 = vmatpush1.msra.mxu0 %v457
    %1033 = vmatprep.subr.mxu0 %v460
    %1034 = vmatpush1.msra.mxu0 %v459
    %1035 = vmatprep.subr.mxu0 %v462
    %1036 = vmatpush1.msra.mxu0 %v461
    %1037 = vmatprep.subr.mxu0 %v464
    %1038 = vmatpush1.msra.mxu0 %v463
    %1039 = vmatprep.subr.mxu0 %v466
    %1040 = vmatpush1.msra.mxu0 %v465
    %1041 = vmatprep.subr.mxu0 %v468
    %1042 = vmatpush1.msra.mxu0 %v467
    %1043 = vmatprep.subr.mxu0 0.0
    %1044 = vmatpush1.msra.mxu0 0.0
    %1045 = vmatprep.subr.mxu0 0.0
    %1046 = vmatpush1.msra.mxu0 0.0
    %1047 = vmatprep.subr.mxu0 0.0
    %1048 = vmatpush1.msra.mxu0 0.0
    %1049 = vmatprep.subr.mxu0 0.0
    %1050 = vmatpush1.msra.mxu0 0.0
    %1051 = vmatprep.subr.mxu0 0.0
    %1052 = vmatpush1.msra.mxu0 0.0
    %1053 = vmatprep.subr.mxu0 0.0
    %1054 = vmatpush1.msra.mxu0 0.0
    %1055 = vmatprep.subr.mxu0 0.0
    %1056 = vmatpush1.msra.mxu0 0.0
    %1057 = vmatprep.subr.mxu0 0.0
    %1058 = vmatpush1.msra.mxu0 0.0
    %1059 = vmatprep.subr.mxu0 0.0
    %1060 = vmatpush1.msra.mxu0 0.0
    %1061 = vmatprep.subr.mxu0 0.0
    %1062 = vmatpush1.msra.mxu0 0.0
    %1063 = vmatprep.subr.mxu0 0.0
    %1064 = vmatpush1.msra.mxu0 0.0
    %1065 = vmatprep.subr.mxu0 0.0
    %1066 = vmatpush1.msra.mxu0 0.0
    %1067 = vmatprep.subr.mxu0 0.0
    %1068 = vmatpush1.msra.mxu0 0.0
    %1069 = vmatprep.subr.mxu0 0.0
    %1070 = vmatpush1.msra.mxu0 0.0
    %1071 = vmatprep.subr.mxu0 0.0
    %1072 = vmatpush1.msra.mxu0 0.0
    %1073 = vmatprep.subr.mxu0 0.0
    %1074 = vmatpush1.msra.mxu0 0.0
    %1075 = vmatprep.subr.mxu0 0.0
    %1076 = vmatpush1.msra.mxu0 0.0
    %1077 = vmatprep.subr.mxu0 0.0
    %1078 = vmatpush1.msra.mxu0 0.0
    %1079 = vmatprep.subr.mxu0 0.0
    %1080 = vmatpush1.msra.mxu0 0.0
    %1081 = vmatprep.subr.mxu0 0.0
    %1082 = vmatpush1.msra.mxu0 0.0
    %1083 = vmatprep.subr.mxu0 0.0
    %1084 = vmatpush1.msra.mxu0 0.0
    %1085 = vmatprep.subr.mxu0 0.0
    %1086 = vmatpush1.msra.mxu0 0.0
    %1087 = vmatprep.subr.mxu0 0.0
    %1088 = vmatpush1.msra.mxu0 0.0
    %1089 = vmatprep.subr.mxu0 0.0
    %1090 = vmatpush1.msra.mxu0 0.0
    %1091 = vmatprep.subr.mxu0 0.0
    %1092 = vmatpush1.msra.mxu0 0.0
    %1093 = vmatprep.subr.mxu0 0.0
    %1094 = vmatpush1.msra.mxu0 0.0
    %1095 = vmatprep.mubr.f32.mxu0 0.0
    %1096 = vmatmul.mubr.f32.gmra.mrb[0].mxu0 %v1029
    %v1097 = vpop.f32.mrb[0].mxu0
    %v1098 = vadd.f32 0.0, %v1097
    %v1099 = vpop.f32.mrb[0].mxu0
    %v1100 = vadd.f32 0.0, %v1099
    %1101 = vdwg.mxu0
    %v1102 = vadd.f32 %v946, %v1022
    %v1103 = vxor.u32 %v1102, 2147483648
    %v1104 = vmul.f32 %v1103, 1.442695
    %v1105 = vpow.pop %v1104
    %v1106 = vadd.f32 %v1105, 1.0
    %v1107 = vrcp.pop %v1106
    %v1108 = vmul.f32 1.0, %v1107
    %v1109 = vadd.f32 %v1022, %v639
    %v1110 = vadd.f32 %v1024, %v639
    %1113 = vrot.lane.b32.xlu0 %v1109, 32
    %v1114 = vpop.permute.xlu0 %1113
    %1115 = vrot.lane.b32.xlu0 %v1110, 32
    %v1116 = vpop.permute.xlu0 %1115
    %v1117 = vsel %vm141, %v1114, %v1116
    %v1119 = vmul.f32 %v1108, %v1117
    %1121 = vrot.lane.b32.xlu0 %v1119, 96
    %v1122 = vpop.permute.xlu0 %1121
    %v1124 = vadd.f32 %v946, %v1122
    %v1125 = vadd.f32 %v947, %v1122
    %v1126 = vtanh.pop %v1124
    %v1127 = vtanh.pop %v1125
    %v1128 = vsub.f32 1.0, %v1108
    %1131 = vrot.lane.b32.xlu0 %v1126, 80
    %v1132 = vpop.permute.xlu0 %1131
    %1133 = vrot.lane.b32.xlu0 %v1127, 80
    %v1134 = vpop.permute.xlu0 %1133
    %v1135 = vsel %vm667, %v1132, %v1134
    %v1137 = vmul.f32 %v1128, %v1135
    %v1138 = vmul.f32 %v1108, %v907
    %v1139 = vadd.f32 %v1137, %v1138
    %v1140 = vadd.f32 %v948, %v1098
    %v1141 = vxor.u32 %v1140, 2147483648
    %v1142 = vmul.f32 %v1141, 1.442695
    %v1143 = vpow.pop %v1142
    %v1144 = vadd.f32 %v1143, 1.0
    %v1145 = vrcp.pop %v1144
    %v1146 = vmul.f32 1.0, %v1145
    %v1147 = vadd.f32 %v1098, %v681
    %v1148 = vadd.f32 %v1100, %v681
    %1151 = vrot.lane.b32.xlu0 %v1147, 32
    %v1152 = vpop.permute.xlu0 %1151
    %1153 = vrot.lane.b32.xlu0 %v1148, 32
    %v1154 = vpop.permute.xlu0 %1153
    %v1155 = vsel %vm141, %v1152, %v1154
    %v1157 = vmul.f32 %v1146, %v1155
    %1159 = vrot.lane.b32.xlu0 %v1157, 96
    %v1160 = vpop.permute.xlu0 %1159
    %v1162 = vadd.f32 %v948, %v1160
    %v1163 = vadd.f32 %v949, %v1160
    %v1164 = vtanh.pop %v1162
    %v1165 = vtanh.pop %v1163
    %v1166 = vsub.f32 1.0, %v1146
    %1169 = vrot.lane.b32.xlu0 %v1164, 80
    %v1170 = vpop.permute.xlu0 %1169
    %1171 = vrot.lane.b32.xlu0 %v1165, 80
    %v1172 = vpop.permute.xlu0 %1171
    %v1173 = vsel %vm667, %v1170, %v1172
    %v1175 = vmul.f32 %v1166, %v1173
    %v1176 = vmul.f32 %v1146, %v945
    %v1177 = vadd.f32 %v1175, %v1176
    %v1178 = vld [vmem:[#allocation2 + $0x30] sm:$0xff]
    %v1179 = vld [vmem:[#allocation2 + $0x38] sm:$0xff]
    %v1180 = vld [vmem:[#allocation3 + $0x40] sm:$0xff]
    %v1181 = vld [vmem:[#allocation3 + $0x48] sm:$0xff]
    %1183 = vrot.lane.b32.xlu0 %v1139, 80
    %v1184 = vpop.permute.xlu0 %1183
    %v1185 = vsel %vm485, %v1184, 0
    %1187 = vmatprep.subr.mxu0 %v446
    %1188 = vmatpush1.msra.mxu0 %v445
    %1189 = vmatprep.subr.mxu0 %v448
    %1190 = vmatpush1.msra.mxu0 %v447
    %1191 = vmatprep.subr.mxu0 %v450
    %1192 = vmatpush1.msra.mxu0 %v449
    %1193 = vmatprep.subr.mxu0 %v452
    %1194 = vmatpush1.msra.mxu0 %v451
    %1195 = vmatprep.subr.mxu0 %v454
    %1196 = vmatpush1.msra.mxu0 %v453
    %1197 = vmatprep.subr.mxu0 %v456
    %1198 = vmatpush1.msra.mxu0 %v455
    %1199 = vmatprep.subr.mxu0 0.0
    %1200 = vmatpush1.msra.mxu0 0.0
    %1201 = vmatprep.subr.mxu0 0.0
    %1202 = vmatpush1.msra.mxu0 0.0
    %1203 = vmatprep.subr.mxu0 0.0
    %1204 = vmatpush1.msra.mxu0 0.0
    %1205 = vmatprep.subr.mxu0 0.0
    %1206 = vmatpush1.msra.mxu0 0.0
    %1207 = vmatprep.subr.mxu0 0.0
    %1208 = vmatpush1.msra.mxu0 0.0
    %1209 = vmatprep.subr.mxu0 0.0
    %1210 = vmatpush1.msra.mxu0 0.0
    %1211 = vmatprep.subr.mxu0 0.0
    %1212 = vmatpush1.msra.mxu0 0.0
    %1213 = vmatprep.subr.mxu0 0.0
    %1214 = vmatpush1.msra.mxu0 0.0
    %1215 = vmatprep.subr.mxu0 0.0
    %1216 = vmatpush1.msra.mxu0 0.0
    %1217 = vmatprep.subr.mxu0 0.0
    %1218 = vmatpush1.msra.mxu0 0.0
    %1219 = vmatprep.subr.mxu0 0.0
    %1220 = vmatpush1.msra.mxu0 0.0
    %1221 = vmatprep.subr.mxu0 0.0
    %1222 = vmatpush1.msra.mxu0 0.0
    %1223 = vmatprep.subr.mxu0 0.0
    %1224 = vmatpush1.msra.mxu0 0.0
    %1225 = vmatprep.subr.mxu0 0.0
    %1226 = vmatpush1.msra.mxu0 0.0
    %1227 = vmatprep.subr.mxu0 0.0
    %1228 = vmatpush1.msra.mxu0 0.0
    %1229 = vmatprep.subr.mxu0 0.0
    %1230 = vmatpush1.msra.mxu0 0.0
    %1231 = vmatprep.subr.mxu0 0.0
    %1232 = vmatpush1.msra.mxu0 0.0
    %1233 = vmatprep.subr.mxu0 0.0
    %1234 = vmatpush1.msra.mxu0 0.0
    %1235 = vmatprep.subr.mxu0 0.0
    %1236 = vmatpush1.msra.mxu0 0.0
    %1237 = vmatprep.subr.mxu0 0.0
    %1238 = vmatpush1.msra.mxu0 0.0
    %1239 = vmatprep.subr.mxu0 0.0
    %1240 = vmatpush1.msra.mxu0 0.0
    %1241 = vmatprep.subr.mxu0 0.0
    %1242 = vmatpush1.msra.mxu0 0.0
    %1243 = vmatprep.subr.mxu0 0.0
    %1244 = vmatpush1.msra.mxu0 0.0
    %1245 = vmatprep.subr.mxu0 0.0
    %1246 = vmatpush1.msra.mxu0 0.0
    %1247 = vmatprep.subr.mxu0 0.0
    %1248 = vmatpush1.msra.mxu0 0.0
    %1249 = vmatprep.subr.mxu0 0.0
    %1250 = vmatpush1.msra.mxu0 0.0
    %1251 = vmatprep.mubr.f32.mxu0 0.0
    %1252 = vmatmul.mubr.f32.gmra.mrb[0].mxu0 %v1185
    %v1253 = vpop.f32.mrb[0].mxu0
    %v1254 = vadd.f32 0.0, %v1253
    %v1255 = vpop.f32.mrb[0].mxu0
    %v1256 = vadd.f32 0.0, %v1255
    %1257 = vdwg.mxu0
    %1259 = vrot.lane.b32.xlu0 %v1177, 80
    %v1260 = vpop.permute.xlu0 %1259
    %v1261 = vsel %vm485, %v1260, 0
    %1263 = vmatprep.subr.mxu0 %v458
    %1264 = vmatpush1.msra.mxu0 %v457
    %1265 = vmatprep.subr.mxu0 %v460
    %1266 = vmatpush1.msra.mxu0 %v459
    %1267 = vmatprep.subr.mxu0 %v462
    %1268 = vmatpush1.msra.mxu0 %v461
    %1269 = vmatprep.subr.mxu0 %v464
    %1270 = vmatpush1.msra.mxu0 %v463
    %1271 = vmatprep.subr.mxu0 %v466
    %1272 = vmatpush1.msra.mxu0 %v465
    %1273 = vmatprep.subr.mxu0 %v468
    %1274 = vmatpush1.msra.mxu0 %v467
    %1275 = vmatprep.subr.mxu0 0.0
    %1276 = vmatpush1.msra.mxu0 0.0
    %1277 = vmatprep.subr.mxu0 0.0
    %1278 = vmatpush1.msra.mxu0 0.0
    %1279 = vmatprep.subr.mxu0 0.0
    %1280 = vmatpush1.msra.mxu0 0.0
    %1281 = vmatprep.subr.mxu0 0.0
    %1282 = vmatpush1.msra.mxu0 0.0
    %1283 = vmatprep.subr.mxu0 0.0
    %1284 = vmatpush1.msra.mxu0 0.0
    %1285 = vmatprep.subr.mxu0 0.0
    %1286 = vmatpush1.msra.mxu0 0.0
    %1287 = vmatprep.subr.mxu0 0.0
    %1288 = vmatpush1.msra.mxu0 0.0
    %1289 = vmatprep.subr.mxu0 0.0
    %1290 = vmatpush1.msra.mxu0 0.0
    %1291 = vmatprep.subr.mxu0 0.0
    %1292 = vmatpush1.msra.mxu0 0.0
    %1293 = vmatprep.subr.mxu0 0.0
    %1294 = vmatpush1.msra.mxu0 0.0
    %1295 = vmatprep.subr.mxu0 0.0
    %1296 = vmatpush1.msra.mxu0 0.0
    %1297 = vmatprep.subr.mxu0 0.0
    %1298 = vmatpush1.msra.mxu0 0.0
    %1299 = vmatprep.subr.mxu0 0.0
    %1300 = vmatpush1.msra.mxu0 0.0
    %1301 = vmatprep.subr.mxu0 0.0
    %1302 = vmatpush1.msra.mxu0 0.0
    %1303 = vmatprep.subr.mxu0 0.0
    %1304 = vmatpush1.msra.mxu0 0.0
    %1305 = vmatprep.subr.mxu0 0.0
    %1306 = vmatpush1.msra.mxu0 0.0
    %1307 = vmatprep.subr.mxu0 0.0
    %1308 = vmatpush1.msra.mxu0 0.0
    %1309 = vmatprep.subr.mxu0 0.0
    %1310 = vmatpush1.msra.mxu0 0.0
    %1311 = vmatprep.subr.mxu0 0.0
    %1312 = vmatpush1.msra.mxu0 0.0
    %1313 = vmatprep.subr.mxu0 0.0
    %1314 = vmatpush1.msra.mxu0 0.0
    %1315 = vmatprep.subr.mxu0 0.0
    %1316 = vmatpush1.msra.mxu0 0.0
    %1317 = vmatprep.subr.mxu0 0.0
    %1318 = vmatpush1.msra.mxu0 0.0
    %1319 = vmatprep.subr.mxu0 0.0
    %1320 = vmatpush1.msra.mxu0 0.0
    %1321 = vmatprep.subr.mxu0 0.0
    %1322 = vmatpush1.msra.mxu0 0.0
    %1323 = vmatprep.subr.mxu0 0.0
    %1324 = vmatpush1.msra.mxu0 0.0
    %1325 = vmatprep.subr.mxu0 0.0
    %1326 = vmatpush1.msra.mxu0 0.0
    %1327 = vmatprep.mubr.f32.mxu0 0.0
    %1328 = vmatmul.mubr.f32.gmra.mrb[0].mxu0 %v1261
    %v1329 = vpop.f32.mrb[0].mxu0
    %v1330 = vadd.f32 0.0, %v1329
    %v1331 = vpop.f32.mrb[0].mxu0
    %v1332 = vadd.f32 0.0, %v1331
    %1333 = vdwg.mxu0
    %v1334 = vadd.f32 %v1178, %v1254
    %v1335 = vxor.u32 %v1334, 2147483648
    %v1336 = vmul.f32 %v1335, 1.442695
    %v1337 = vpow.pop %v1336
    %v1338 = vadd.f32 %v1337, 1.0
    %v1339 = vrcp.pop %v1338
    %v1340 = vmul.f32 1.0, %v1339
    %v1341 = vadd.f32 %v1254, %v639
    %v1342 = vadd.f32 %v1256, %v639
    %1345 = vrot.lane.b32.xlu0 %v1341, 32
    %v1346 = vpop.permute.xlu0 %1345
    %1347 = vrot.lane.b32.xlu0 %v1342, 32
    %v1348 = vpop.permute.xlu0 %1347
    %v1349 = vsel %vm141, %v1346, %v1348
    %v1351 = vmul.f32 %v1340, %v1349
    %1353 = vrot.lane.b32.xlu0 %v1351, 96
    %v1354 = vpop.permute.xlu0 %1353
    %v1356 = vadd.f32 %v1178, %v1354
    %v1357 = vadd.f32 %v1179, %v1354
    %v1358 = vtanh.pop %v1356
    %v1359 = vtanh.pop %v1357
    %v1360 = vsub.f32 1.0, %v1340
    %1363 = vrot.lane.b32.xlu0 %v1358, 80
    %v1364 = vpop.permute.xlu0 %1363
    %1365 = vrot.lane.b32.xlu0 %v1359, 80
    %v1366 = vpop.permute.xlu0 %1365
    %v1367 = vsel %vm667, %v1364, %v1366
    %v1369 = vmul.f32 %v1360, %v1367
    %v1370 = vmul.f32 %v1340, %v1139
    %v1371 = vadd.f32 %v1369, %v1370
    %v1372 = vadd.f32 %v1180, %v1330
    %v1373 = vxor.u32 %v1372, 2147483648
    %v1374 = vmul.f32 %v1373, 1.442695
    %v1375 = vpow.pop %v1374
    %v1376 = vadd.f32 %v1375, 1.0
    %v1377 = vrcp.pop %v1376
    %v1378 = vmul.f32 1.0, %v1377
    %v1379 = vadd.f32 %v1330, %v681
    %v1380 = vadd.f32 %v1332, %v681
    %1383 = vrot.lane.b32.xlu0 %v1379, 32
    %v1384 = vpop.permute.xlu0 %1383
    %1385 = vrot.lane.b32.xlu0 %v1380, 32
    %v1386 = vpop.permute.xlu0 %1385
    %v1387 = vsel %vm141, %v1384, %v1386
    %v1389 = vmul.f32 %v1378, %v1387
    %1391 = vrot.lane.b32.xlu0 %v1389, 96
    %v1392 = vpop.permute.xlu0 %1391
    %v1394 = vadd.f32 %v1180, %v1392
    %v1395 = vadd.f32 %v1181, %v1392
    %v1396 = vtanh.pop %v1394
    %v1397 = vtanh.pop %v1395
    %v1398 = vsub.f32 1.0, %v1378
    %1401 = vrot.lane.b32.xlu0 %v1396, 80
    %v1402 = vpop.permute.xlu0 %1401
    %1403 = vrot.lane.b32.xlu0 %v1397, 80
    %v1404 = vpop.permute.xlu0 %1403
    %v1405 = vsel %vm667, %v1402, %v1404
    %v1407 = vmul.f32 %v1398, %v1405
    %v1408 = vmul.f32 %v1378, %v1177
    %v1409 = vadd.f32 %v1407, %v1408
    %v1410 = vld [vmem:[#allocation2 + $0x40] sm:$0xff]
    %v1411 = vld [vmem:[#allocation2 + $0x48] sm:$0xff]
    %v1412 = vld [vmem:[#allocation3 + $0x30] sm:$0xff]
    %v1413 = vld [vmem:[#allocation3 + $0x38] sm:$0xff]
    %1415 = vrot.lane.b32.xlu0 %v1371, 80
    %v1416 = vpop.permute.xlu0 %1415
    %v1417 = vsel %vm485, %v1416, 0
    %1419 = vmatprep.subr.mxu0 %v446
    %1420 = vmatpush1.msra.mxu0 %v445
    %1421 = vmatprep.subr.mxu0 %v448
    %1422 = vmatpush1.msra.mxu0 %v447
    %1423 = vmatprep.subr.mxu0 %v450
    %1424 = vmatpush1.msra.mxu0 %v449
    %1425 = vmatprep.subr.mxu0 %v452
    %1426 = vmatpush1.msra.mxu0 %v451
    %1427 = vmatprep.subr.mxu0 %v454
    %1428 = vmatpush1.msra.mxu0 %v453
    %1429 = vmatprep.subr.mxu0 %v456
    %1430 = vmatpush1.msra.mxu0 %v455
    %1431 = vmatprep.subr.mxu0 0.0
    %1432 = vmatpush1.msra.mxu0 0.0
    %1433 = vmatprep.subr.mxu0 0.0
    %1434 = vmatpush1.msra.mxu0 0.0
    %1435 = vmatprep.subr.mxu0 0.0
    %1436 = vmatpush1.msra.mxu0 0.0
    %1437 = vmatprep.subr.mxu0 0.0
    %1438 = vmatpush1.msra.mxu0 0.0
    %1439 = vmatprep.subr.mxu0 0.0
    %1440 = vmatpush1.msra.mxu0 0.0
    %1441 = vmatprep.subr.mxu0 0.0
    %1442 = vmatpush1.msra.mxu0 0.0
    %1443 = vmatprep.subr.mxu0 0.0
    %1444 = vmatpush1.msra.mxu0 0.0
    %1445 = vmatprep.subr.mxu0 0.0
    %1446 = vmatpush1.msra.mxu0 0.0
    %1447 = vmatprep.subr.mxu0 0.0
    %1448 = vmatpush1.msra.mxu0 0.0
    %1449 = vmatprep.subr.mxu0 0.0
    %1450 = vmatpush1.msra.mxu0 0.0
    %1451 = vmatprep.subr.mxu0 0.0
    %1452 = vmatpush1.msra.mxu0 0.0
    %1453 = vmatprep.subr.mxu0 0.0
    %1454 = vmatpush1.msra.mxu0 0.0
    %1455 = vmatprep.subr.mxu0 0.0
    %1456 = vmatpush1.msra.mxu0 0.0
    %1457 = vmatprep.subr.mxu0 0.0
    %1458 = vmatpush1.msra.mxu0 0.0
    %1459 = vmatprep.subr.mxu0 0.0
    %1460 = vmatpush1.msra.mxu0 0.0
    %1461 = vmatprep.subr.mxu0 0.0
    %1462 = vmatpush1.msra.mxu0 0.0
    %1463 = vmatprep.subr.mxu0 0.0
    %1464 = vmatpush1.msra.mxu0 0.0
    %1465 = vmatprep.subr.mxu0 0.0
    %1466 = vmatpush1.msra.mxu0 0.0
    %1467 = vmatprep.subr.mxu0 0.0
    %1468 = vmatpush1.msra.mxu0 0.0
    %1469 = vmatprep.subr.mxu0 0.0
    %1470 = vmatpush1.msra.mxu0 0.0
    %1471 = vmatprep.subr.mxu0 0.0
    %1472 = vmatpush1.msra.mxu0 0.0
    %1473 = vmatprep.subr.mxu0 0.0
    %1474 = vmatpush1.msra.mxu0 0.0
    %1475 = vmatprep.subr.mxu0 0.0
    %1476 = vmatpush1.msra.mxu0 0.0
    %1477 = vmatprep.subr.mxu0 0.0
    %1478 = vmatpush1.msra.mxu0 0.0
    %1479 = vmatprep.subr.mxu0 0.0
    %1480 = vmatpush1.msra.mxu0 0.0
    %1481 = vmatprep.subr.mxu0 0.0
    %1482 = vmatpush1.msra.mxu0 0.0
    %1483 = vmatprep.mubr.f32.mxu0 0.0
    %1484 = vmatmul.mubr.f32.gmra.mrb[0].mxu0 %v1417
    %v1485 = vpop.f32.mrb[0].mxu0
    %v1486 = vadd.f32 0.0, %v1485
    %v1487 = vpop.f32.mrb[0].mxu0
    %v1488 = vadd.f32 0.0, %v1487
    %1489 = vdwg.mxu0
    %1491 = vrot.lane.b32.xlu0 %v1409, 80
    %v1492 = vpop.permute.xlu0 %1491
    %v1493 = vsel %vm485, %v1492, 0
    %1495 = vmatprep.subr.mxu0 %v458
    %1496 = vmatpush1.msra.mxu0 %v457
    %1497 = vmatprep.subr.mxu0 %v460
    %1498 = vmatpush1.msra.mxu0 %v459
    %1499 = vmatprep.subr.mxu0 %v462
    %1500 = vmatpush1.msra.mxu0 %v461
    %1501 = vmatprep.subr.mxu0 %v464
    %1502 = vmatpush1.msra.mxu0 %v463
    %1503 = vmatprep.subr.mxu0 %v466
    %1504 = vmatpush1.msra.mxu0 %v465
    %1505 = vmatprep.subr.mxu0 %v468
    %1506 = vmatpush1.msra.mxu0 %v467
    %1507 = vmatprep.subr.mxu0 0.0
    %1508 = vmatpush1.msra.mxu0 0.0
    %1509 = vmatprep.subr.mxu0 0.0
    %1510 = vmatpush1.msra.mxu0 0.0
    %1511 = vmatprep.subr.mxu0 0.0
    %1512 = vmatpush1.msra.mxu0 0.0
    %1513 = vmatprep.subr.mxu0 0.0
    %1514 = vmatpush1.msra.mxu0 0.0
    %1515 = vmatprep.subr.mxu0 0.0
    %1516 = vmatpush1.msra.mxu0 0.0
    %1517 = vmatprep.subr.mxu0 0.0
    %1518 = vmatpush1.msra.mxu0 0.0
    %1519 = vmatprep.subr.mxu0 0.0
    %1520 = vmatpush1.msra.mxu0 0.0
    %1521 = vmatprep.subr.mxu0 0.0
    %1522 = vmatpush1.msra.mxu0 0.0
    %1523 = vmatprep.subr.mxu0 0.0
    %1524 = vmatpush1.msra.mxu0 0.0
    %1525 = vmatprep.subr.mxu0 0.0
    %1526 = vmatpush1.msra.mxu0 0.0
    %1527 = vmatprep.subr.mxu0 0.0
    %1528 = vmatpush1.msra.mxu0 0.0
    %1529 = vmatprep.subr.mxu0 0.0
    %1530 = vmatpush1.msra.mxu0 0.0
    %1531 = vmatprep.subr.mxu0 0.0
    %1532 = vmatpush1.msra.mxu0 0.0
    %1533 = vmatprep.subr.mxu0 0.0
    %1534 = vmatpush1.msra.mxu0 0.0
    %1535 = vmatprep.subr.mxu0 0.0
    %1536 = vmatpush1.msra.mxu0 0.0
    %1537 = vmatprep.subr.mxu0 0.0
    %1538 = vmatpush1.msra.mxu0 0.0
    %1539 = vmatprep.subr.mxu0 0.0
    %1540 = vmatpush1.msra.mxu0 0.0
    %1541 = vmatprep.subr.mxu0 0.0
    %1542 = vmatpush1.msra.mxu0 0.0
    %1543 = vmatprep.subr.mxu0 0.0
    %1544 = vmatpush1.msra.mxu0 0.0
    %1545 = vmatprep.subr.mxu0 0.0
    %1546 = vmatpush1.msra.mxu0 0.0
    %1547 = vmatprep.subr.mxu0 0.0
    %1548 = vmatpush1.msra.mxu0 0.0
    %1549 = vmatprep.subr.mxu0 0.0
    %1550 = vmatpush1.msra.mxu0 0.0
    %1551 = vmatprep.subr.mxu0 0.0
    %1552 = vmatpush1.msra.mxu0 0.0
    %1553 = vmatprep.subr.mxu0 0.0
    %1554 = vmatpush1.msra.mxu0 0.0
    %1555 = vmatprep.subr.mxu0 0.0
    %1556 = vmatpush1.msra.mxu0 0.0
    %1557 = vmatprep.subr.mxu0 0.0
    %1558 = vmatpush1.msra.mxu0 0.0
    %1559 = vmatprep.mubr.f32.mxu0 0.0
    %1560 = vmatmul.mubr.f32.gmra.mrb[0].mxu0 %v1493
    %v1561 = vpop.f32.mrb[0].mxu0
    %v1562 = vadd.f32 0.0, %v1561
    %v1563 = vpop.f32.mrb[0].mxu0
    %v1564 = vadd.f32 0.0, %v1563
    %1565 = vdwg.mxu0
    %v1566 = vadd.f32 %v1410, %v1486
    %v1567 = vxor.u32 %v1566, 2147483648
    %v1568 = vmul.f32 %v1567, 1.442695
    %v1569 = vpow.pop %v1568
    %v1570 = vadd.f32 %v1569, 1.0
    %v1571 = vrcp.pop %v1570
    %v1572 = vmul.f32 1.0, %v1571
    %v1573 = vadd.f32 %v1486, %v639
    %v1574 = vadd.f32 %v1488, %v639
    %1577 = vrot.lane.b32.xlu0 %v1573, 32
    %v1578 = vpop.permute.xlu0 %1577
    %1579 = vrot.lane.b32.xlu0 %v1574, 32
    %v1580 = vpop.permute.xlu0 %1579
    %v1581 = vsel %vm141, %v1578, %v1580
    %v1583 = vmul.f32 %v1572, %v1581
    %1585 = vrot.lane.b32.xlu0 %v1583, 96
    %v1586 = vpop.permute.xlu0 %1585
    %v1588 = vadd.f32 %v1410, %v1586
    %v1589 = vadd.f32 %v1411, %v1586
    %v1590 = vtanh.pop %v1588
    %v1591 = vtanh.pop %v1589
    %v1592 = vsub.f32 1.0, %v1572
    %1595 = vrot.lane.b32.xlu0 %v1590, 80
    %v1596 = vpop.permute.xlu0 %1595
    %1597 = vrot.lane.b32.xlu0 %v1591, 80
    %v1598 = vpop.permute.xlu0 %1597
    %v1599 = vsel %vm667, %v1596, %v1598
    %v1601 = vmul.f32 %v1592, %v1599
    %v1602 = vmul.f32 %v1572, %v1371
    %v1603 = vadd.f32 %v1601, %v1602
    %v1604 = vadd.f32 %v1412, %v1562
    %v1605 = vxor.u32 %v1604, 2147483648
    %v1606 = vmul.f32 %v1605, 1.442695
    %v1607 = vpow.pop %v1606
    %v1608 = vadd.f32 %v1607, 1.0
    %v1609 = vrcp.pop %v1608
    %v1610 = vmul.f32 1.0, %v1609
    %v1611 = vadd.f32 %v1562, %v681
    %v1612 = vadd.f32 %v1564, %v681
    %1615 = vrot.lane.b32.xlu0 %v1611, 32
    %v1616 = vpop.permute.xlu0 %1615
    %1617 = vrot.lane.b32.xlu0 %v1612, 32
    %v1618 = vpop.permute.xlu0 %1617
    %v1619 = vsel %vm141, %v1616, %v1618
    %v1621 = vmul.f32 %v1610, %v1619
    %1623 = vrot.lane.b32.xlu0 %v1621, 96
    %v1624 = vpop.permute.xlu0 %1623
    %v1626 = vadd.f32 %v1412, %v1624
    %v1627 = vadd.f32 %v1413, %v1624
    %v1628 = vtanh.pop %v1626
    %v1629 = vtanh.pop %v1627
    %v1630 = vsub.f32 1.0, %v1610
    %1633 = vrot.lane.b32.xlu0 %v1628, 80
    %v1634 = vpop.permute.xlu0 %1633
    %1635 = vrot.lane.b32.xlu0 %v1629, 80
    %v1636 = vpop.permute.xlu0 %1635
    %v1637 = vsel %vm667, %v1634, %v1636
    %v1639 = vmul.f32 %v1630, %v1637
    %v1640 = vmul.f32 %v1610, %v1409
    %v1641 = vadd.f32 %v1639, %v1640
    %v1642 = vld [vmem:[#allocation2 + $0x50] sm:$0xff]
    %v1643 = vld [vmem:[#allocation2 + $0x58] sm:$0xff]
    %v1644 = vld [vmem:[#allocation3 + $0x20] sm:$0xff]
    %v1645 = vld [vmem:[#allocation3 + $0x28] sm:$0xff]
    %1647 = vrot.lane.b32.xlu0 %v1603, 80
    %v1648 = vpop.permute.xlu0 %1647
    %v1649 = vsel %vm485, %v1648, 0
    %1651 = vmatprep.subr.mxu0 %v446
    %1652 = vmatpush1.msra.mxu0 %v445
    %1653 = vmatprep.subr.mxu0 %v448
    %1654 = vmatpush1.msra.mxu0 %v447
    %1655 = vmatprep.subr.mxu0 %v450
    %1656 = vmatpush1.msra.mxu0 %v449
    %1657 = vmatprep.subr.mxu0 %v452
    %1658 = vmatpush1.msra.mxu0 %v451
    %1659 = vmatprep.subr.mxu0 %v454
    %1660 = vmatpush1.msra.mxu0 %v453
    %1661 = vmatprep.subr.mxu0 %v456
    %1662 = vmatpush1.msra.mxu0 %v455
    %1663 = vmatprep.subr.mxu0 0.0
    %1664 = vmatpush1.msra.mxu0 0.0
    %1665 = vmatprep.subr.mxu0 0.0
    %1666 = vmatpush1.msra.mxu0 0.0
    %1667 = vmatprep.subr.mxu0 0.0
    %1668 = vmatpush1.msra.mxu0 0.0
    %1669 = vmatprep.subr.mxu0 0.0
    %1670 = vmatpush1.msra.mxu0 0.0
    %1671 = vmatprep.subr.mxu0 0.0
    %1672 = vmatpush1.msra.mxu0 0.0
    %1673 = vmatprep.subr.mxu0 0.0
    %1674 = vmatpush1.msra.mxu0 0.0
    %1675 = vmatprep.subr.mxu0 0.0
    %1676 = vmatpush1.msra.mxu0 0.0
    %1677 = vmatprep.subr.mxu0 0.0
    %1678 = vmatpush1.msra.mxu0 0.0
    %1679 = vmatprep.subr.mxu0 0.0
    %1680 = vmatpush1.msra.mxu0 0.0
    %1681 = vmatprep.subr.mxu0 0.0
    %1682 = vmatpush1.msra.mxu0 0.0
    %1683 = vmatprep.subr.mxu0 0.0
    %1684 = vmatpush1.msra.mxu0 0.0
    %1685 = vmatprep.subr.mxu0 0.0
    %1686 = vmatpush1.msra.mxu0 0.0
    %1687 = vmatprep.subr.mxu0 0.0
    %1688 = vmatpush1.msra.mxu0 0.0
    %1689 = vmatprep.subr.mxu0 0.0
    %1690 = vmatpush1.msra.mxu0 0.0
    %1691 = vmatprep.subr.mxu0 0.0
    %1692 = vmatpush1.msra.mxu0 0.0
    %1693 = vmatprep.subr.mxu0 0.0
    %1694 = vmatpush1.msra.mxu0 0.0
    %1695 = vmatprep.subr.mxu0 0.0
    %1696 = vmatpush1.msra.mxu0 0.0
    %1697 = vmatprep.subr.mxu0 0.0
    %1698 = vmatpush1.msra.mxu0 0.0
    %1699 = vmatprep.subr.mxu0 0.0
    %1700 = vmatpush1.msra.mxu0 0.0
    %1701 = vmatprep.subr.mxu0 0.0
    %1702 = vmatpush1.msra.mxu0 0.0
    %1703 = vmatprep.subr.mxu0 0.0
    %1704 = vmatpush1.msra.mxu0 0.0
    %1705 = vmatprep.subr.mxu0 0.0
    %1706 = vmatpush1.msra.mxu0 0.0
    %1707 = vmatprep.subr.mxu0 0.0
    %1708 = vmatpush1.msra.mxu0 0.0
    %1709 = vmatprep.subr.mxu0 0.0
    %1710 = vmatpush1.msra.mxu0 0.0
    %1711 = vmatprep.subr.mxu0 0.0
    %1712 = vmatpush1.msra.mxu0 0.0
    %1713 = vmatprep.subr.mxu0 0.0
    %1714 = vmatpush1.msra.mxu0 0.0
    %1715 = vmatprep.mubr.f32.mxu0 0.0
    %1716 = vmatmul.mubr.f32.gmra.mrb[0].mxu0 %v1649
    %v1717 = vpop.f32.mrb[0].mxu0
    %v1718 = vadd.f32 0.0, %v1717
    %v1719 = vpop.f32.mrb[0].mxu0
    %v1720 = vadd.f32 0.0, %v1719
    %1721 = vdwg.mxu0
    %1723 = vrot.lane.b32.xlu0 %v1641, 80
    %v1724 = vpop.permute.xlu0 %1723
    %v1725 = vsel %vm485, %v1724, 0
    %1727 = vmatprep.subr.mxu0 %v458
    %1728 = vmatpush1.msra.mxu0 %v457
    %1729 = vmatprep.subr.mxu0 %v460
    %1730 = vmatpush1.msra.mxu0 %v459
    %1731 = vmatprep.subr.mxu0 %v462
    %1732 = vmatpush1.msra.mxu0 %v461
    %1733 = vmatprep.subr.mxu0 %v464
    %1734 = vmatpush1.msra.mxu0 %v463
    %1735 = vmatprep.subr.mxu0 %v466
    %1736 = vmatpush1.msra.mxu0 %v465
    %1737 = vmatprep.subr.mxu0 %v468
    %1738 = vmatpush1.msra.mxu0 %v467
    %1739 = vmatprep.subr.mxu0 0.0
    %1740 = vmatpush1.msra.mxu0 0.0
    %1741 = vmatprep.subr.mxu0 0.0
    %1742 = vmatpush1.msra.mxu0 0.0
    %1743 = vmatprep.subr.mxu0 0.0
    %1744 = vmatpush1.msra.mxu0 0.0
    %1745 = vmatprep.subr.mxu0 0.0
    %1746 = vmatpush1.msra.mxu0 0.0
    %1747 = vmatprep.subr.mxu0 0.0
    %1748 = vmatpush1.msra.mxu0 0.0
    %1749 = vmatprep.subr.mxu0 0.0
    %1750 = vmatpush1.msra.mxu0 0.0
    %1751 = vmatprep.subr.mxu0 0.0
    %1752 = vmatpush1.msra.mxu0 0.0
    %1753 = vmatprep.subr.mxu0 0.0
    %1754 = vmatpush1.msra.mxu0 0.0
    %1755 = vmatprep.subr.mxu0 0.0
    %1756 = vmatpush1.msra.mxu0 0.0
    %1757 = vmatprep.subr.mxu0 0.0
    %1758 = vmatpush1.msra.mxu0 0.0
    %1759 = vmatprep.subr.mxu0 0.0
    %1760 = vmatpush1.msra.mxu0 0.0
    %1761 = vmatprep.subr.mxu0 0.0
    %1762 = vmatpush1.msra.mxu0 0.0
    %1763 = vmatprep.subr.mxu0 0.0
    %1764 = vmatpush1.msra.mxu0 0.0
    %1765 = vmatprep.subr.mxu0 0.0
    %1766 = vmatpush1.msra.mxu0 0.0
    %1767 = vmatprep.subr.mxu0 0.0
    %1768 = vmatpush1.msra.mxu0 0.0
    %1769 = vmatprep.subr.mxu0 0.0
    %1770 = vmatpush1.msra.mxu0 0.0
    %1771 = vmatprep.subr.mxu0 0.0
    %1772 = vmatpush1.msra.mxu0 0.0
    %1773 = vmatprep.subr.mxu0 0.0
    %1774 = vmatpush1.msra.mxu0 0.0
    %1775 = vmatprep.subr.mxu0 0.0
    %1776 = vmatpush1.msra.mxu0 0.0
    %1777 = vmatprep.subr.mxu0 0.0
    %1778 = vmatpush1.msra.mxu0 0.0
    %1779 = vmatprep.subr.mxu0 0.0
    %1780 = vmatpush1.msra.mxu0 0.0
    %1781 = vmatprep.subr.mxu0 0.0
    %1782 = vmatpush1.msra.mxu0 0.0
    %1783 = vmatprep.subr.mxu0 0.0
    %1784 = vmatpush1.msra.mxu0 0.0
    %1785 = vmatprep.subr.mxu0 0.0
    %1786 = vmatpush1.msra.mxu0 0.0
    %1787 = vmatprep.subr.mxu0 0.0
    %1788 = vmatpush1.msra.mxu0 0.0
    %1789 = vmatprep.subr.mxu0 0.0
    %1790 = vmatpush1.msra.mxu0 0.0
    %1791 = vmatprep.mubr.f32.mxu0 0.0
    %1792 = vmatmul.mubr.f32.gmra.mrb[0].mxu0 %v1725
    %v1793 = vpop.f32.mrb[0].mxu0
    %v1794 = vadd.f32 0.0, %v1793
    %v1795 = vpop.f32.mrb[0].mxu0
    %v1796 = vadd.f32 0.0, %v1795
    %1797 = vdwg.mxu0
    %v1798 = vadd.f32 %v1642, %v1718
    %v1799 = vxor.u32 %v1798, 2147483648
    %v1800 = vmul.f32 %v1799, 1.442695
    %v1801 = vpow.pop %v1800
    %v1802 = vadd.f32 %v1801, 1.0
    %v1803 = vrcp.pop %v1802
    %v1804 = vmul.f32 1.0, %v1803
    %v1805 = vadd.f32 %v1718, %v639
    %v1806 = vadd.f32 %v1720, %v639
    %1809 = vrot.lane.b32.xlu0 %v1805, 32
    %v1810 = vpop.permute.xlu0 %1809
    %1811 = vrot.lane.b32.xlu0 %v1806, 32
    %v1812 = vpop.permute.xlu0 %1811
    %v1813 = vsel %vm141, %v1810, %v1812
    %v1815 = vmul.f32 %v1804, %v1813
    %1817 = vrot.lane.b32.xlu0 %v1815, 96
    %v1818 = vpop.permute.xlu0 %1817
    %v1820 = vadd.f32 %v1642, %v1818
    %v1821 = vadd.f32 %v1643, %v1818
    %v1822 = vtanh.pop %v1820
    %v1823 = vtanh.pop %v1821
    %v1824 = vsub.f32 1.0, %v1804
    %1827 = vrot.lane.b32.xlu0 %v1822, 80
    %v1828 = vpop.permute.xlu0 %1827
    %1829 = vrot.lane.b32.xlu0 %v1823, 80
    %v1830 = vpop.permute.xlu0 %1829
    %v1831 = vsel %vm667, %v1828, %v1830
    %v1833 = vmul.f32 %v1824, %v1831
    %v1834 = vmul.f32 %v1804, %v1603
    %v1835 = vadd.f32 %v1833, %v1834
    %v1836 = vadd.f32 %v1644, %v1794
    %v1837 = vxor.u32 %v1836, 2147483648
    %v1838 = vmul.f32 %v1837, 1.442695
    %v1839 = vpow.pop %v1838
    %v1840 = vadd.f32 %v1839, 1.0
    %v1841 = vrcp.pop %v1840
    %v1842 = vmul.f32 1.0, %v1841
    %v1843 = vadd.f32 %v1794, %v681
    %v1844 = vadd.f32 %v1796, %v681
    %1847 = vrot.lane.b32.xlu0 %v1843, 32
    %v1848 = vpop.permute.xlu0 %1847
    %1849 = vrot.lane.b32.xlu0 %v1844, 32
    %v1850 = vpop.permute.xlu0 %1849
    %v1851 = vsel %vm141, %v1848, %v1850
    %v1853 = vmul.f32 %v1842, %v1851
    %1855 = vrot.lane.b32.xlu0 %v1853, 96
    %v1856 = vpop.permute.xlu0 %1855
    %v1858 = vadd.f32 %v1644, %v1856
    %v1859 = vadd.f32 %v1645, %v1856
    %v1860 = vtanh.pop %v1858
    %v1861 = vtanh.pop %v1859
    %v1862 = vsub.f32 1.0, %v1842
    %1865 = vrot.lane.b32.xlu0 %v1860, 80
    %v1866 = vpop.permute.xlu0 %1865
    %1867 = vrot.lane.b32.xlu0 %v1861, 80
    %v1868 = vpop.permute.xlu0 %1867
    %v1869 = vsel %vm667, %v1866, %v1868
    %v1871 = vmul.f32 %v1862, %v1869
    %v1872 = vmul.f32 %v1842, %v1641
    %v1873 = vadd.f32 %v1871, %v1872
    %v1874 = vld [vmem:[#allocation2 + $0x60] sm:$0xff]
    %v1875 = vld [vmem:[#allocation2 + $0x68] sm:$0xff]
    %v1876 = vld [vmem:[#allocation3 + $0x10] sm:$0xff]
    %v1877 = vld [vmem:[#allocation3 + $0x18] sm:$0xff]
    %1879 = vrot.lane.b32.xlu0 %v1835, 80
    %v1880 = vpop.permute.xlu0 %1879
    %v1881 = vsel %vm485, %v1880, 0
    %1883 = vmatprep.subr.mxu0 %v446
    %1884 = vmatpush1.msra.mxu0 %v445
    %1885 = vmatprep.subr.mxu0 %v448
    %1886 = vmatpush1.msra.mxu0 %v447
    %1887 = vmatprep.subr.mxu0 %v450
    %1888 = vmatpush1.msra.mxu0 %v449
    %1889 = vmatprep.subr.mxu0 %v452
    %1890 = vmatpush1.msra.mxu0 %v451
    %1891 = vmatprep.subr.mxu0 %v454
    %1892 = vmatpush1.msra.mxu0 %v453
    %1893 = vmatprep.subr.mxu0 %v456
    %1894 = vmatpush1.msra.mxu0 %v455
    %1895 = vmatprep.subr.mxu0 0.0
    %1896 = vmatpush1.msra.mxu0 0.0
    %1897 = vmatprep.subr.mxu0 0.0
    %1898 = vmatpush1.msra.mxu0 0.0
    %1899 = vmatprep.subr.mxu0 0.0
    %1900 = vmatpush1.msra.mxu0 0.0
    %1901 = vmatprep.subr.mxu0 0.0
    %1902 = vmatpush1.msra.mxu0 0.0
    %1903 = vmatprep.subr.mxu0 0.0
    %1904 = vmatpush1.msra.mxu0 0.0
    %1905 = vmatprep.subr.mxu0 0.0
    %1906 = vmatpush1.msra.mxu0 0.0
    %1907 = vmatprep.subr.mxu0 0.0
    %1908 = vmatpush1.msra.mxu0 0.0
    %1909 = vmatprep.subr.mxu0 0.0
    %1910 = vmatpush1.msra.mxu0 0.0
    %1911 = vmatprep.subr.mxu0 0.0
    %1912 = vmatpush1.msra.mxu0 0.0
    %1913 = vmatprep.subr.mxu0 0.0
    %1914 = vmatpush1.msra.mxu0 0.0
    %1915 = vmatprep.subr.mxu0 0.0
    %1916 = vmatpush1.msra.mxu0 0.0
    %1917 = vmatprep.subr.mxu0 0.0
    %1918 = vmatpush1.msra.mxu0 0.0
    %1919 = vmatprep.subr.mxu0 0.0
    %1920 = vmatpush1.msra.mxu0 0.0
    %1921 = vmatprep.subr.mxu0 0.0
    %1922 = vmatpush1.msra.mxu0 0.0
    %1923 = vmatprep.subr.mxu0 0.0
    %1924 = vmatpush1.msra.mxu0 0.0
    %1925 = vmatprep.subr.mxu0 0.0
    %1926 = vmatpush1.msra.mxu0 0.0
    %1927 = vmatprep.subr.mxu0 0.0
    %1928 = vmatpush1.msra.mxu0 0.0
    %1929 = vmatprep.subr.mxu0 0.0
    %1930 = vmatpush1.msra.mxu0 0.0
    %1931 = vmatprep.subr.mxu0 0.0
    %1932 = vmatpush1.msra.mxu0 0.0
    %1933 = vmatprep.subr.mxu0 0.0
    %1934 = vmatpush1.msra.mxu0 0.0
    %1935 = vmatprep.subr.mxu0 0.0
    %1936 = vmatpush1.msra.mxu0 0.0
    %1937 = vmatprep.subr.mxu0 0.0
    %1938 = vmatpush1.msra.mxu0 0.0
    %1939 = vmatprep.subr.mxu0 0.0
    %1940 = vmatpush1.msra.mxu0 0.0
    %1941 = vmatprep.subr.mxu0 0.0
    %1942 = vmatpush1.msra.mxu0 0.0
    %1943 = vmatprep.subr.mxu0 0.0
    %1944 = vmatpush1.msra.mxu0 0.0
    %1945 = vmatprep.subr.mxu0 0.0
    %1946 = vmatpush1.msra.mxu0 0.0
    %1947 = vmatprep.mubr.f32.mxu0 0.0
    %1948 = vmatmul.mubr.f32.gmra.mrb[0].mxu0 %v1881
    %v1949 = vpop.f32.mrb[0].mxu0
    %v1950 = vadd.f32 0.0, %v1949
    %v1951 = vpop.f32.mrb[0].mxu0
    %v1952 = vadd.f32 0.0, %v1951
    %1953 = vdwg.mxu0
    %1955 = vrot.lane.b32.xlu0 %v1873, 80
    %v1956 = vpop.permute.xlu0 %1955
    %v1957 = vsel %vm485, %v1956, 0
    %1959 = vmatprep.subr.mxu0 %v458
    %1960 = vmatpush1.msra.mxu0 %v457
    %1961 = vmatprep.subr.mxu0 %v460
    %1962 = vmatpush1.msra.mxu0 %v459
    %1963 = vmatprep.subr.mxu0 %v462
    %1964 = vmatpush1.msra.mxu0 %v461
    %1965 = vmatprep.subr.mxu0 %v464
    %1966 = vmatpush1.msra.mxu0 %v463
    %1967 = vmatprep.subr.mxu0 %v466
    %1968 = vmatpush1.msra.mxu0 %v465
    %1969 = vmatprep.subr.mxu0 %v468
    %1970 = vmatpush1.msra.mxu0 %v467
    %1971 = vmatprep.subr.mxu0 0.0
    %1972 = vmatpush1.msra.mxu0 0.0
    %1973 = vmatprep.subr.mxu0 0.0
    %1974 = vmatpush1.msra.mxu0 0.0
    %1975 = vmatprep.subr.mxu0 0.0
    %1976 = vmatpush1.msra.mxu0 0.0
    %1977 = vmatprep.subr.mxu0 0.0
    %1978 = vmatpush1.msra.mxu0 0.0
    %1979 = vmatprep.subr.mxu0 0.0
    %1980 = vmatpush1.msra.mxu0 0.0
    %1981 = vmatprep.subr.mxu0 0.0
    %1982 = vmatpush1.msra.mxu0 0.0
    %1983 = vmatprep.subr.mxu0 0.0
    %1984 = vmatpush1.msra.mxu0 0.0
    %1985 = vmatprep.subr.mxu0 0.0
    %1986 = vmatpush1.msra.mxu0 0.0
    %1987 = vmatprep.subr.mxu0 0.0
    %1988 = vmatpush1.msra.mxu0 0.0
    %1989 = vmatprep.subr.mxu0 0.0
    %1990 = vmatpush1.msra.mxu0 0.0
    %1991 = vmatprep.subr.mxu0 0.0
    %1992 = vmatpush1.msra.mxu0 0.0
    %1993 = vmatprep.subr.mxu0 0.0
    %1994 = vmatpush1.msra.mxu0 0.0
    %1995 = vmatprep.subr.mxu0 0.0
    %1996 = vmatpush1.msra.mxu0 0.0
    %1997 = vmatprep.subr.mxu0 0.0
    %1998 = vmatpush1.msra.mxu0 0.0
    %1999 = vmatprep.subr.mxu0 0.0
    %2000 = vmatpush1.msra.mxu0 0.0
    %2001 = vmatprep.subr.mxu0 0.0
    %2002 = vmatpush1.msra.mxu0 0.0
    %2003 = vmatprep.subr.mxu0 0.0
    %2004 = vmatpush1.msra.mxu0 0.0
    %2005 = vmatprep.subr.mxu0 0.0
    %2006 = vmatpush1.msra.mxu0 0.0
    %2007 = vmatprep.subr.mxu0 0.0
    %2008 = vmatpush1.msra.mxu0 0.0
    %2009 = vmatprep.subr.mxu0 0.0
    %2010 = vmatpush1.msra.mxu0 0.0
    %2011 = vmatprep.subr.mxu0 0.0
    %2012 = vmatpush1.msra.mxu0 0.0
    %2013 = vmatprep.subr.mxu0 0.0
    %2014 = vmatpush1.msra.mxu0 0.0
    %2015 = vmatprep.subr.mxu0 0.0
    %2016 = vmatpush1.msra.mxu0 0.0
    %2017 = vmatprep.subr.mxu0 0.0
    %2018 = vmatpush1.msra.mxu0 0.0
    %2019 = vmatprep.subr.mxu0 0.0
    %2020 = vmatpush1.msra.mxu0 0.0
    %2021 = vmatprep.subr.mxu0 0.0
    %2022 = vmatpush1.msra.mxu0 0.0
    %2023 = vmatprep.mubr.f32.mxu0 0.0
    %2024 = vmatmul.mubr.f32.gmra.mrb[0].mxu0 %v1957
    %v2025 = vpop.f32.mrb[0].mxu0
    %v2026 = vadd.f32 0.0, %v2025
    %v2027 = vpop.f32.mrb[0].mxu0
    %v2028 = vadd.f32 0.0, %v2027
    %2029 = vdwg.mxu0
    %v2030 = vadd.f32 %v1874, %v1950
    %v2031 = vxor.u32 %v2030, 2147483648
    %v2032 = vmul.f32 %v2031, 1.442695
    %v2033 = vpow.pop %v2032
    %v2034 = vadd.f32 %v2033, 1.0
    %v2035 = vrcp.pop %v2034
    %v2036 = vmul.f32 1.0, %v2035
    %v2037 = vadd.f32 %v1950, %v639
    %v2038 = vadd.f32 %v1952, %v639
    %2041 = vrot.lane.b32.xlu0 %v2037, 32
    %v2042 = vpop.permute.xlu0 %2041
    %2043 = vrot.lane.b32.xlu0 %v2038, 32
    %v2044 = vpop.permute.xlu0 %2043
    %v2045 = vsel %vm141, %v2042, %v2044
    %v2047 = vmul.f32 %v2036, %v2045
    %2049 = vrot.lane.b32.xlu0 %v2047, 96
    %v2050 = vpop.permute.xlu0 %2049
    %v2052 = vadd.f32 %v1874, %v2050
    %v2053 = vadd.f32 %v1875, %v2050
    %v2054 = vtanh.pop %v2052
    %v2055 = vtanh.pop %v2053
    %v2056 = vsub.f32 1.0, %v2036
    %2059 = vrot.lane.b32.xlu0 %v2054, 80
    %v2060 = vpop.permute.xlu0 %2059
    %2061 = vrot.lane.b32.xlu0 %v2055, 80
    %v2062 = vpop.permute.xlu0 %2061
    %v2063 = vsel %vm667, %v2060, %v2062
    %v2065 = vmul.f32 %v2056, %v2063
    %v2066 = vmul.f32 %v2036, %v1835
    %v2067 = vadd.f32 %v2065, %v2066
    %v2068 = vadd.f32 %v1876, %v2026
    %v2069 = vxor.u32 %v2068, 2147483648
    %v2070 = vmul.f32 %v2069, 1.442695
    %v2071 = vpow.pop %v2070
    %v2072 = vadd.f32 %v2071, 1.0
    %v2073 = vrcp.pop %v2072
    %v2074 = vmul.f32 1.0, %v2073
    %v2075 = vadd.f32 %v2026, %v681
    %v2076 = vadd.f32 %v2028, %v681
    %2079 = vrot.lane.b32.xlu0 %v2075, 32
    %v2080 = vpop.permute.xlu0 %2079
    %2081 = vrot.lane.b32.xlu0 %v2076, 32
    %v2082 = vpop.permute.xlu0 %2081
    %v2083 = vsel %vm141, %v2080, %v2082
    %v2085 = vmul.f32 %v2074, %v2083
    %2087 = vrot.lane.b32.xlu0 %v2085, 96
    %v2088 = vpop.permute.xlu0 %2087
    %v2090 = vadd.f32 %v1876, %v2088
    %v2091 = vadd.f32 %v1877, %v2088
    %v2092 = vtanh.pop %v2090
    %v2093 = vtanh.pop %v2091
    %v2094 = vsub.f32 1.0, %v2074
    %2097 = vrot.lane.b32.xlu0 %v2092, 80
    %v2098 = vpop.permute.xlu0 %2097
    %2099 = vrot.lane.b32.xlu0 %v2093, 80
    %v2100 = vpop.permute.xlu0 %2099
    %v2101 = vsel %vm667, %v2098, %v2100
    %v2103 = vmul.f32 %v2094, %v2101
    %v2104 = vmul.f32 %v2074, %v1873
    %v2105 = vadd.f32 %v2103, %v2104
    %v2106 = vld [vmem:[#allocation2 + $0x70] sm:$0xff]
    %v2107 = vld [vmem:[#allocation2 + $0x78] sm:$0xff]
    %v2108 = vld [vmem:[#allocation3] sm:$0xff]
    %v2109 = vld [vmem:[#allocation3 + $0x8] sm:$0xff]
    %2111 = vrot.lane.b32.xlu0 %v2067, 80
    %v2112 = vpop.permute.xlu0 %2111
    %v2113 = vsel %vm485, %v2112, 0
    %2115 = vmatprep.subr.mxu0 %v446
    %2116 = vmatpush1.msra.mxu0 %v445
    %2117 = vmatprep.subr.mxu0 %v448
    %2118 = vmatpush1.msra.mxu0 %v447
    %2119 = vmatprep.subr.mxu0 %v450
    %2120 = vmatpush1.msra.mxu0 %v449
    %2121 = vmatprep.subr.mxu0 %v452
    %2122 = vmatpush1.msra.mxu0 %v451
    %2123 = vmatprep.subr.mxu0 %v454
    %2124 = vmatpush1.msra.mxu0 %v453
    %2125 = vmatprep.subr.mxu0 %v456
    %2126 = vmatpush1.msra.mxu0 %v455
    %2127 = vmatprep.subr.mxu0 0.0
    %2128 = vmatpush1.msra.mxu0 0.0
    %2129 = vmatprep.subr.mxu0 0.0
    %2130 = vmatpush1.msra.mxu0 0.0
    %2131 = vmatprep.subr.mxu0 0.0
    %2132 = vmatpush1.msra.mxu0 0.0
    %2133 = vmatprep.subr.mxu0 0.0
    %2134 = vmatpush1.msra.mxu0 0.0
    %2135 = vmatprep.subr.mxu0 0.0
    %2136 = vmatpush1.msra.mxu0 0.0
    %2137 = vmatprep.subr.mxu0 0.0
    %2138 = vmatpush1.msra.mxu0 0.0
    %2139 = vmatprep.subr.mxu0 0.0
    %2140 = vmatpush1.msra.mxu0 0.0
    %2141 = vmatprep.subr.mxu0 0.0
    %2142 = vmatpush1.msra.mxu0 0.0
    %2143 = vmatprep.subr.mxu0 0.0
    %2144 = vmatpush1.msra.mxu0 0.0
    %2145 = vmatprep.subr.mxu0 0.0
    %2146 = vmatpush1.msra.mxu0 0.0
    %2147 = vmatprep.subr.mxu0 0.0
    %2148 = vmatpush1.msra.mxu0 0.0
    %2149 = vmatprep.subr.mxu0 0.0
    %2150 = vmatpush1.msra.mxu0 0.0
    %2151 = vmatprep.subr.mxu0 0.0
    %2152 = vmatpush1.msra.mxu0 0.0
    %2153 = vmatprep.subr.mxu0 0.0
    %2154 = vmatpush1.msra.mxu0 0.0
    %2155 = vmatprep.subr.mxu0 0.0
    %2156 = vmatpush1.msra.mxu0 0.0
    %2157 = vmatprep.subr.mxu0 0.0
    %2158 = vmatpush1.msra.mxu0 0.0
    %2159 = vmatprep.subr.mxu0 0.0
    %2160 = vmatpush1.msra.mxu0 0.0
    %2161 = vmatprep.subr.mxu0 0.0
    %2162 = vmatpush1.msra.mxu0 0.0
    %2163 = vmatprep.subr.mxu0 0.0
    %2164 = vmatpush1.msra.mxu0 0.0
    %2165 = vmatprep.subr.mxu0 0.0
    %2166 = vmatpush1.msra.mxu0 0.0
    %2167 = vmatprep.subr.mxu0 0.0
    %2168 = vmatpush1.msra.mxu0 0.0
    %2169 = vmatprep.subr.mxu0 0.0
    %2170 = vmatpush1.msra.mxu0 0.0
    %2171 = vmatprep.subr.mxu0 0.0
    %2172 = vmatpush1.msra.mxu0 0.0
    %2173 = vmatprep.subr.mxu0 0.0
    %2174 = vmatpush1.msra.mxu0 0.0
    %2175 = vmatprep.subr.mxu0 0.0
    %2176 = vmatpush1.msra.mxu0 0.0
    %2177 = vmatprep.subr.mxu0 0.0
    %2178 = vmatpush1.msra.mxu0 0.0
    %2179 = vmatprep.mubr.f32.mxu0 0.0
    %2180 = vmatmul.mubr.f32.gmra.mrb[0].mxu0 %v2113
    %v2181 = vpop.f32.mrb[0].mxu0
    %v2182 = vadd.f32 0.0, %v2181
    %v2183 = vpop.f32.mrb[0].mxu0
    %v2184 = vadd.f32 0.0, %v2183
    %2185 = vdwg.mxu0
    %2187 = vrot.lane.b32.xlu0 %v2105, 80
    %v2188 = vpop.permute.xlu0 %2187
    %v2189 = vsel %vm485, %v2188, 0
    %2191 = vmatprep.subr.mxu0 %v458
    %2192 = vmatpush1.msra.mxu0 %v457
    %2193 = vmatprep.subr.mxu0 %v460
    %2194 = vmatpush1.msra.mxu0 %v459
    %2195 = vmatprep.subr.mxu0 %v462
    %2196 = vmatpush1.msra.mxu0 %v461
    %2197 = vmatprep.subr.mxu0 %v464
    %2198 = vmatpush1.msra.mxu0 %v463
    %2199 = vmatprep.subr.mxu0 %v466
    %2200 = vmatpush1.msra.mxu0 %v465
    %2201 = vmatprep.subr.mxu0 %v468
    %2202 = vmatpush1.msra.mxu0 %v467
    %2203 = vmatprep.subr.mxu0 0.0
    %2204 = vmatpush1.msra.mxu0 0.0
    %2205 = vmatprep.subr.mxu0 0.0
    %2206 = vmatpush1.msra.mxu0 0.0
    %2207 = vmatprep.subr.mxu0 0.0
    %2208 = vmatpush1.msra.mxu0 0.0
    %2209 = vmatprep.subr.mxu0 0.0
    %2210 = vmatpush1.msra.mxu0 0.0
    %2211 = vmatprep.subr.mxu0 0.0
    %2212 = vmatpush1.msra.mxu0 0.0
    %2213 = vmatprep.subr.mxu0 0.0
    %2214 = vmatpush1.msra.mxu0 0.0
    %2215 = vmatprep.subr.mxu0 0.0
    %2216 = vmatpush1.msra.mxu0 0.0
    %2217 = vmatprep.subr.mxu0 0.0
    %2218 = vmatpush1.msra.mxu0 0.0
    %2219 = vmatprep.subr.mxu0 0.0
    %2220 = vmatpush1.msra.mxu0 0.0
    %2221 = vmatprep.subr.mxu0 0.0
    %2222 = vmatpush1.msra.mxu0 0.0
    %2223 = vmatprep.subr.mxu0 0.0
    %2224 = vmatpush1.msra.mxu0 0.0
    %2225 = vmatprep.subr.mxu0 0.0
    %2226 = vmatpush1.msra.mxu0 0.0
    %2227 = vmatprep.subr.mxu0 0.0
    %2228 = vmatpush1.msra.mxu0 0.0
    %2229 = vmatprep.subr.mxu0 0.0
    %2230 = vmatpush1.msra.mxu0 0.0
    %2231 = vmatprep.subr.mxu0 0.0
    %2232 = vmatpush1.msra.mxu0 0.0
    %2233 = vmatprep.subr.mxu0 0.0
    %2234 = vmatpush1.msra.mxu0 0.0
    %2235 = vmatprep.subr.mxu0 0.0
    %2236 = vmatpush1.msra.mxu0 0.0
    %2237 = vmatprep.subr.mxu0 0.0
    %2238 = vmatpush1.msra.mxu0 0.0
    %2239 = vmatprep.subr.mxu0 0.0
    %2240 = vmatpush1.msra.mxu0 0.0
    %2241 = vmatprep.subr.mxu0 0.0
    %2242 = vmatpush1.msra.mxu0 0.0
    %2243 = vmatprep.subr.mxu0 0.0
    %2244 = vmatpush1.msra.mxu0 0.0
    %2245 = vmatprep.subr.mxu0 0.0
    %2246 = vmatpush1.msra.mxu0 0.0
    %2247 = vmatprep.subr.mxu0 0.0
    %2248 = vmatpush1.msra.mxu0 0.0
    %2249 = vmatprep.subr.mxu0 0.0
    %2250 = vmatpush1.msra.mxu0 0.0
    %2251 = vmatprep.subr.mxu0 0.0
    %2252 = vmatpush1.msra.mxu0 0.0
    %2253 = vmatprep.subr.mxu0 0.0
    %2254 = vmatpush1.msra.mxu0 0.0
    %2255 = vmatprep.mubr.f32.mxu0 0.0
    %2256 = vmatmul.mubr.f32.gmra.mrb[0].mxu0 %v2189
    %v2257 = vpop.f32.mrb[0].mxu0
    %v2258 = vadd.f32 0.0, %v2257
    %v2259 = vpop.f32.mrb[0].mxu0
    %v2260 = vadd.f32 0.0, %v2259
    %2261 = vdwg.mxu0
    %v2262 = vadd.f32 %v2106, %v2182
    %v2263 = vxor.u32 %v2262, 2147483648
    %v2264 = vmul.f32 %v2263, 1.442695
    %v2265 = vpow.pop %v2264
    %v2266 = vadd.f32 %v2265, 1.0
    %v2267 = vrcp.pop %v2266
    %v2268 = vmul.f32 1.0, %v2267
    %v2269 = vadd.f32 %v2182, %v639
    %v2270 = vadd.f32 %v2184, %v639
    %2273 = vrot.lane.b32.xlu0 %v2269, 32
    %v2274 = vpop.permute.xlu0 %2273
    %2275 = vrot.lane.b32.xlu0 %v2270, 32
    %v2276 = vpop.permute.xlu0 %2275
    %v2277 = vsel %vm141, %v2274, %v2276
    %v2279 = vmul.f32 %v2268, %v2277
    %2281 = vrot.lane.b32.xlu0 %v2279, 96
    %v2282 = vpop.permute.xlu0 %2281
    %v2284 = vadd.f32 %v2106, %v2282
    %v2285 = vadd.f32 %v2107, %v2282
    %v2286 = vtanh.pop %v2284
    %v2287 = vtanh.pop %v2285
    %v2288 = vsub.f32 1.0, %v2268
    %2291 = vrot.lane.b32.xlu0 %v2286, 80
    %v2292 = vpop.permute.xlu0 %2291
    %2293 = vrot.lane.b32.xlu0 %v2287, 80
    %v2294 = vpop.permute.xlu0 %2293
    %v2295 = vsel %vm667, %v2292, %v2294
    %v2297 = vmul.f32 %v2288, %v2295
    %v2298 = vmul.f32 %v2268, %v2067
    %v2299 = vadd.f32 %v2297, %v2298
    %v2300 = vadd.f32 %v2108, %v2258
    %v2301 = vxor.u32 %v2300, 2147483648
    %v2302 = vmul.f32 %v2301, 1.442695
    %v2303 = vpow.pop %v2302
    %v2304 = vadd.f32 %v2303, 1.0
    %v2305 = vrcp.pop %v2304
    %v2306 = vmul.f32 1.0, %v2305
    %v2307 = vadd.f32 %v2258, %v681
    %v2308 = vadd.f32 %v2260, %v681
    %2311 = vrot.lane.b32.xlu0 %v2307, 32
    %v2312 = vpop.permute.xlu0 %2311
    %2313 = vrot.lane.b32.xlu0 %v2308, 32
    %v2314 = vpop.permute.xlu0 %2313
    %v2315 = vsel %vm141, %v2312, %v2314
    %v2317 = vmul.f32 %v2306, %v2315
    %2319 = vrot.lane.b32.xlu0 %v2317, 96
    %v2320 = vpop.permute.xlu0 %2319
    %v2322 = vadd.f32 %v2108, %v2320
    %v2323 = vadd.f32 %v2109, %v2320
    %v2324 = vtanh.pop %v2322
    %v2325 = vtanh.pop %v2323
    %v2326 = vsub.f32 1.0, %v2306
    %2329 = vrot.lane.b32.xlu0 %v2324, 80
    %v2330 = vpop.permute.xlu0 %2329
    %2331 = vrot.lane.b32.xlu0 %v2325, 80
    %v2332 = vpop.permute.xlu0 %2331
    %v2333 = vsel %vm667, %v2330, %v2332
    %v2335 = vmul.f32 %v2326, %v2333
    %v2336 = vmul.f32 %v2306, %v2105
    %v2337 = vadd.f32 %v2335, %v2336
    %v2338 = vld [vmem:[%s9] sm:$0xff]
    %2340 = vrot.lane.b32.xlu0 %v2338, 48
    %v2341 = vpop.permute.xlu0 %2340
    %v2343 = vmul.f32 %v2299, %v2341
    %v2344 = vld [vmem:[#allocation10] sm:$0xff]
    %v2345 = vld [vmem:[#allocation10 + $0x8] sm:$0xff]
    %v2346 = vld [vmem:[#allocation10 + $0x10] sm:$0xff]
    %v2347 = vld [vmem:[#allocation10 + $0x18] sm:$0xff]
    %v2348 = vld [vmem:[#allocation10 + $0x20] sm:$0xff]
    %v2349 = vld [vmem:[#allocation10 + $0x28] sm:$0xff]
    %v2350 = vmul.f32 %v2337, %v2341
    %v2351 = vld [vmem:[#allocation12] sm:$0xff]
    %v2352 = vld [vmem:[#allocation12 + $0x8] sm:$0xff]
    %v2353 = vld [vmem:[#allocation12 + $0x10] sm:$0xff]
    %v2354 = vld [vmem:[#allocation12 + $0x18] sm:$0xff]
    %v2355 = vld [vmem:[#allocation12 + $0x20] sm:$0xff]
    %v2356 = vld [vmem:[#allocation12 + $0x28] sm:$0xff]
    %2358 = vrot.lane.b32.xlu0 %v2350, 80
    %v2359 = vpop.permute.xlu0 %2358
    %v2360 = vsel %vm485, %v2359, 0
    %2362 = vmatprep.subr.mxu0 0.0
    %2363 = vmatpush1.msra.mxu0 %v2351
    %2364 = vmatprep.subr.mxu0 0.0
    %2365 = vmatpush1.msra.mxu0 %v2352
    %2366 = vmatprep.subr.mxu0 0.0
    %2367 = vmatpush1.msra.mxu0 %v2353
    %2368 = vmatprep.subr.mxu0 0.0
    %2369 = vmatpush1.msra.mxu0 %v2354
    %2370 = vmatprep.subr.mxu0 0.0
    %2371 = vmatpush1.msra.mxu0 %v2355
    %2372 = vmatprep.subr.mxu0 0.0
    %2373 = vmatpush1.msra.mxu0 %v2356
    %2374 = vmatprep.subr.mxu0 0.0
    %2375 = vmatpush1.msra.mxu0 0.0
    %2376 = vmatprep.subr.mxu0 0.0
    %2377 = vmatpush1.msra.mxu0 0.0
    %2378 = vmatprep.subr.mxu0 0.0
    %2379 = vmatpush1.msra.mxu0 0.0
    %2380 = vmatprep.subr.mxu0 0.0
    %2381 = vmatpush1.msra.mxu0 0.0
    %2382 = vmatprep.subr.mxu0 0.0
    %2383 = vmatpush1.msra.mxu0 0.0
    %2384 = vmatprep.subr.mxu0 0.0
    %2385 = vmatpush1.msra.mxu0 0.0
    %2386 = vmatprep.subr.mxu0 0.0
    %2387 = vmatpush1.msra.mxu0 0.0
    %2388 = vmatprep.subr.mxu0 0.0
    %2389 = vmatpush1.msra.mxu0 0.0
    %2390 = vmatprep.subr.mxu0 0.0
    %2391 = vmatpush1.msra.mxu0 0.0
    %2392 = vmatprep.subr.mxu0 0.0
    %2393 = vmatpush1.msra.mxu0 0.0
    %2394 = vmatprep.subr.mxu0 0.0
    %2395 = vmatpush1.msra.mxu0 0.0
    %2396 = vmatprep.subr.mxu0 0.0
    %2397 = vmatpush1.msra.mxu0 0.0
    %2398 = vmatprep.subr.mxu0 0.0
    %2399 = vmatpush1.msra.mxu0 0.0
    %2400 = vmatprep.subr.mxu0 0.0
    %2401 = vmatpush1.msra.mxu0 0.0
    %2402 = vmatprep.subr.mxu0 0.0
    %2403 = vmatpush1.msra.mxu0 0.0
    %2404 = vmatprep.subr.mxu0 0.0
    %2405 = vmatpush1.msra.mxu0 0.0
    %2406 = vmatprep.subr.mxu0 0.0
    %2407 = vmatpush1.msra.mxu0 0.0
    %2408 = vmatprep.subr.mxu0 0.0
    %2409 = vmatpush1.msra.mxu0 0.0
    %2410 = vmatprep.subr.mxu0 0.0
    %2411 = vmatpush1.msra.mxu0 0.0
    %2412 = vmatprep.subr.mxu0 0.0
    %2413 = vmatpush1.msra.mxu0 0.0
    %2414 = vmatprep.subr.mxu0 0.0
    %2415 = vmatpush1.msra.mxu0 0.0
    %2416 = vmatprep.subr.mxu0 0.0
    %2417 = vmatpush1.msra.mxu0 0.0
    %2418 = vmatprep.subr.mxu0 0.0
    %2419 = vmatpush1.msra.mxu0 0.0
    %2420 = vmatprep.subr.mxu0 0.0
    %2421 = vmatpush1.msra.mxu0 0.0
    %2422 = vmatprep.subr.mxu0 0.0
    %2423 = vmatpush1.msra.mxu0 0.0
    %2424 = vmatprep.subr.mxu0 0.0
    %2425 = vmatpush1.msra.mxu0 0.0
    %2426 = vmatprep.mubr.f32.mxu0 0.0
    %2427 = vmatmul.mubr.f32.gmra.mrb[0].mxu0 %v2360
    %v2428 = vpop.f32.mrb[0].mxu0
    %v2429 = vadd.f32 0.0, %v2428
    %v2430 = vpop.f32.mrb[0].mxu0
    %2431 = vdwg.mxu0
    %2433 = vrot.lane.b32.xlu0 %v2343, 80
    %v2434 = vpop.permute.xlu0 %2433
    %v2435 = vsel %vm485, %v2434, 0
    %2437 = vmatprep.subr.mxu0 0.0
    %2438 = vmatpush1.msra.mxu0 %v2344
    %2439 = vmatprep.subr.mxu0 0.0
    %2440 = vmatpush1.msra.mxu0 %v2345
    %2441 = vmatprep.subr.mxu0 0.0
    %2442 = vmatpush1.msra.mxu0 %v2346
    %2443 = vmatprep.subr.mxu0 0.0
    %2444 = vmatpush1.msra.mxu0 %v2347
    %2445 = vmatprep.subr.mxu0 0.0
    %2446 = vmatpush1.msra.mxu0 %v2348
    %2447 = vmatprep.subr.mxu0 0.0
    %2448 = vmatpush1.msra.mxu0 %v2349
    %2449 = vmatprep.subr.mxu0 0.0
    %2450 = vmatpush1.msra.mxu0 0.0
    %2451 = vmatprep.subr.mxu0 0.0
    %2452 = vmatpush1.msra.mxu0 0.0
    %2453 = vmatprep.subr.mxu0 0.0
    %2454 = vmatpush1.msra.mxu0 0.0
    %2455 = vmatprep.subr.mxu0 0.0
    %2456 = vmatpush1.msra.mxu0 0.0
    %2457 = vmatprep.subr.mxu0 0.0
    %2458 = vmatpush1.msra.mxu0 0.0
    %2459 = vmatprep.subr.mxu0 0.0
    %2460 = vmatpush1.msra.mxu0 0.0
    %2461 = vmatprep.subr.mxu0 0.0
    %2462 = vmatpush1.msra.mxu0 0.0
    %2463 = vmatprep.subr.mxu0 0.0
    %2464 = vmatpush1.msra.mxu0 0.0
    %2465 = vmatprep.subr.mxu0 0.0
    %2466 = vmatpush1.msra.mxu0 0.0
    %2467 = vmatprep.subr.mxu0 0.0
    %2468 = vmatpush1.msra.mxu0 0.0
    %2469 = vmatprep.subr.mxu0 0.0
    %2470 = vmatpush1.msra.mxu0 0.0
    %2471 = vmatprep.subr.mxu0 0.0
    %2472 = vmatpush1.msra.mxu0 0.0
    %2473 = vmatprep.subr.mxu0 0.0
    %2474 = vmatpush1.msra.mxu0 0.0
    %2475 = vmatprep.subr.mxu0 0.0
    %2476 = vmatpush1.msra.mxu0 0.0
    %2477 = vmatprep.subr.mxu0 0.0
    %2478 = vmatpush1.msra.mxu0 0.0
    %2479 = vmatprep.subr.mxu0 0.0
    %2480 = vmatpush1.msra.mxu0 0.0
    %2481 = vmatprep.subr.mxu0 0.0
    %2482 = vmatpush1.msra.mxu0 0.0
    %2483 = vmatprep.subr.mxu0 0.0
    %2484 = vmatpush1.msra.mxu0 0.0
    %2485 = vmatprep.subr.mxu0 0.0
    %2486 = vmatpush1.msra.mxu0 0.0
    %2487 = vmatprep.subr.mxu0 0.0
    %2488 = vmatpush1.msra.mxu0 0.0
    %2489 = vmatprep.subr.mxu0 0.0
    %2490 = vmatpush1.msra.mxu0 0.0
    %2491 = vmatprep.subr.mxu0 0.0
    %2492 = vmatpush1.msra.mxu0 0.0
    %2493 = vmatprep.subr.mxu0 0.0
    %2494 = vmatpush1.msra.mxu0 0.0
    %2495 = vmatprep.subr.mxu0 0.0
    %2496 = vmatpush1.msra.mxu0 0.0
    %2497 = vmatprep.subr.mxu0 0.0
    %2498 = vmatpush1.msra.mxu0 0.0
    %2499 = vmatprep.subr.mxu0 0.0
    %2500 = vmatpush1.msra.mxu0 0.0
    %2501 = vmatprep.mubr.f32.mxu0 0.0
    %2502 = vmatmul.mubr.f32.gmra.mrb[0].mxu0 %v2435
    %v2503 = vpop.f32.mrb[0].mxu0
    %v2504 = vadd.f32 %v2429, %v2503
    %v2505 = vpop.f32.mrb[0].mxu0
    %2506 = vdwg.mxu0
    %v2507 = vld [vmem:[%s12] sm:$0x1]
    %v2509 = vlaneseq
    %v2510 = vshrl.u32 %v2509, 7
    %v2511 = vsub.s32 0, %v2510
    %v2512 = vrot.slane %v2507, %v2511
    %v2514 = vadd.f32 %v2504, %v2512
    %2515 = vst [vmem:[#allocation13] sm:$0xff] %v2514
    // Predicated region
    $region74: #{tpu_custom_call.1} parent=1 // pred_check
      _
    $region75: #{tpu_custom_call.1} parent=1 // pred_check_branch
      %2517 = sbr.rel (0) target = $region77
    $region76: #{tpu_custom_call.1} parent=1 // pred_region
      %s2519 = ssub.s32 128, 128
      %2520 = vsyncadd [#allocation6], %s2519
      %s2522 = sshll.u32 [#allocation13], 4
      %s2523 = int_to_ptr.vmem [resolvable:$true] %s2522
      %2525 = dma.vmem_to_hbm [thread:$0]  %s2523, 128, %s13, [#allocation6]
    $region77: #{tpu_custom_call.1} parent=1 // pred_fallthru
      _
    // Predicated region
    $region78: #{tpu_custom_call.1} parent=1 // pred_check
      _
    $region79: #{tpu_custom_call.1} parent=1 // pred_check_branch
      %2527 = sbr.rel (0) target = $region81
    $region80: #{tpu_custom_call.1} parent=1 // pred_region
      %2528 = dma.done [#allocation6], 128
    $region81: #{tpu_custom_call.1} parent=1 // pred_fallthru
      _
    %2529 = vsyncpa [#allocation5], 1
    %2530 = vsyncpa [#allocation8], 1
    %2531 = vsyncpa [#allocation11], 1
    %2532 = vsyncpa [#allocation6], 1

</llo_original>
